<compile_context>
chip_gen: v7x
topology: tpu7x:2x2x1
jax: 0.10.0
libtpu: 0.0.40
codegen_flags: <defaults>
</compile_context>

<pallas_src>
import functools

import jax
import jax.numpy as jnp
from jax.experimental import pallas as pl
from jax.experimental.pallas import tpu as pltpu


# ----------------------------- weight folding (trace time) ---------------------------------

def _fold_weights(w_oihw):
    """Fold nearest-2x upsample into the 3x3 conv weights, grouped by source offset.

    Returns:
      wg   : (C, 16*C) — per-offset weight groups concatenated along N, offset-major.
      plan : tuple of ((dy, dx), planes) where planes = output parities 2*py+px that use
             this source offset, in the same order as their N-blocks inside wg.
    """
    C = w_oihw.shape[0]
    w3 = jnp.transpose(w_oihw, (2, 3, 1, 0))                  # (ky, kx, C_in, C_out)
    # kernel rows/cols contributing to (source-offset d, output-parity p)
    sets = {(0, 0): (0,), (1, 0): (1, 2), (1, 1): (0, 1), (2, 1): (2,)}
    parities = {0: (0,), 1: (0, 1), 2: (1,)}                  # parities using offset d

    blocks, plan = [], []
    for dy in range(3):
        for dx in range(3):
            planes = []
            for py in parities[dy]:
                for px in parities[dx]:
                    w = jnp.zeros((C, C), w3.dtype)
                    for ky in sets[(dy, py)]:
                        for kx in sets[(dx, px)]:
                            w = w + w3[ky, kx]
                    blocks.append(w)
                    planes.append(2 * py + px)
            plan.append(((dy, dx), tuple(planes)))
    wg = jnp.concatenate(blocks, axis=1)                      # (C, 16*C)
    return wg, tuple(plan)


# ----------------------------- the fused kernel --------------------------------------------

def upsample_conv_kernel(x_ref, w_ref, b_ref, out_ref, xpad_ref, *, H, W, C, plan):
    """One batch element: fused nearest-2x-upsample + 3x3 conv (pad=1).

    x_ref   : (1, H, W, C)     bf16 NHWC input (no halo)
    w_ref   : (C, 16*C)        bf16 offset-grouped folded weights
    b_ref   : (1, C)           f32 conv bias
    out_ref : (1, 4, H*W, C)   parity-major output planes (plane p = 2*py + px)
    xpad_ref: (H+2, W+2, C)    bf16 VMEM scratch holding the zero-halo'd input
    """
    # Build the 1-px zero halo in VMEM (no wrapper jnp.pad HBM pass).
    xpad_ref[...] = jnp.zeros_like(xpad_ref)
    xpad_ref[pl.ds(1, H), pl.ds(1, W), :] = x_ref[0]

    HW = H * W
    bias = b_ref[...]                                         # (1, C) f32
    accs = [None] * 4
    col = 0
    for (dy, dx), planes in plan:
        # Materialize this source window ONCE; it is shared by every parity that uses it.
        win = xpad_ref[pl.ds(dy, H), pl.ds(dx, W), :].reshape(HW, C)
        n = len(planes)
        prod = jnp.dot(win, w_ref[:, pl.ds(col, n * C)],
                       preferred_element_type=jnp.float32)    # (HW, n*C), wide-N MXU dot
        for s, p in enumerate(planes):
            piece = prod if n == 1 else prod[:, s * C:(s + 1) * C]
            accs[p] = piece if accs[p] is None else accs[p] + piece
        col += n * C

    for p in range(4):
        out_ref[0, p] = (accs[p] + bias).astype(out_ref.dtype)


# ----------------------------- wrapper ------------------------------------------------------

def upsample_nearest_conv(x_nchw, w_oihw, b):
    """x: (B, C, H, W), w: (C_out, C_in, 3, 3), b: (C,)  ->  (B, C, 2H, 2W)."""
    B, C, H, W = x_nchw.shape
    assert C % 128 == 0 and (H * W) % 8 == 0, (
        "kernel assumes lane-dense channels (C % 128 == 0) and H*W % 8 == 0; "
        "pad C to a lane multiple for channel counts like 320/640")
    HW = H * W

    # NCHW -> channels-last + bf16 in one fused XLA pass; halo is added inside the kernel.
    x_nhwc = jnp.transpose(x_nchw, (0, 2, 3, 1)).astype(jnp.bfloat16)

    wg, plan = _fold_weights(w_oihw)
    wg = wg.astype(jnp.bfloat16)
    bias = b.astype(jnp.float32).reshape(1, C)

    kernel = functools.partial(upsample_conv_kernel, H=H, W=W, C=C, plan=plan)

    out = pl.pallas_call(
        kernel,
        out_shape=jax.ShapeDtypeStruct((B, 4, HW, C), x_nchw.dtype),
        grid_spec=pltpu.PrefetchScalarGridSpec(
            num_scalar_prefetch=0,
            grid=(B,),                                        # one grid step per batch element
            in_specs=[
                pl.BlockSpec((1, H, W, C), lambda bb: (bb, 0, 0, 0)),
                pl.BlockSpec((C, 16 * C), lambda bb: (0, 0)),   # resident folded weights
                pl.BlockSpec((1, C), lambda bb: (0, 0)),        # resident bias
            ],
            out_specs=pl.BlockSpec((1, 4, HW, C), lambda bb: (bb, 0, 0, 0)),
            scratch_shapes=[pltpu.VMEM((H + 2, W + 2, C), jnp.bfloat16)],
        ),
        compiler_params=pltpu.CompilerParams(
            dimension_semantics=("parallel",),
            vmem_limit_bytes=32 * 1024 * 1024,
        ),
    )(x_nhwc, wg, bias)

    # Pixel-shuffle back to NCHW:
    # (B, 4, HW, C) -> (B, py, px, H, W, C) -> (B, C, H, py, W, px) -> (B, C, 2H, 2W)
    # TODO(synk): in a full network keep the parity-major channels-last layout downstream
    # and fold this shuffle into the consumer instead of a standalone HBM pass.
    out = out.reshape(B, 2, 2, H, W, C)
    out = jnp.transpose(out, (0, 5, 3, 1, 4, 2))
    return out.reshape(B, C, 2 * H, 2 * W)


# ----------------------------- pure-JAX reference -------------------------------------------

def reference_upsample(x_nchw, w_oihw, b):
    up = jnp.repeat(jnp.repeat(x_nchw, 2, axis=2), 2, axis=3)   # nearest, scale_factor=2
    out = jax.lax.conv_general_dilated(
        up, w_oihw, window_strides=(1, 1), padding=((1, 1), (1, 1)),
        dimension_numbers=("NCHW", "OIHW", "NCHW"))
    return out + b.reshape(1, -1, 1, 1)


# ----------------------------- main ----------------------------------------------------------

if __name__ == "__main__":
    B, C, H, W = 2, 128, 16, 16          # C=128 keeps every matmul / store lane-dense

    key = jax.random.PRNGKey(0)
    kx, kw, kb = jax.random.split(key, 3)
    x = jax.random.normal(kx, (B, C, H, W), dtype=jnp.float32)
    w = (0.05 * jax.random.normal(kw, (C, C, 3, 3))).astype(jnp.float32)
    b = (0.05 * jax.random.normal(kb, (C,))).astype(jnp.float32)

    out = jax.block_until_ready(upsample_nearest_conv(x, w, b))
    ref = reference_upsample(x, w, b)

    assert out.shape == (B, C, 2 * H, 2 * W)
    max_err = float(jnp.max(jnp.abs(out - ref)))
    scale = float(jnp.max(jnp.abs(ref))) + 1e-6
    # bf16 operands with f32 accumulation -> relaxed tolerance.
    assert max_err / scale < 2e-2, f"mismatch vs reference: abs={max_err}, rel={max_err / scale}"
    print("KERNEL_OK")
</pallas_src>

<mosaic_0001>
module attributes {stable_mosaic.version = 11 : i64} {
  func.func @upsample_conv_kernel(%arg0: i32, %arg1: memref<1x16x16x128xbf16, #tpu.memory_space<vmem>>, %arg2: memref<128x2048xbf16, #tpu.memory_space<vmem>>, %arg3: memref<1x128xf32, #tpu.memory_space<vmem>>, %arg4: memref<1x4x256x128xf32, #tpu.memory_space<vmem>>, %arg5: memref<18x18x128xbf16, #tpu.memory_space<vmem>>) attributes {dimension_semantics = [#tpu.dimension_semantics<parallel>], iteration_bounds = array<i64: 2>, scalar_prefetch = 0 : i64, scratch_operands = 1 : i64, tpu.core_type = #tpu.core_type<tc>, window_params = [{transform_indices = @transform_0, window_bounds = array<i64: 1, 16, 16, 128>}, {pipeline_mode = #tpu.pipeline_mode<synchronous>, transform_indices = @transform_1, window_bounds = array<i64: 128, 2048>}, {pipeline_mode = #tpu.pipeline_mode<synchronous>, transform_indices = @transform_2, window_bounds = array<i64: 1, 128>}, {transform_indices = @transform_3, window_bounds = array<i64: 1, 4, 256, 128>}]} {
    %cst = arith.constant 0.000000e+00 : bf16
    %0 = vector.broadcast %cst : bf16 to vector<18x18x128xbf16>
    %c0 = arith.constant 0 : index
    %c0_0 = arith.constant 0 : index
    %c0_1 = arith.constant 0 : index
    %1 = vector.load %arg5[%c0, %c0_0, %c0_1] : memref<18x18x128xbf16, #tpu.memory_space<vmem>>, vector<18x18x128xbf16>
    tpu.vector_store %arg5[%c0, %c0_0, %c0_1], %0 {strides = array<i32>} : memref<18x18x128xbf16, #tpu.memory_space<vmem>>, vector<18x18x128xbf16>,
    %c0_2 = arith.constant 0 : index
    %c0_3 = arith.constant 0 : index
    %c0_4 = arith.constant 0 : index
    %c0_5 = arith.constant 0 : index
    %2 = vector.load %arg1[%c0_2, %c0_3, %c0_4, %c0_5] : memref<1x16x16x128xbf16, #tpu.memory_space<vmem>>, vector<1x16x16x128xbf16>
    %3 = vector.shape_cast %2 : vector<1x16x16x128xbf16> to vector<16x16x128xbf16>
    %c1 = arith.constant 1 : index
    %c1_6 = arith.constant 1 : index
    %c0_7 = arith.constant 0 : index
    %4 = vector.load %arg5[%c1, %c1_6, %c0_7] : memref<18x18x128xbf16, #tpu.memory_space<vmem>>, vector<16x16x128xbf16>
    tpu.vector_store %arg5[%c1, %c1_6, %c0_7], %3 {strides = array<i32>} : memref<18x18x128xbf16, #tpu.memory_space<vmem>>, vector<16x16x128xbf16>,
    %c0_8 = arith.constant 0 : index
    %c0_9 = arith.constant 0 : index
    %5 = vector.load %arg3[%c0_8, %c0_9] : memref<1x128xf32, #tpu.memory_space<vmem>>, vector<1x128xf32>
    %c0_10 = arith.constant 0 : index
    %c0_11 = arith.constant 0 : index
    %c0_12 = arith.constant 0 : index
    %6 = vector.load %arg5[%c0_10, %c0_11, %c0_12] : memref<18x18x128xbf16, #tpu.memory_space<vmem>>, vector<16x16x128xbf16>
    %7 = vector.shape_cast %6 : vector<16x16x128xbf16> to vector<256x128xbf16>
    %c0_13 = arith.constant 0 : index
    %c0_14 = arith.constant 0 : index
    %8 = vector.load %arg2[%c0_13, %c0_14] : memref<128x2048xbf16, #tpu.memory_space<vmem>>, vector<128x128xbf16>
    %cst_15 = arith.constant dense<0.000000e+00> : vector<256x128xf32>
    %9 = tpu.matmul %7, %8, %cst_15 {dimension_numbers = #tpu.dot_dimension_numbers<[1], [0], [0], [1], [0, 0, 1, 1], [], []>} : vector<256x128xbf16>, vector<128x128xbf16>, vector<256x128xf32> -> vector<256x128xf32>
    %c0_16 = arith.constant 0 : index
    %c1_17 = arith.constant 1 : index
    %c0_18 = arith.constant 0 : index
    %10 = vector.load %arg5[%c0_16, %c1_17, %c0_18] : memref<18x18x128xbf16, #tpu.memory_space<vmem>>, vector<16x16x128xbf16>
    %11 = vector.shape_cast %10 : vector<16x16x128xbf16> to vector<256x128xbf16>
    %c0_19 = arith.constant 0 : index
    %c128 = arith.constant 128 : index
    %12 = vector.load %arg2[%c0_19, %c128] : memref<128x2048xbf16, #tpu.memory_space<vmem>>, vector<128x256xbf16>
    %cst_20 = arith.constant dense<0.000000e+00> : vector<256x256xf32>
    %13 = tpu.matmul %11, %12, %cst_20 {dimension_numbers = #tpu.dot_dimension_numbers<[1], [0], [0], [1], [0, 0, 1, 1], [], []>} : vector<256x128xbf16>, vector<128x256xbf16>, vector<256x256xf32> -> vector<256x256xf32>
    %14 = vector.extract_strided_slice %13 {offsets = [0, 0], sizes = [256, 128], strides = [1, 1]} : vector<256x256xf32> to vector<256x128xf32>
    %15 = arith.addf %9, %14 : vector<256x128xf32>
    %16 = vector.extract_strided_slice %13 {offsets = [0, 128], sizes = [256, 128], strides = [1, 1]} : vector<256x256xf32> to vector<256x128xf32>
    %c0_21 = arith.constant 0 : index
    %c2 = arith.constant 2 : index
    %c0_22 = arith.constant 0 : index
    %17 = vector.load %arg5[%c0_21, %c2, %c0_22] : memref<18x18x128xbf16, #tpu.memory_space<vmem>>, vector<16x16x128xbf16>
    %18 = vector.shape_cast %17 : vector<16x16x128xbf16> to vector<256x128xbf16>
    %c0_23 = arith.constant 0 : index
    %c384 = arith.constant 384 : index
    %19 = vector.load %arg2[%c0_23, %c384] : memref<128x2048xbf16, #tpu.memory_space<vmem>>, vector<128x128xbf16>
    %cst_24 = arith.constant dense<0.000000e+00> : vector<256x128xf32>
    %20 = tpu.matmul %18, %19, %cst_24 {dimension_numbers = #tpu.dot_dimension_numbers<[1], [0], [0], [1], [0, 0, 1, 1], [], []>} : vector<256x128xbf16>, vector<128x128xbf16>, vector<256x128xf32> -> vector<256x128xf32>
    %21 = arith.addf %16, %20 : vector<256x128xf32>
    %c1_25 = arith.constant 1 : index
    %c0_26 = arith.constant 0 : index
    %c0_27 = arith.constant 0 : index
    %22 = vector.load %arg5[%c1_25, %c0_26, %c0_27] : memref<18x18x128xbf16, #tpu.memory_space<vmem>>, vector<16x16x128xbf16>
    %23 = vector.shape_cast %22 : vector<16x16x128xbf16> to vector<256x128xbf16>
    %c0_28 = arith.constant 0 : index
    %c512 = arith.constant 512 : index
    %24 = vector.load %arg2[%c0_28, %c512] : memref<128x2048xbf16, #tpu.memory_space<vmem>>, vector<128x256xbf16>
    %cst_29 = arith.constant dense<0.000000e+00> : vector<256x256xf32>
    %25 = tpu.matmul %23, %24, %cst_29 {dimension_numbers = #tpu.dot_dimension_numbers<[1], [0], [0], [1], [0, 0, 1, 1], [], []>} : vector<256x128xbf16>, vector<128x256xbf16>, vector<256x256xf32> -> vector<256x256xf32>
    %26 = vector.extract_strided_slice %25 {offsets = [0, 0], sizes = [256, 128], strides = [1, 1]} : vector<256x256xf32> to vector<256x128xf32>
    %27 = arith.addf %15, %26 : vector<256x128xf32>
    %28 = vector.extract_strided_slice %25 {offsets = [0, 128], sizes = [256, 128], strides = [1, 1]} : vector<256x256xf32> to vector<256x128xf32>
    %c1_30 = arith.constant 1 : index
    %c1_31 = arith.constant 1 : index
    %c0_32 = arith.constant 0 : index
    %29 = vector.load %arg5[%c1_30, %c1_31, %c0_32] : memref<18x18x128xbf16, #tpu.memory_space<vmem>>, vector<16x16x128xbf16>
    %30 = vector.shape_cast %29 : vector<16x16x128xbf16> to vector<256x128xbf16>
    %c0_33 = arith.constant 0 : index
    %c768 = arith.constant 768 : index
    %31 = vector.load %arg2[%c0_33, %c768] : memref<128x2048xbf16, #tpu.memory_space<vmem>>, vector<128x512xbf16>
    %cst_34 = arith.constant dense<0.000000e+00> : vector<256x512xf32>
    %32 = tpu.matmul %30, %31, %cst_34 {dimension_numbers = #tpu.dot_dimension_numbers<[1], [0], [0], [1], [0, 0, 1, 1], [], []>} : vector<256x128xbf16>, vector<128x512xbf16>, vector<256x512xf32> -> vector<256x512xf32>
    %33 = vector.extract_strided_slice %32 {offsets = [0, 0], sizes = [256, 128], strides = [1, 1]} : vector<256x512xf32> to vector<256x128xf32>
    %34 = arith.addf %27, %33 : vector<256x128xf32>
    %35 = vector.extract_strided_slice %32 {offsets = [0, 128], sizes = [256, 128], strides = [1, 1]} : vector<256x512xf32> to vector<256x128xf32>
    %36 = arith.addf %21, %35 : vector<256x128xf32>
    %37 = vector.extract_strided_slice %32 {offsets = [0, 256], sizes = [256, 128], strides = [1, 1]} : vector<256x512xf32> to vector<256x128xf32>
    %38 = arith.addf %28, %37 : vector<256x128xf32>
    %39 = vector.extract_strided_slice %32 {offsets = [0, 384], sizes = [256, 128], strides = [1, 1]} : vector<256x512xf32> to vector<256x128xf32>
    %c1_35 = arith.constant 1 : index
    %c2_36 = arith.constant 2 : index
    %c0_37 = arith.constant 0 : index
    %40 = vector.load %arg5[%c1_35, %c2_36, %c0_37] : memref<18x18x128xbf16, #tpu.memory_space<vmem>>, vector<16x16x128xbf16>
    %41 = vector.shape_cast %40 : vector<16x16x128xbf16> to vector<256x128xbf16>
    %c0_38 = arith.constant 0 : index
    %c1280 = arith.constant 1280 : index
    %42 = vector.load %arg2[%c0_38, %c1280] : memref<128x2048xbf16, #tpu.memory_space<vmem>>, vector<128x256xbf16>
    %cst_39 = arith.constant dense<0.000000e+00> : vector<256x256xf32>
    %43 = tpu.matmul %41, %42, %cst_39 {dimension_numbers = #tpu.dot_dimension_numbers<[1], [0], [0], [1], [0, 0, 1, 1], [], []>} : vector<256x128xbf16>, vector<128x256xbf16>, vector<256x256xf32> -> vector<256x256xf32>
    %44 = vector.extract_strided_slice %43 {offsets = [0, 0], sizes = [256, 128], strides = [1, 1]} : vector<256x256xf32> to vector<256x128xf32>
    %45 = arith.addf %36, %44 : vector<256x128xf32>
    %46 = vector.extract_strided_slice %43 {offsets = [0, 128], sizes = [256, 128], strides = [1, 1]} : vector<256x256xf32> to vector<256x128xf32>
    %47 = arith.addf %39, %46 : vector<256x128xf32>
    %c2_40 = arith.constant 2 : index
    %c0_41 = arith.constant 0 : index
    %c0_42 = arith.constant 0 : index
    %48 = vector.load %arg5[%c2_40, %c0_41, %c0_42] : memref<18x18x128xbf16, #tpu.memory_space<vmem>>, vector<16x16x128xbf16>
    %49 = vector.shape_cast %48 : vector<16x16x128xbf16> to vector<256x128xbf16>
    %c0_43 = arith.constant 0 : index
    %c1536 = arith.constant 1536 : index
    %50 = vector.load %arg2[%c0_43, %c1536] : memref<128x2048xbf16, #tpu.memory_space<vmem>>, vector<128x128xbf16>
    %cst_44 = arith.constant dense<0.000000e+00> : vector<256x128xf32>
    %51 = tpu.matmul %49, %50, %cst_44 {dimension_numbers = #tpu.dot_dimension_numbers<[1], [0], [0], [1], [0, 0, 1, 1], [], []>} : vector<256x128xbf16>, vector<128x128xbf16>, vector<256x128xf32> -> vector<256x128xf32>
    %52 = arith.addf %38, %51 : vector<256x128xf32>
    %c2_45 = arith.constant 2 : index
    %c1_46 = arith.constant 1 : index
    %c0_47 = arith.constant 0 : index
    %53 = vector.load %arg5[%c2_45, %c1_46, %c0_47] : memref<18x18x128xbf16, #tpu.memory_space<vmem>>, vector<16x16x128xbf16>
    %54 = vector.shape_cast %53 : vector<16x16x128xbf16> to vector<256x128xbf16>
    %c0_48 = arith.constant 0 : index
    %c1664 = arith.constant 1664 : index
    %55 = vector.load %arg2[%c0_48, %c1664] : memref<128x2048xbf16, #tpu.memory_space<vmem>>, vector<128x256xbf16>
    %cst_49 = arith.constant dense<0.000000e+00> : vector<256x256xf32>
    %56 = tpu.matmul %54, %55, %cst_49 {dimension_numbers = #tpu.dot_dimension_numbers<[1], [0], [0], [1], [0, 0, 1, 1], [], []>} : vector<256x128xbf16>, vector<128x256xbf16>, vector<256x256xf32> -> vector<256x256xf32>
    %57 = vector.extract_strided_slice %56 {offsets = [0, 0], sizes = [256, 128], strides = [1, 1]} : vector<256x256xf32> to vector<256x128xf32>
    %58 = arith.addf %52, %57 : vector<256x128xf32>
    %59 = vector.extract_strided_slice %56 {offsets = [0, 128], sizes = [256, 128], strides = [1, 1]} : vector<256x256xf32> to vector<256x128xf32>
    %60 = arith.addf %47, %59 : vector<256x128xf32>
    %c2_50 = arith.constant 2 : index
    %c2_51 = arith.constant 2 : index
    %c0_52 = arith.constant 0 : index
    %61 = vector.load %arg5[%c2_50, %c2_51, %c0_52] : memref<18x18x128xbf16, #tpu.memory_space<vmem>>, vector<16x16x128xbf16>
    %62 = vector.shape_cast %61 : vector<16x16x128xbf16> to vector<256x128xbf16>
    %c0_53 = arith.constant 0 : index
    %c1920 = arith.constant 1920 : index
    %63 = vector.load %arg2[%c0_53, %c1920] : memref<128x2048xbf16, #tpu.memory_space<vmem>>, vector<128x128xbf16>
    %cst_54 = arith.constant dense<0.000000e+00> : vector<256x128xf32>
    %64 = tpu.matmul %62, %63, %cst_54 {dimension_numbers = #tpu.dot_dimension_numbers<[1], [0], [0], [1], [0, 0, 1, 1], [], []>} : vector<256x128xbf16>, vector<128x128xbf16>, vector<256x128xf32> -> vector<256x128xf32>
    %65 = arith.addf %60, %64 : vector<256x128xf32>
    %66 = vector.broadcast %5 : vector<1x128xf32> to vector<256x128xf32>
    %67 = arith.addf %34, %66 : vector<256x128xf32>
    %c0_55 = arith.constant 0 : index
    %c0_56 = arith.constant 0 : index
    %c0_57 = arith.constant 0 : index
    %c0_58 = arith.constant 0 : index
    %68 = vector.load %arg4[%c0_55, %c0_56, %c0_57, %c0_58] : memref<1x4x256x128xf32, #tpu.memory_space<vmem>>, vector<1x1x256x128xf32>
    %69 = vector.shape_cast %68 : vector<1x1x256x128xf32> to vector<256x128xf32>
    %70 = vector.shape_cast %67 : vector<256x128xf32> to vector<1x1x256x128xf32>
    tpu.vector_store %arg4[%c0_55, %c0_56, %c0_57, %c0_58], %70 {strides = array<i32>} : memref<1x4x256x128xf32, #tpu.memory_space<vmem>>, vector<1x1x256x128xf32>,
    %71 = vector.broadcast %5 : vector<1x128xf32> to vector<256x128xf32>
    %72 = arith.addf %45, %71 : vector<256x128xf32>
    %c0_59 = arith.constant 0 : index
    %c1_60 = arith.constant 1 : index
    %c0_61 = arith.constant 0 : index
    %c0_62 = arith.constant 0 : index
    %73 = vector.load %arg4[%c0_59, %c1_60, %c0_61, %c0_62] : memref<1x4x256x128xf32, #tpu.memory_space<vmem>>, vector<1x1x256x128xf32>
    %74 = vector.shape_cast %73 : vector<1x1x256x128xf32> to vector<256x128xf32>
    %75 = vector.shape_cast %72 : vector<256x128xf32> to vector<1x1x256x128xf32>
    tpu.vector_store %arg4[%c0_59, %c1_60, %c0_61, %c0_62], %75 {strides = array<i32>} : memref<1x4x256x128xf32, #tpu.memory_space<vmem>>, vector<1x1x256x128xf32>,
    %76 = vector.broadcast %5 : vector<1x128xf32> to vector<256x128xf32>
    %77 = arith.addf %58, %76 : vector<256x128xf32>
    %c0_63 = arith.constant 0 : index
    %c2_64 = arith.constant 2 : index
    %c0_65 = arith.constant 0 : index
    %c0_66 = arith.constant 0 : index
    %78 = vector.load %arg4[%c0_63, %c2_64, %c0_65, %c0_66] : memref<1x4x256x128xf32, #tpu.memory_space<vmem>>, vector<1x1x256x128xf32>
    %79 = vector.shape_cast %78 : vector<1x1x256x128xf32> to vector<256x128xf32>
    %80 = vector.shape_cast %77 : vector<256x128xf32> to vector<1x1x256x128xf32>
    tpu.vector_store %arg4[%c0_63, %c2_64, %c0_65, %c0_66], %80 {strides = array<i32>} : memref<1x4x256x128xf32, #tpu.memory_space<vmem>>, vector<1x1x256x128xf32>,
    %81 = vector.broadcast %5 : vector<1x128xf32> to vector<256x128xf32>
    %82 = arith.addf %65, %81 : vector<256x128xf32>
    %c0_67 = arith.constant 0 : index
    %c3 = arith.constant 3 : index
    %c0_68 = arith.constant 0 : index
    %c0_69 = arith.constant 0 : index
    %83 = vector.load %arg4[%c0_67, %c3, %c0_68, %c0_69] : memref<1x4x256x128xf32, #tpu.memory_space<vmem>>, vector<1x1x256x128xf32>
    %84 = vector.shape_cast %83 : vector<1x1x256x128xf32> to vector<256x128xf32>
    %85 = vector.shape_cast %82 : vector<256x128xf32> to vector<1x1x256x128xf32>
    tpu.vector_store %arg4[%c0_67, %c3, %c0_68, %c0_69], %85 {strides = array<i32>} : memref<1x4x256x128xf32, #tpu.memory_space<vmem>>, vector<1x1x256x128xf32>,
    return
  }
  func.func @transform_0(%arg0: i32) -> (i32, i32, i32, i32) {
    %c0_i32 = arith.constant 0 : i32
    %c0_i32_0 = arith.constant 0 : i32
    %c0_i32_1 = arith.constant 0 : i32
    %c0_i32_2 = arith.constant 0 : i32
    return %arg0, %c0_i32, %c0_i32_0, %c0_i32_1 : i32, i32, i32, i32
  }
  func.func @transform_1(%arg0: i32) -> (i32, i32) {
    %c0_i32 = arith.constant 0 : i32
    %c0_i32_0 = arith.constant 0 : i32
    %c0_i32_1 = arith.constant 0 : i32
    return %c0_i32, %c0_i32_0 : i32, i32
  }
  func.func @transform_2(%arg0: i32) -> (i32, i32) {
    %c0_i32 = arith.constant 0 : i32
    %c0_i32_0 = arith.constant 0 : i32
    %c0_i32_1 = arith.constant 0 : i32
    return %c0_i32, %c0_i32_0 : i32, i32
  }
  func.func @transform_3(%arg0: i32) -> (i32, i32, i32, i32) {
    %c0_i32 = arith.constant 0 : i32
    %c0_i32_0 = arith.constant 0 : i32
    %c0_i32_1 = arith.constant 0 : i32
    %c0_i32_2 = arith.constant 0 : i32
    return %arg0, %c0_i32, %c0_i32_0, %c0_i32_1 : i32, i32, i32, i32
  }
}

</mosaic_0001>

<llo_original>
// kernel: tpu_custom_call.1
$region0: #{tpu_custom_call.1}
  #allocation0 [shape = 'u32[]', space=smem, size = 0x4, offset = 0x4, fixed_abs, tag = 'smem constant byte address 0x4 - core index']
  #allocation1 [shape = 'u32[144,128]{1,0:T(1,128)}', space=vmem, size = 0x12000, scoped, tag = 'internal scratch']
  #allocation2 [shape = 'bf16[18,18,128]{2,1,0:T(8,128)(2,1)}', space=vmem, size = 0x1b000, scoped, tag = 'scratch operand']
  %s0 = inlined_call_operand.hbm [shape: bf16[2,16,16,128], index: 0, kind: input, shape index: {}]
  %s1 = inlined_call_operand.hbm [shape: bf16[128,2048], index: 1, kind: input, shape index: {}]
  %s2 = inlined_call_operand.vmem [shape: f32[1,128], index: 2, kind: input, shape index: {}]
  %s3 = inlined_call_operand.hbm [shape: f32[2,4,256,128], index: 3, kind: output, shape index: {}]
  %s4 = sld [smem:[#allocation0]]
  $region53: #{tpu_custom_call.1} parent=0
    _
  %s6 = ssub.s32 1, %s4
  %s7 = scalar_select 0, %s6, %s4
  $region1: #{tpu_custom_call.1} parent=0
    #allocation3 [shape = 'u8[131072]{0}', space=vmem, size = 0x20000, scoped, tag = 'input window, operand 0']
    #allocation4 [shape = 's32[2]{0}', space=sflag, size = 0x8, scoped, tag = 'scoped memory for tpu_custom_call.1']
    #allocation5 [shape = 's32[2]{0}', space=sflag, size = 0x8, scoped, tag = 'scoped memory for tpu_custom_call.1']
    #allocation6 [shape = 'u8[524288]{0}', space=vmem, size = 0x80000, scoped, tag = 'input window, operand 1, single buffered']
    #allocation7 [shape = 's32[1]{0}', space=sflag, size = 0x4, scoped, tag = 'scoped memory for tpu_custom_call.1']
    #allocation8 [shape = 'u8[1048576]{0}', space=vmem, size = 0x100000, scoped, tag = 'output window, operand 0']
    %8 = vsyncpa [#allocation4], 0
    %s9 = scalar_lea.sflag [#allocation4], 1
    %10 = vsyncpa %s9, 0
    %11 = vsyncpa [#allocation7], 0
    %12 = vsyncpa [#allocation5], 0
    %s13 = scalar_lea.sflag [#allocation5], 1
    %14 = vsyncpa %s13, 0
    loop: start=0, step=1, limit=4
    $region2: #{tpu_custom_call.1} parent=1 // loop_pre_header
      _
    $region3: #{tpu_custom_call.1} parent=1 // loop_header
      %s16 = sphi 0, %s20
      %p17 = scmp.ge.s32.totalorder %s16, 4
      %s26 = sphi 0, %s28
      %s29 = sphi 0, %s26
      %s30 = sphi 0, %s29
      %s46 = sphi 0, %s30
      %s50 = sphi 0, %s50
      %s52 = sphi 0, %s50
      %s53 = sphi 0, %s52
      %s67 = sphi 0, %s53
      %s71 = sphi 0, %s71
      %s73 = sphi 0, %s71
      %s74 = sphi 0, %s73
      %s88 = sphi 0, %s74
      %s94 = sphi 0, %s96
      %s97 = sphi 0, %s94
      %s98 = sphi 0, %s97
      %s114 = sphi 0, %s98
    $region4: #{tpu_custom_call.1} parent=1 // loop_header_branch
      %19 = sbr.rel (%p17) target = $region8
    $region5: #{tpu_custom_call.1} parent=1 // loop_body
      %s21 = ssub.s32 %s16, 1
      %s22 = ssub.s32 %s16, 2
      %s23 = sadd.s32 %s16, 1
      %s24 = ssub.s32 %s16, %s23
      %p25 = scmp.eq.s32.totalorder %s24, 0
      %s27 = sadd.s32 %s26, 1
      %s28 = scalar_select %p25, %s26, %s27
      %p31 = pneg %p25
      %p32 = scmp.eq.s32.totalorder %s16, 1
      %p33 = por %p31, %p32
      %p34 = scmp.ne.s32.totalorder %s26, %s29
      %p35 = scmp.eq.s32.totalorder %s16, 0
      %p36 = por %p34, %p35
      %p37 = scmp.ne.s32.totalorder %s26, %s29
      %p38 = scmp.eq.s32.totalorder %s21, 1
      %p39 = por %p37, %p38
      %p40 = scmp.ne.s32.totalorder %s29, %s30
      %p41 = scmp.eq.s32.totalorder %s21, 0
      %p42 = por %p40, %p41
      %p43 = scmp.ne.s32.totalorder %s29, %s30
      %p44 = scmp.eq.s32.totalorder %s22, 1
      %p45 = por %p43, %p44
      %p47 = scmp.ne.s32.totalorder %s30, %s46
      %p48 = scmp.eq.s32.totalorder %s22, 0
      %p49 = por %p47, %p48
      %s51 = sadd.s32 %s50, 1
      %p54 = scmp.eq.s32.totalorder %s16, 1
      %p55 = scmp.ne.s32.totalorder %s50, %s52
      %p56 = scmp.eq.s32.totalorder %s16, 0
      %p57 = por %p55, %p56
      %p58 = scmp.ne.s32.totalorder %s50, %s52
      %p59 = scmp.eq.s32.totalorder %s21, 1
      %p60 = por %p58, %p59
      %p61 = scmp.ne.s32.totalorder %s52, %s53
      %p62 = scmp.eq.s32.totalorder %s21, 0
      %p63 = por %p61, %p62
      %p64 = scmp.ne.s32.totalorder %s52, %s53
      %p65 = scmp.eq.s32.totalorder %s22, 1
      %p66 = por %p64, %p65
      %p68 = scmp.ne.s32.totalorder %s53, %s67
      %p69 = scmp.eq.s32.totalorder %s22, 0
      %p70 = por %p68, %p69
      %s72 = sadd.s32 %s71, 1
      %p75 = scmp.eq.s32.totalorder %s16, 1
      %p76 = scmp.ne.s32.totalorder %s71, %s73
      %p77 = scmp.eq.s32.totalorder %s16, 0
      %p78 = por %p76, %p77
      %p79 = scmp.ne.s32.totalorder %s71, %s73
      %p80 = scmp.eq.s32.totalorder %s21, 1
      %p81 = por %p79, %p80
      %p82 = scmp.ne.s32.totalorder %s73, %s74
      %p83 = scmp.eq.s32.totalorder %s21, 0
      %p84 = por %p82, %p83
      %p85 = scmp.ne.s32.totalorder %s73, %s74
      %p86 = scmp.eq.s32.totalorder %s22, 1
      %p87 = por %p85, %p86
      %p89 = scmp.ne.s32.totalorder %s74, %s88
      %p90 = scmp.eq.s32.totalorder %s22, 0
      %p91 = por %p89, %p90
      %s92 = ssub.s32 %s16, %s23
      %p93 = scmp.eq.s32.totalorder %s92, 0
      %s95 = sadd.s32 %s94, 1
      %s96 = scalar_select %p93, %s94, %s95
      %p99 = pneg %p93
      %p100 = scmp.eq.s32.totalorder %s16, 1
      %p101 = por %p99, %p100
      %p102 = scmp.ne.s32.totalorder %s94, %s97
      %p103 = scmp.eq.s32.totalorder %s16, 0
      %p104 = por %p102, %p103
      %p105 = scmp.ne.s32.totalorder %s94, %s97
      %p106 = scmp.eq.s32.totalorder %s21, 1
      %p107 = por %p105, %p106
      %p108 = scmp.ne.s32.totalorder %s97, %s98
      %p109 = scmp.eq.s32.totalorder %s21, 0
      %p110 = por %p108, %p109
      %p111 = scmp.ne.s32.totalorder %s97, %s98
      %p112 = scmp.eq.s32.totalorder %s22, 1
      %p113 = por %p111, %p112
      %p115 = scmp.ne.s32.totalorder %s98, %s114
      %p116 = scmp.eq.s32.totalorder %s22, 0
      %p117 = por %p115, %p116
      %p118 = scmp.le.s32.totalorder 1, %s16
      %p119 = scmp.lt.s32.totalorder %s16, 3
      %p120 = pnand %p118, %p119
      %p121 = pneg %p120
      // Predicated region
      $region9: #{tpu_custom_call.1} parent=5 // pred_check
        _
      $region10: #{tpu_custom_call.1} parent=5 // pred_check_branch
        %123 = sbr.rel (%p120) target = $region12
      $region11: #{tpu_custom_call.1} parent=5 // pred_region
        %s124 = ssub.s32 %s16, 1
        // Predicated region
        $region13: #{tpu_custom_call.1} parent=11 // pred_check
          %p125 = pneg %p63
        $region14: #{tpu_custom_call.1} parent=11 // pred_check_branch
          %127 = sbr.rel (%p125) target = $region16
        $region15: #{tpu_custom_call.1} parent=11 // pred_region
          %s129 = ssub.s32 16384, 16384
          %130 = vsyncadd [#allocation7], %s129
          %s131 = sshll.u32 [#allocation6], 4
          %s132 = int_to_ptr.vmem [resolvable:$true] %s131
          %137 = dma.hbm_to_vmem [thread:$0]  %s1, 16384, %s132, [#allocation7], 1024, 1024, 64
        $region16: #{tpu_custom_call.1} parent=11 // pred_fallthru
          _
        // Predicated region
        $region17: #{tpu_custom_call.1} parent=11 // pred_check
          %p138 = pneg %p84
        $region18: #{tpu_custom_call.1} parent=11 // pred_check_branch
          %140 = sbr.rel (%p138) target = $region20
        $region19: #{tpu_custom_call.1} parent=11 // pred_region
          _
        $region20: #{tpu_custom_call.1} parent=11 // pred_fallthru
          _
      $region12: #{tpu_custom_call.1} parent=5 // pred_fallthru
        _
      %p141 = scmp.lt.s32.totalorder %s16, 2
      // Predicated region
      $region21: #{tpu_custom_call.1} parent=5 // pred_check
        %p142 = pneg %p141
      $region22: #{tpu_custom_call.1} parent=5 // pred_check_branch
        %144 = sbr.rel (%p142) target = $region24
      $region23: #{tpu_custom_call.1} parent=5 // pred_region
        // Predicated region
        $region25: #{tpu_custom_call.1} parent=23 // pred_check
          %p145 = pneg %p36
        $region26: #{tpu_custom_call.1} parent=23 // pred_check_branch
          %147 = sbr.rel (%p145) target = $region28
        $region27: #{tpu_custom_call.1} parent=23 // pred_region
          %s148 = sand.u32 %s26, 1
          %s149 = scalar_lea.sflag [#allocation4], %s148
          %s150 = sand.u32 %s26, 1
          %s151 = smul.addr %s150, 128
          %s152 = scalar_lea.vmem [#allocation3], %s151
          %s154 = ssub.s32 2048, 2048
          %155 = vsyncadd %s149, %s154
          %s156 = smul.addr %s16, 32
          %s157 = smul.addr %s156, 64
          %s158 = scalar_lea.hbm %s0, %s157
          %s159 = sshll.u32 %s152, 4
          %s160 = int_to_ptr.vmem [resolvable:$true] %s159
          %165 = dma.hbm_to_vmem [thread:$0]  %s158, 2048, %s160, %s149, 64, 64, 4
        $region28: #{tpu_custom_call.1} parent=23 // pred_fallthru
          _
      $region24: #{tpu_custom_call.1} parent=5 // pred_fallthru
        _
      %p166 = scmp.le.s32.totalorder 1, %s16
      %p167 = scmp.lt.s32.totalorder %s16, 3
      %p168 = pnand %p166, %p167
      %p169 = pneg %p168
      // Predicated region
      $region29: #{tpu_custom_call.1} parent=5 // pred_check
        _
      $region30: #{tpu_custom_call.1} parent=5 // pred_check_branch
        %171 = sbr.rel (%p168) target = $region32
      $region31: #{tpu_custom_call.1} parent=5 // pred_region
        %s172 = ssub.s32 %s16, 1
        %s173 = sand.u32 %s29, 1
        %s174 = scalar_lea.sflag [#allocation4], %s173
        %s175 = sand.u32 %s29, 1
        %s176 = smul.addr %s175, 128
        %s177 = scalar_lea.vmem [#allocation3], %s176
        // Predicated region
        $region33: #{tpu_custom_call.1} parent=31 // pred_check
          %p178 = pneg %p42
        $region34: #{tpu_custom_call.1} parent=31 // pred_check_branch
          %180 = sbr.rel (%p178) target = $region36
        $region35: #{tpu_custom_call.1} parent=31 // pred_region
          %181 = dma.done %s174, 2048
        $region36: #{tpu_custom_call.1} parent=31 // pred_fallthru
          _
        // Predicated region
        $region37: #{tpu_custom_call.1} parent=31 // pred_check
          %p182 = pneg %p63
        $region38: #{tpu_custom_call.1} parent=31 // pred_check_branch
          %184 = sbr.rel (%p182) target = $region40
        $region39: #{tpu_custom_call.1} parent=31 // pred_region
          %185 = dma.done [#allocation7], 16384
        $region40: #{tpu_custom_call.1} parent=31 // pred_fallthru
          _
        %s186 = sand.u32 %s29, 1
        %s187 = scalar_lea.sflag [#allocation4], %s186
        %s188 = sand.u32 %s29, 1
        %s189 = smul.addr %s188, 128
        %s190 = scalar_lea.vmem [#allocation3], %s189
        %p191 = pneg %p42
        %p192 = pneg %p39
        %p193 = pneg %p63
        %p194 = pneg %p60
        %p195 = pneg %p84
        %p196 = pneg %p81
        %p197 = pneg %p110
        %p198 = pneg %p107
        %s199 = sand.u32 %s97, 1
        %s200 = scalar_lea.sflag [#allocation5], %s199
        %s201 = sand.u32 %s97, 1
        %s202 = smul.addr %s201, 1024
        %s203 = scalar_lea.vmem [#allocation8], %s202
        %205 = vst [vmem:[#allocation2] sm:$0xf] 0
        %206 = vst [vmem:[#allocation2 + $0x4] sm:$0xf] 0
        %207 = vst [vmem:[#allocation2 + $0x8] sm:$0x1] 0
        %208 = vst [vmem:[#allocation2 + $0xc] sm:$0xf] 0
        %209 = vst [vmem:[#allocation2 + $0x10] sm:$0xf] 0
        %210 = vst [vmem:[#allocation2 + $0x14] sm:$0x1] 0
        %211 = vst [vmem:[#allocation2 + $0x18] sm:$0xf] 0
        %212 = vst [vmem:[#allocation2 + $0x1c] sm:$0xf] 0
        %213 = vst [vmem:[#allocation2 + $0x20] sm:$0x1] 0
        %214 = vst [vmem:[#allocation2 + $0x24] sm:$0xf] 0
        %215 = vst [vmem:[#allocation2 + $0x28] sm:$0xf] 0
        %216 = vst [vmem:[#allocation2 + $0x2c] sm:$0x1] 0
        %217 = vst [vmem:[#allocation2 + $0x30] sm:$0xf] 0
        %218 = vst [vmem:[#allocation2 + $0x34] sm:$0xf] 0
        %219 = vst [vmem:[#allocation2 + $0x38] sm:$0x1] 0
        %220 = vst [vmem:[#allocation2 + $0x3c] sm:$0xf] 0
        %221 = vst [vmem:[#allocation2 + $0x40] sm:$0xf] 0
        %222 = vst [vmem:[#allocation2 + $0x44] sm:$0x1] 0
        %223 = vst [vmem:[#allocation2 + $0x48] sm:$0xf] 0
        %224 = vst [vmem:[#allocation2 + $0x4c] sm:$0xf] 0
        %225 = vst [vmem:[#allocation2 + $0x50] sm:$0x1] 0
        %226 = vst [vmem:[#allocation2 + $0x54] sm:$0xf] 0
        %227 = vst [vmem:[#allocation2 + $0x58] sm:$0xf] 0
        %228 = vst [vmem:[#allocation2 + $0x5c] sm:$0x1] 0
        %229 = vst [vmem:[#allocation2 + $0x60] sm:$0xf] 0
        %230 = vst [vmem:[#allocation2 + $0x64] sm:$0xf] 0
        %231 = vst [vmem:[#allocation2 + $0x68] sm:$0x1] 0
        %232 = vst [vmem:[#allocation2 + $0x6c] sm:$0xf] 0
        %233 = vst [vmem:[#allocation2 + $0x70] sm:$0xf] 0
        %234 = vst [vmem:[#allocation2 + $0x74] sm:$0x1] 0
        %235 = vst [vmem:[#allocation2 + $0x78] sm:$0xf] 0
        %236 = vst [vmem:[#allocation2 + $0x7c] sm:$0xf] 0
        %237 = vst [vmem:[#allocation2 + $0x80] sm:$0x1] 0
        %238 = vst [vmem:[#allocation2 + $0x84] sm:$0xf] 0
        %239 = vst [vmem:[#allocation2 + $0x88] sm:$0xf] 0
        %240 = vst [vmem:[#allocation2 + $0x8c] sm:$0x1] 0
        %241 = vst [vmem:[#allocation2 + $0x90] sm:$0xf] 0
        %242 = vst [vmem:[#allocation2 + $0x94] sm:$0xf] 0
        %243 = vst [vmem:[#allocation2 + $0x98] sm:$0x1] 0
        %244 = vst [vmem:[#allocation2 + $0x9c] sm:$0xf] 0
        %245 = vst [vmem:[#allocation2 + $0xa0] sm:$0xf] 0
        %246 = vst [vmem:[#allocation2 + $0xa4] sm:$0x1] 0
        %247 = vst [vmem:[#allocation2 + $0xa8] sm:$0xf] 0
        %248 = vst [vmem:[#allocation2 + $0xac] sm:$0xf] 0
        %249 = vst [vmem:[#allocation2 + $0xb0] sm:$0x1] 0
        %250 = vst [vmem:[#allocation2 + $0xb4] sm:$0xf] 0
        %251 = vst [vmem:[#allocation2 + $0xb8] sm:$0xf] 0
        %252 = vst [vmem:[#allocation2 + $0xbc] sm:$0x1] 0
        %253 = vst [vmem:[#allocation2 + $0xc0] sm:$0xf] 0
        %254 = vst [vmem:[#allocation2 + $0xc4] sm:$0xf] 0
        %255 = vst [vmem:[#allocation2 + $0xc8] sm:$0x1] 0
        %256 = vst [vmem:[#allocation2 + $0xcc] sm:$0xf] 0
        %257 = vst [vmem:[#allocation2 + $0xd0] sm:$0xf] 0
        %258 = vst [vmem:[#allocation2 + $0xd4] sm:$0x1] 0
        %v259 = vld [vmem:[%s177] sm:$0xf]
        %v260 = vld [vmem:[%s177 + $0x4] sm:$0xf]
        %v261 = vld [vmem:[%s177 + $0x8] sm:$0xf]
        %v262 = vld [vmem:[%s177 + $0xc] sm:$0xf]
        %v263 = vld [vmem:[%s177 + $0x10] sm:$0xf]
        %v264 = vld [vmem:[%s177 + $0x14] sm:$0xf]
        %v265 = vld [vmem:[%s177 + $0x18] sm:$0xf]
        %v266 = vld [vmem:[%s177 + $0x1c] sm:$0xf]
        %v267 = vld [vmem:[%s177 + $0x20] sm:$0xf]
        %v268 = vld [vmem:[%s177 + $0x24] sm:$0xf]
        %v269 = vld [vmem:[%s177 + $0x28] sm:$0xf]
        %v270 = vld [vmem:[%s177 + $0x2c] sm:$0xf]
        %v271 = vld [vmem:[%s177 + $0x30] sm:$0xf]
        %v272 = vld [vmem:[%s177 + $0x34] sm:$0xf]
        %v273 = vld [vmem:[%s177 + $0x38] sm:$0xf]
        %v274 = vld [vmem:[%s177 + $0x3c] sm:$0xf]
        %v275 = vld [vmem:[%s177 + $0x40] sm:$0xf]
        %v276 = vld [vmem:[%s177 + $0x44] sm:$0xf]
        %v277 = vld [vmem:[%s177 + $0x48] sm:$0xf]
        %v278 = vld [vmem:[%s177 + $0x4c] sm:$0xf]
        %v279 = vld [vmem:[%s177 + $0x50] sm:$0xf]
        %v280 = vld [vmem:[%s177 + $0x54] sm:$0xf]
        %v281 = vld [vmem:[%s177 + $0x58] sm:$0xf]
        %v282 = vld [vmem:[%s177 + $0x5c] sm:$0xf]
        %v283 = vld [vmem:[%s177 + $0x60] sm:$0xf]
        %v284 = vld [vmem:[%s177 + $0x64] sm:$0xf]
        %v285 = vld [vmem:[%s177 + $0x68] sm:$0xf]
        %v286 = vld [vmem:[%s177 + $0x6c] sm:$0xf]
        %v287 = vld [vmem:[%s177 + $0x70] sm:$0xf]
        %v288 = vld [vmem:[%s177 + $0x74] sm:$0xf]
        %v289 = vld [vmem:[%s177 + $0x78] sm:$0xf]
        %v290 = vld [vmem:[%s177 + $0x7c] sm:$0xf]
        %vm291 = vsmask.f32 256
        %vm292 = vsmask.f32 4368
        %vm293 = vmor %vm291, %vm292
        %v295 = vshrl.u32 %v259, 16
        %v297 = vrot.slane %v295, 7
        %v298 = vshll.u32 %v259, 16
        %v300 = vor.u32 %v297, %v298
        %v301 = vrot.slane %v297, 4
        %v303 = vshrl.u32 %v260, 16
        %v305 = vrot.slane %v303, 7
        %v306 = vshll.u32 %v260, 16
        %v308 = vor.u32 %v305, %v306
        %v309 = vsel %vm293, %v301, %v308
        %v310 = vrot.slane %v305, 4
        %v312 = vshrl.u32 %v261, 16
        %v314 = vrot.slane %v312, 7
        %v315 = vshll.u32 %v261, 16
        %v317 = vor.u32 %v314, %v315
        %v318 = vrot.slane %v314, 4
        %v320 = vshrl.u32 %v262, 16
        %v322 = vrot.slane %v320, 7
        %v323 = vshll.u32 %v262, 16
        %v325 = vor.u32 %v322, %v323
        %v326 = vsel %vm293, %v318, %v325
        %v327 = vrot.slane %v322, 4
        %v329 = vshrl.u32 %v263, 16
        %v331 = vrot.slane %v329, 7
        %v332 = vshll.u32 %v263, 16
        %v334 = vor.u32 %v331, %v332
        %v335 = vrot.slane %v331, 4
        %v337 = vshrl.u32 %v264, 16
        %v339 = vrot.slane %v337, 7
        %v340 = vshll.u32 %v264, 16
        %v342 = vor.u32 %v339, %v340
        %v343 = vsel %vm293, %v335, %v342
        %v344 = vrot.slane %v339, 4
        %v346 = vshrl.u32 %v265, 16
        %v348 = vrot.slane %v346, 7
        %v349 = vshll.u32 %v265, 16
        %v351 = vor.u32 %v348, %v349
        %v352 = vrot.slane %v348, 4
        %v354 = vshrl.u32 %v266, 16
        %v356 = vrot.slane %v354, 7
        %v357 = vshll.u32 %v266, 16
        %v359 = vor.u32 %v356, %v357
        %v360 = vsel %vm293, %v352, %v359
        %v361 = vrot.slane %v356, 4
        %v363 = vshrl.u32 %v267, 16
        %v365 = vrot.slane %v363, 7
        %v366 = vshll.u32 %v267, 16
        %v368 = vor.u32 %v365, %v366
        %v369 = vrot.slane %v365, 4
        %v371 = vshrl.u32 %v268, 16
        %v373 = vrot.slane %v371, 7
        %v374 = vshll.u32 %v268, 16
        %v376 = vor.u32 %v373, %v374
        %v377 = vsel %vm293, %v369, %v376
        %v378 = vrot.slane %v373, 4
        %v380 = vshrl.u32 %v269, 16
        %v382 = vrot.slane %v380, 7
        %v383 = vshll.u32 %v269, 16
        %v385 = vor.u32 %v382, %v383
        %v386 = vrot.slane %v382, 4
        %v388 = vshrl.u32 %v270, 16
        %v390 = vrot.slane %v388, 7
        %v391 = vshll.u32 %v270, 16
        %v393 = vor.u32 %v390, %v391
        %v394 = vsel %vm293, %v386, %v393
        %v395 = vrot.slane %v390, 4
        %v397 = vshrl.u32 %v271, 16
        %v399 = vrot.slane %v397, 7
        %v400 = vshll.u32 %v271, 16
        %v402 = vor.u32 %v399, %v400
        %v403 = vrot.slane %v399, 4
        %v405 = vshrl.u32 %v272, 16
        %v407 = vrot.slane %v405, 7
        %v408 = vshll.u32 %v272, 16
        %v410 = vor.u32 %v407, %v408
        %v411 = vsel %vm293, %v403, %v410
        %v412 = vrot.slane %v407, 4
        %v414 = vshrl.u32 %v273, 16
        %v416 = vrot.slane %v414, 7
        %v417 = vshll.u32 %v273, 16
        %v419 = vor.u32 %v416, %v417
        %v420 = vrot.slane %v416, 4
        %v422 = vshrl.u32 %v274, 16
        %v424 = vrot.slane %v422, 7
        %v425 = vshll.u32 %v274, 16
        %v427 = vor.u32 %v424, %v425
        %v428 = vsel %vm293, %v420, %v427
        %v429 = vrot.slane %v424, 4
        %v431 = vshrl.u32 %v275, 16
        %v433 = vrot.slane %v431, 7
        %v434 = vshll.u32 %v275, 16
        %v436 = vor.u32 %v433, %v434
        %v437 = vrot.slane %v433, 4
        %v439 = vshrl.u32 %v276, 16
        %v441 = vrot.slane %v439, 7
        %v442 = vshll.u32 %v276, 16
        %v444 = vor.u32 %v441, %v442
        %v445 = vsel %vm293, %v437, %v444
        %v446 = vrot.slane %v441, 4
        %v448 = vshrl.u32 %v277, 16
        %v450 = vrot.slane %v448, 7
        %v451 = vshll.u32 %v277, 16
        %v453 = vor.u32 %v450, %v451
        %v454 = vrot.slane %v450, 4
        %v456 = vshrl.u32 %v278, 16
        %v458 = vrot.slane %v456, 7
        %v459 = vshll.u32 %v278, 16
        %v461 = vor.u32 %v458, %v459
        %v462 = vsel %vm293, %v454, %v461
        %v463 = vrot.slane %v458, 4
        %v465 = vshrl.u32 %v279, 16
        %v467 = vrot.slane %v465, 7
        %v468 = vshll.u32 %v279, 16
        %v470 = vor.u32 %v467, %v468
        %v471 = vrot.slane %v467, 4
        %v473 = vshrl.u32 %v280, 16
        %v475 = vrot.slane %v473, 7
        %v476 = vshll.u32 %v280, 16
        %v478 = vor.u32 %v475, %v476
        %v479 = vsel %vm293, %v471, %v478
        %v480 = vrot.slane %v475, 4
        %v482 = vshrl.u32 %v281, 16
        %v484 = vrot.slane %v482, 7
        %v485 = vshll.u32 %v281, 16
        %v487 = vor.u32 %v484, %v485
        %v488 = vrot.slane %v484, 4
        %v490 = vshrl.u32 %v282, 16
        %v492 = vrot.slane %v490, 7
        %v493 = vshll.u32 %v282, 16
        %v495 = vor.u32 %v492, %v493
        %v496 = vsel %vm293, %v488, %v495
        %v497 = vrot.slane %v492, 4
        %v499 = vshrl.u32 %v283, 16
        %v501 = vrot.slane %v499, 7
        %v502 = vshll.u32 %v283, 16
        %v504 = vor.u32 %v501, %v502
        %v505 = vrot.slane %v501, 4
        %v507 = vshrl.u32 %v284, 16
        %v509 = vrot.slane %v507, 7
        %v510 = vshll.u32 %v284, 16
        %v512 = vor.u32 %v509, %v510
        %v513 = vsel %vm293, %v505, %v512
        %v514 = vrot.slane %v509, 4
        %v516 = vshrl.u32 %v285, 16
        %v518 = vrot.slane %v516, 7
        %v519 = vshll.u32 %v285, 16
        %v521 = vor.u32 %v518, %v519
        %v522 = vrot.slane %v518, 4
        %v524 = vshrl.u32 %v286, 16
        %v526 = vrot.slane %v524, 7
        %v527 = vshll.u32 %v286, 16
        %v529 = vor.u32 %v526, %v527
        %v530 = vsel %vm293, %v522, %v529
        %v531 = vrot.slane %v526, 4
        %v533 = vshrl.u32 %v287, 16
        %v535 = vrot.slane %v533, 7
        %v536 = vshll.u32 %v287, 16
        %v538 = vor.u32 %v535, %v536
        %v539 = vrot.slane %v535, 4
        %v541 = vshrl.u32 %v288, 16
        %v543 = vrot.slane %v541, 7
        %v544 = vshll.u32 %v288, 16
        %v546 = vor.u32 %v543, %v544
        %v547 = vsel %vm293, %v539, %v546
        %v548 = vrot.slane %v543, 4
        %v550 = vshrl.u32 %v289, 16
        %v552 = vrot.slane %v550, 7
        %v553 = vshll.u32 %v289, 16
        %v555 = vor.u32 %v552, %v553
        %v556 = vrot.slane %v552, 4
        %v558 = vshrl.u32 %v290, 16
        %v560 = vrot.slane %v558, 7
        %v561 = vshll.u32 %v290, 16
        %v563 = vor.u32 %v560, %v561
        %v564 = vsel %vm293, %v556, %v563
        %v565 = vrot.slane %v560, 4
        %s614 = scalar_lea.vmem [#allocation2], 12
        %vm615 = vcmask 1043456
        %vm616 = vsmask.f32 7938
        %vm617 = vmand %vm615, %vm616
        %v618 = vld [vmem:[%s614] sm:$0xf]
        %v619 = vsel %vm617, %v300, %v618
        %620 = vst [vmem:[%s614] sm:$0xf] %v619
        %621 = vst [vmem:[%s614 + $0x4] sm:$0xf] %v309
        %vm622 = vcmask 1040384
        %vm623 = vmand %vm622, %vm291
        %v624 = vld [vmem:[%s614 + $0x8] sm:$0x1]
        %v625 = vsel %vm623, %v310, %v624
        %626 = vst [vmem:[%s614 + $0x8] sm:$0x1] %v625
        %v627 = vld [vmem:[%s614 + $0xc] sm:$0xf]
        %v628 = vsel %vm617, %v317, %v627
        %629 = vst [vmem:[%s614 + $0xc] sm:$0xf] %v628
        %630 = vst [vmem:[%s614 + $0x10] sm:$0xf] %v326
        %v631 = vld [vmem:[%s614 + $0x14] sm:$0x1]
        %v632 = vsel %vm623, %v327, %v631
        %633 = vst [vmem:[%s614 + $0x14] sm:$0x1] %v632
        %v634 = vld [vmem:[%s614 + $0x18] sm:$0xf]
        %v635 = vsel %vm617, %v334, %v634
        %636 = vst [vmem:[%s614 + $0x18] sm:$0xf] %v635
        %637 = vst [vmem:[%s614 + $0x1c] sm:$0xf] %v343
        %v638 = vld [vmem:[%s614 + $0x20] sm:$0x1]
        %v639 = vsel %vm623, %v344, %v638
        %640 = vst [vmem:[%s614 + $0x20] sm:$0x1] %v639
        %v641 = vld [vmem:[%s614 + $0x24] sm:$0xf]
        %v642 = vsel %vm617, %v351, %v641
        %643 = vst [vmem:[%s614 + $0x24] sm:$0xf] %v642
        %644 = vst [vmem:[%s614 + $0x28] sm:$0xf] %v360
        %v645 = vld [vmem:[%s614 + $0x2c] sm:$0x1]
        %v646 = vsel %vm623, %v361, %v645
        %647 = vst [vmem:[%s614 + $0x2c] sm:$0x1] %v646
        %v648 = vld [vmem:[%s614 + $0x30] sm:$0xf]
        %v649 = vsel %vm617, %v368, %v648
        %650 = vst [vmem:[%s614 + $0x30] sm:$0xf] %v649
        %651 = vst [vmem:[%s614 + $0x34] sm:$0xf] %v377
        %v652 = vld [vmem:[%s614 + $0x38] sm:$0x1]
        %v653 = vsel %vm623, %v378, %v652
        %654 = vst [vmem:[%s614 + $0x38] sm:$0x1] %v653
        %v655 = vld [vmem:[%s614 + $0x3c] sm:$0xf]
        %v656 = vsel %vm617, %v385, %v655
        %657 = vst [vmem:[%s614 + $0x3c] sm:$0xf] %v656
        %658 = vst [vmem:[%s614 + $0x40] sm:$0xf] %v394
        %v659 = vld [vmem:[%s614 + $0x44] sm:$0x1]
        %v660 = vsel %vm623, %v395, %v659
        %661 = vst [vmem:[%s614 + $0x44] sm:$0x1] %v660
        %v662 = vld [vmem:[%s614 + $0x48] sm:$0xf]
        %v663 = vsel %vm617, %v402, %v662
        %664 = vst [vmem:[%s614 + $0x48] sm:$0xf] %v663
        %665 = vst [vmem:[%s614 + $0x4c] sm:$0xf] %v411
        %v666 = vld [vmem:[%s614 + $0x50] sm:$0x1]
        %v667 = vsel %vm623, %v412, %v666
        %668 = vst [vmem:[%s614 + $0x50] sm:$0x1] %v667
        %v669 = vld [vmem:[%s614 + $0x54] sm:$0xf]
        %v670 = vsel %vm617, %v419, %v669
        %671 = vst [vmem:[%s614 + $0x54] sm:$0xf] %v670
        %672 = vst [vmem:[%s614 + $0x58] sm:$0xf] %v428
        %v673 = vld [vmem:[%s614 + $0x5c] sm:$0x1]
        %v674 = vsel %vm623, %v429, %v673
        %675 = vst [vmem:[%s614 + $0x5c] sm:$0x1] %v674
        %v676 = vld [vmem:[%s614 + $0x60] sm:$0xf]
        %v677 = vsel %vm617, %v436, %v676
        %678 = vst [vmem:[%s614 + $0x60] sm:$0xf] %v677
        %679 = vst [vmem:[%s614 + $0x64] sm:$0xf] %v445
        %v680 = vld [vmem:[%s614 + $0x68] sm:$0x1]
        %v681 = vsel %vm623, %v446, %v680
        %682 = vst [vmem:[%s614 + $0x68] sm:$0x1] %v681
        %v683 = vld [vmem:[%s614 + $0x6c] sm:$0xf]
        %v684 = vsel %vm617, %v453, %v683
        %685 = vst [vmem:[%s614 + $0x6c] sm:$0xf] %v684
        %686 = vst [vmem:[%s614 + $0x70] sm:$0xf] %v462
        %v687 = vld [vmem:[%s614 + $0x74] sm:$0x1]
        %v688 = vsel %vm623, %v463, %v687
        %689 = vst [vmem:[%s614 + $0x74] sm:$0x1] %v688
        %v690 = vld [vmem:[%s614 + $0x78] sm:$0xf]
        %v691 = vsel %vm617, %v470, %v690
        %692 = vst [vmem:[%s614 + $0x78] sm:$0xf] %v691
        %693 = vst [vmem:[%s614 + $0x7c] sm:$0xf] %v479
        %v694 = vld [vmem:[%s614 + $0x80] sm:$0x1]
        %v695 = vsel %vm623, %v480, %v694
        %696 = vst [vmem:[%s614 + $0x80] sm:$0x1] %v695
        %v697 = vld [vmem:[%s614 + $0x84] sm:$0xf]
        %v698 = vsel %vm617, %v487, %v697
        %699 = vst [vmem:[%s614 + $0x84] sm:$0xf] %v698
        %700 = vst [vmem:[%s614 + $0x88] sm:$0xf] %v496
        %v701 = vld [vmem:[%s614 + $0x8c] sm:$0x1]
        %v702 = vsel %vm623, %v497, %v701
        %703 = vst [vmem:[%s614 + $0x8c] sm:$0x1] %v702
        %v704 = vld [vmem:[%s614 + $0x90] sm:$0xf]
        %v705 = vsel %vm617, %v504, %v704
        %706 = vst [vmem:[%s614 + $0x90] sm:$0xf] %v705
        %707 = vst [vmem:[%s614 + $0x94] sm:$0xf] %v513
        %v708 = vld [vmem:[%s614 + $0x98] sm:$0x1]
        %v709 = vsel %vm623, %v514, %v708
        %710 = vst [vmem:[%s614 + $0x98] sm:$0x1] %v709
        %v711 = vld [vmem:[%s614 + $0x9c] sm:$0xf]
        %v712 = vsel %vm617, %v521, %v711
        %713 = vst [vmem:[%s614 + $0x9c] sm:$0xf] %v712
        %714 = vst [vmem:[%s614 + $0xa0] sm:$0xf] %v530
        %v715 = vld [vmem:[%s614 + $0xa4] sm:$0x1]
        %v716 = vsel %vm623, %v531, %v715
        %717 = vst [vmem:[%s614 + $0xa4] sm:$0x1] %v716
        %v718 = vld [vmem:[%s614 + $0xa8] sm:$0xf]
        %v719 = vsel %vm617, %v538, %v718
        %720 = vst [vmem:[%s614 + $0xa8] sm:$0xf] %v719
        %721 = vst [vmem:[%s614 + $0xac] sm:$0xf] %v547
        %v722 = vld [vmem:[%s614 + $0xb0] sm:$0x1]
        %v723 = vsel %vm623, %v548, %v722
        %724 = vst [vmem:[%s614 + $0xb0] sm:$0x1] %v723
        %v725 = vld [vmem:[%s614 + $0xb4] sm:$0xf]
        %v726 = vsel %vm617, %v555, %v725
        %727 = vst [vmem:[%s614 + $0xb4] sm:$0xf] %v726
        %728 = vst [vmem:[%s614 + $0xb8] sm:$0xf] %v564
        %v729 = vld [vmem:[%s614 + $0xbc] sm:$0x1]
        %v730 = vsel %vm623, %v565, %v729
        %731 = vst [vmem:[%s614 + $0xbc] sm:$0x1] %v730
        %v732 = vld [vmem:[%s2] sm:$0x1]
        %v733 = vld [vmem:[#allocation2] sm:$0xf]
        %v734 = vld [vmem:[#allocation2 + $0x4] sm:$0xf]
        %v735 = vld [vmem:[#allocation2 + $0xc] sm:$0xf]
        %v736 = vld [vmem:[#allocation2 + $0x10] sm:$0xf]
        %v737 = vld [vmem:[#allocation2 + $0x18] sm:$0xf]
        %v738 = vld [vmem:[#allocation2 + $0x1c] sm:$0xf]
        %v739 = vld [vmem:[#allocation2 + $0x24] sm:$0xf]
        %v740 = vld [vmem:[#allocation2 + $0x28] sm:$0xf]
        %v741 = vld [vmem:[#allocation2 + $0x30] sm:$0xf]
        %v742 = vld [vmem:[#allocation2 + $0x34] sm:$0xf]
        %v743 = vld [vmem:[#allocation2 + $0x3c] sm:$0xf]
        %v744 = vld [vmem:[#allocation2 + $0x40] sm:$0xf]
        %v745 = vld [vmem:[#allocation2 + $0x48] sm:$0xf]
        %v746 = vld [vmem:[#allocation2 + $0x4c] sm:$0xf]
        %v747 = vld [vmem:[#allocation2 + $0x54] sm:$0xf]
        %v748 = vld [vmem:[#allocation2 + $0x58] sm:$0xf]
        %v749 = vld [vmem:[#allocation2 + $0x60] sm:$0xf]
        %v750 = vld [vmem:[#allocation2 + $0x64] sm:$0xf]
        %v751 = vld [vmem:[#allocation2 + $0x6c] sm:$0xf]
        %v752 = vld [vmem:[#allocation2 + $0x70] sm:$0xf]
        %v753 = vld [vmem:[#allocation2 + $0x78] sm:$0xf]
        %v754 = vld [vmem:[#allocation2 + $0x7c] sm:$0xf]
        %v755 = vld [vmem:[#allocation2 + $0x84] sm:$0xf]
        %v756 = vld [vmem:[#allocation2 + $0x88] sm:$0xf]
        %v757 = vld [vmem:[#allocation2 + $0x90] sm:$0xf]
        %v758 = vld [vmem:[#allocation2 + $0x94] sm:$0xf]
        %v759 = vld [vmem:[#allocation2 + $0x9c] sm:$0xf]
        %v760 = vld [vmem:[#allocation2 + $0xa0] sm:$0xf]
        %v761 = vld [vmem:[#allocation2 + $0xa8] sm:$0xf]
        %v762 = vld [vmem:[#allocation2 + $0xac] sm:$0xf]
        %v763 = vld [vmem:[#allocation2 + $0xb4] sm:$0xf]
        %v764 = vld [vmem:[#allocation2 + $0xb8] sm:$0xf]
        %v765 = vld [vmem:[#allocation6] sm:$0xf]
        %v766 = vld [vmem:[#allocation6 + $0x40] sm:$0xf]
        %v767 = vld [vmem:[#allocation6 + $0x80] sm:$0xf]
        %v768 = vld [vmem:[#allocation6 + $0xc0] sm:$0xf]
        %v769 = vld [vmem:[#allocation6 + $0x100] sm:$0xf]
        %v770 = vld [vmem:[#allocation6 + $0x140] sm:$0xf]
        %v771 = vld [vmem:[#allocation6 + $0x180] sm:$0xf]
        %v772 = vld [vmem:[#allocation6 + $0x1c0] sm:$0xf]
        %v773 = vld [vmem:[#allocation6 + $0x200] sm:$0xf]
        %v774 = vld [vmem:[#allocation6 + $0x240] sm:$0xf]
        %v775 = vld [vmem:[#allocation6 + $0x280] sm:$0xf]
        %v776 = vld [vmem:[#allocation6 + $0x2c0] sm:$0xf]
        %v777 = vld [vmem:[#allocation6 + $0x300] sm:$0xf]
        %v778 = vld [vmem:[#allocation6 + $0x340] sm:$0xf]
        %v779 = vld [vmem:[#allocation6 + $0x380] sm:$0xf]
        %v780 = vld [vmem:[#allocation6 + $0x3c0] sm:$0xf]
        %v781 = vld [vmem:[#allocation2 + $0x8] sm:$0x1]
        %v782 = vld [vmem:[#allocation2 + $0x14] sm:$0x1]
        %v783 = vld [vmem:[#allocation2 + $0x20] sm:$0x1]
        %v784 = vld [vmem:[#allocation2 + $0x2c] sm:$0x1]
        %v785 = vld [vmem:[#allocation2 + $0x38] sm:$0x1]
        %v786 = vld [vmem:[#allocation2 + $0x44] sm:$0x1]
        %v787 = vld [vmem:[#allocation2 + $0x50] sm:$0x1]
        %v788 = vld [vmem:[#allocation2 + $0x5c] sm:$0x1]
        %v789 = vld [vmem:[#allocation2 + $0x68] sm:$0x1]
        %v790 = vld [vmem:[#allocation2 + $0x74] sm:$0x1]
        %v791 = vld [vmem:[#allocation2 + $0x80] sm:$0x1]
        %v792 = vld [vmem:[#allocation2 + $0x8c] sm:$0x1]
        %v793 = vld [vmem:[#allocation2 + $0x98] sm:$0x1]
        %v794 = vld [vmem:[#allocation2 + $0xa4] sm:$0x1]
        %v795 = vld [vmem:[#allocation2 + $0xb0] sm:$0x1]
        %v796 = vld [vmem:[#allocation2 + $0xbc] sm:$0x1]
        %vm797 = vsmask.f32 3328
        %vm798 = vsmask.f32 7440
        %vm799 = vmor %vm797, %vm798
        %v801 = vshrl.u32 %v733, 16
        %v803 = vrot.slane %v801, 4
        %v804 = vshll.u32 %v733, 16
        %v806 = vrot.slane %v804, 5
        %v807 = vor.u32 %v803, %v806
        %v808 = vrot.slane %v807, 4
        %v810 = vshll.u32 %v734, 16
        %v812 = vrot.slane %v810, 5
        %v813 = vsel %vm799, %v808, %v812
        %v814 = vshrl.u32 %v734, 16
        %v816 = vrot.slane %v814, 4
        %v817 = vor.u32 %v816, %v812
        %v818 = vrot.slane %v817, 4
        %v820 = vshll.u32 %v781, 16
        %v822 = vrot.slane %v820, 5
        %v823 = vsel %vm799, %v818, %v822
        %v825 = vshrl.u32 %v735, 16
        %v827 = vrot.slane %v825, 4
        %v828 = vshll.u32 %v735, 16
        %v830 = vrot.slane %v828, 5
        %v831 = vor.u32 %v827, %v830
        %v832 = vrot.slane %v831, 4
        %v834 = vshll.u32 %v736, 16
        %v836 = vrot.slane %v834, 5
        %v837 = vsel %vm799, %v832, %v836
        %v838 = vshrl.u32 %v736, 16
        %v840 = vrot.slane %v838, 4
        %v841 = vor.u32 %v840, %v836
        %v842 = vrot.slane %v841, 4
        %v844 = vshll.u32 %v782, 16
        %v846 = vrot.slane %v844, 5
        %v847 = vsel %vm799, %v842, %v846
        %v849 = vshrl.u32 %v737, 16
        %v851 = vrot.slane %v849, 4
        %v852 = vshll.u32 %v737, 16
        %v854 = vrot.slane %v852, 5
        %v855 = vor.u32 %v851, %v854
        %v856 = vrot.slane %v855, 4
        %v858 = vshll.u32 %v738, 16
        %v860 = vrot.slane %v858, 5
        %v861 = vsel %vm799, %v856, %v860
        %v862 = vshrl.u32 %v738, 16
        %v864 = vrot.slane %v862, 4
        %v865 = vor.u32 %v864, %v860
        %v866 = vrot.slane %v865, 4
        %v868 = vshll.u32 %v783, 16
        %v870 = vrot.slane %v868, 5
        %v871 = vsel %vm799, %v866, %v870
        %v873 = vshrl.u32 %v739, 16
        %v875 = vrot.slane %v873, 4
        %v876 = vshll.u32 %v739, 16
        %v878 = vrot.slane %v876, 5
        %v879 = vor.u32 %v875, %v878
        %v880 = vrot.slane %v879, 4
        %v882 = vshll.u32 %v740, 16
        %v884 = vrot.slane %v882, 5
        %v885 = vsel %vm799, %v880, %v884
        %v886 = vshrl.u32 %v740, 16
        %v888 = vrot.slane %v886, 4
        %v889 = vor.u32 %v888, %v884
        %v890 = vrot.slane %v889, 4
        %v892 = vshll.u32 %v784, 16
        %v894 = vrot.slane %v892, 5
        %v895 = vsel %vm799, %v890, %v894
        %v897 = vshrl.u32 %v741, 16
        %v899 = vrot.slane %v897, 4
        %v900 = vshll.u32 %v741, 16
        %v902 = vrot.slane %v900, 5
        %v903 = vor.u32 %v899, %v902
        %v904 = vrot.slane %v903, 4
        %v906 = vshll.u32 %v742, 16
        %v908 = vrot.slane %v906, 5
        %v909 = vsel %vm799, %v904, %v908
        %v910 = vshrl.u32 %v742, 16
        %v912 = vrot.slane %v910, 4
        %v913 = vor.u32 %v912, %v908
        %v914 = vrot.slane %v913, 4
        %v916 = vshll.u32 %v785, 16
        %v918 = vrot.slane %v916, 5
        %v919 = vsel %vm799, %v914, %v918
        %v921 = vshrl.u32 %v743, 16
        %v923 = vrot.slane %v921, 4
        %v924 = vshll.u32 %v743, 16
        %v926 = vrot.slane %v924, 5
        %v927 = vor.u32 %v923, %v926
        %v928 = vrot.slane %v927, 4
        %v930 = vshll.u32 %v744, 16
        %v932 = vrot.slane %v930, 5
        %v933 = vsel %vm799, %v928, %v932
        %v934 = vshrl.u32 %v744, 16
        %v936 = vrot.slane %v934, 4
        %v937 = vor.u32 %v936, %v932
        %v938 = vrot.slane %v937, 4
        %v940 = vshll.u32 %v786, 16
        %v942 = vrot.slane %v940, 5
        %v943 = vsel %vm799, %v938, %v942
        %v945 = vshrl.u32 %v745, 16
        %v947 = vrot.slane %v945, 4
        %v948 = vshll.u32 %v745, 16
        %v950 = vrot.slane %v948, 5
        %v951 = vor.u32 %v947, %v950
        %v952 = vrot.slane %v951, 4
        %v954 = vshll.u32 %v746, 16
        %v956 = vrot.slane %v954, 5
        %v957 = vsel %vm799, %v952, %v956
        %v958 = vshrl.u32 %v746, 16
        %v960 = vrot.slane %v958, 4
        %v961 = vor.u32 %v960, %v956
        %v962 = vrot.slane %v961, 4
        %v964 = vshll.u32 %v787, 16
        %v966 = vrot.slane %v964, 5
        %v967 = vsel %vm799, %v962, %v966
        %v969 = vshrl.u32 %v747, 16
        %v971 = vrot.slane %v969, 4
        %v972 = vshll.u32 %v747, 16
        %v974 = vrot.slane %v972, 5
        %v975 = vor.u32 %v971, %v974
        %v976 = vrot.slane %v975, 4
        %v978 = vshll.u32 %v748, 16
        %v980 = vrot.slane %v978, 5
        %v981 = vsel %vm799, %v976, %v980
        %v982 = vshrl.u32 %v748, 16
        %v984 = vrot.slane %v982, 4
        %v985 = vor.u32 %v984, %v980
        %v986 = vrot.slane %v985, 4
        %v988 = vshll.u32 %v788, 16
        %v990 = vrot.slane %v988, 5
        %v991 = vsel %vm799, %v986, %v990
        %v993 = vshrl.u32 %v749, 16
        %v995 = vrot.slane %v993, 4
        %v996 = vshll.u32 %v749, 16
        %v998 = vrot.slane %v996, 5
        %v999 = vor.u32 %v995, %v998
        %v1000 = vrot.slane %v999, 4
        %v1002 = vshll.u32 %v750, 16
        %v1004 = vrot.slane %v1002, 5
        %v1005 = vsel %vm799, %v1000, %v1004
        %v1006 = vshrl.u32 %v750, 16
        %v1008 = vrot.slane %v1006, 4
        %v1009 = vor.u32 %v1008, %v1004
        %v1010 = vrot.slane %v1009, 4
        %v1012 = vshll.u32 %v789, 16
        %v1014 = vrot.slane %v1012, 5
        %v1015 = vsel %vm799, %v1010, %v1014
        %v1017 = vshrl.u32 %v751, 16
        %v1019 = vrot.slane %v1017, 4
        %v1020 = vshll.u32 %v751, 16
        %v1022 = vrot.slane %v1020, 5
        %v1023 = vor.u32 %v1019, %v1022
        %v1024 = vrot.slane %v1023, 4
        %v1026 = vshll.u32 %v752, 16
        %v1028 = vrot.slane %v1026, 5
        %v1029 = vsel %vm799, %v1024, %v1028
        %v1030 = vshrl.u32 %v752, 16
        %v1032 = vrot.slane %v1030, 4
        %v1033 = vor.u32 %v1032, %v1028
        %v1034 = vrot.slane %v1033, 4
        %v1036 = vshll.u32 %v790, 16
        %v1038 = vrot.slane %v1036, 5
        %v1039 = vsel %vm799, %v1034, %v1038
        %v1041 = vshrl.u32 %v753, 16
        %v1043 = vrot.slane %v1041, 4
        %v1044 = vshll.u32 %v753, 16
        %v1046 = vrot.slane %v1044, 5
        %v1047 = vor.u32 %v1043, %v1046
        %v1048 = vrot.slane %v1047, 4
        %v1050 = vshll.u32 %v754, 16
        %v1052 = vrot.slane %v1050, 5
        %v1053 = vsel %vm799, %v1048, %v1052
        %v1054 = vshrl.u32 %v754, 16
        %v1056 = vrot.slane %v1054, 4
        %v1057 = vor.u32 %v1056, %v1052
        %v1058 = vrot.slane %v1057, 4
        %v1060 = vshll.u32 %v791, 16
        %v1062 = vrot.slane %v1060, 5
        %v1063 = vsel %vm799, %v1058, %v1062
        %v1065 = vshrl.u32 %v755, 16
        %v1067 = vrot.slane %v1065, 4
        %v1068 = vshll.u32 %v755, 16
        %v1070 = vrot.slane %v1068, 5
        %v1071 = vor.u32 %v1067, %v1070
        %v1072 = vrot.slane %v1071, 4
        %v1074 = vshll.u32 %v756, 16
        %v1076 = vrot.slane %v1074, 5
        %v1077 = vsel %vm799, %v1072, %v1076
        %v1078 = vshrl.u32 %v756, 16
        %v1080 = vrot.slane %v1078, 4
        %v1081 = vor.u32 %v1080, %v1076
        %v1082 = vrot.slane %v1081, 4
        %v1084 = vshll.u32 %v792, 16
        %v1086 = vrot.slane %v1084, 5
        %v1087 = vsel %vm799, %v1082, %v1086
        %v1089 = vshrl.u32 %v757, 16
        %v1091 = vrot.slane %v1089, 4
        %v1092 = vshll.u32 %v757, 16
        %v1094 = vrot.slane %v1092, 5
        %v1095 = vor.u32 %v1091, %v1094
        %v1096 = vrot.slane %v1095, 4
        %v1098 = vshll.u32 %v758, 16
        %v1100 = vrot.slane %v1098, 5
        %v1101 = vsel %vm799, %v1096, %v1100
        %v1102 = vshrl.u32 %v758, 16
        %v1104 = vrot.slane %v1102, 4
        %v1105 = vor.u32 %v1104, %v1100
        %v1106 = vrot.slane %v1105, 4
        %v1108 = vshll.u32 %v793, 16
        %v1110 = vrot.slane %v1108, 5
        %v1111 = vsel %vm799, %v1106, %v1110
        %v1113 = vshrl.u32 %v759, 16
        %v1115 = vrot.slane %v1113, 4
        %v1116 = vshll.u32 %v759, 16
        %v1118 = vrot.slane %v1116, 5
        %v1119 = vor.u32 %v1115, %v1118
        %v1120 = vrot.slane %v1119, 4
        %v1122 = vshll.u32 %v760, 16
        %v1124 = vrot.slane %v1122, 5
        %v1125 = vsel %vm799, %v1120, %v1124
        %v1126 = vshrl.u32 %v760, 16
        %v1128 = vrot.slane %v1126, 4
        %v1129 = vor.u32 %v1128, %v1124
        %v1130 = vrot.slane %v1129, 4
        %v1132 = vshll.u32 %v794, 16
        %v1134 = vrot.slane %v1132, 5
        %v1135 = vsel %vm799, %v1130, %v1134
        %v1137 = vshrl.u32 %v761, 16
        %v1139 = vrot.slane %v1137, 4
        %v1140 = vshll.u32 %v761, 16
        %v1142 = vrot.slane %v1140, 5
        %v1143 = vor.u32 %v1139, %v1142
        %v1144 = vrot.slane %v1143, 4
        %v1146 = vshll.u32 %v762, 16
        %v1148 = vrot.slane %v1146, 5
        %v1149 = vsel %vm799, %v1144, %v1148
        %v1150 = vshrl.u32 %v762, 16
        %v1152 = vrot.slane %v1150, 4
        %v1153 = vor.u32 %v1152, %v1148
        %v1154 = vrot.slane %v1153, 4
        %v1156 = vshll.u32 %v795, 16
        %v1158 = vrot.slane %v1156, 5
        %v1159 = vsel %vm799, %v1154, %v1158
        %v1161 = vshrl.u32 %v763, 16
        %v1163 = vrot.slane %v1161, 4
        %v1164 = vshll.u32 %v763, 16
        %v1166 = vrot.slane %v1164, 5
        %v1167 = vor.u32 %v1163, %v1166
        %v1168 = vrot.slane %v1167, 4
        %v1170 = vshll.u32 %v764, 16
        %v1172 = vrot.slane %v1170, 5
        %v1173 = vsel %vm799, %v1168, %v1172
        %v1174 = vshrl.u32 %v764, 16
        %v1176 = vrot.slane %v1174, 4
        %v1177 = vor.u32 %v1176, %v1172
        %v1178 = vrot.slane %v1177, 4
        %v1180 = vshll.u32 %v796, 16
        %v1182 = vrot.slane %v1180, 5
        %v1183 = vsel %vm799, %v1178, %v1182
        %v1184 = vld [vmem:[#allocation6 + $0x4] sm:$0xff]
        %v1185 = vld [vmem:[#allocation6 + $0x44] sm:$0xff]
        %v1186 = vld [vmem:[#allocation6 + $0x84] sm:$0xff]
        %v1187 = vld [vmem:[#allocation6 + $0xc4] sm:$0xff]
        %v1188 = vld [vmem:[#allocation6 + $0x104] sm:$0xff]
        %v1189 = vld [vmem:[#allocation6 + $0x144] sm:$0xff]
        %v1190 = vld [vmem:[#allocation6 + $0x184] sm:$0xff]
        %v1191 = vld [vmem:[#allocation6 + $0x1c4] sm:$0xff]
        %v1192 = vld [vmem:[#allocation6 + $0x204] sm:$0xff]
        %v1193 = vld [vmem:[#allocation6 + $0x244] sm:$0xff]
        %v1194 = vld [vmem:[#allocation6 + $0x284] sm:$0xff]
        %v1195 = vld [vmem:[#allocation6 + $0x2c4] sm:$0xff]
        %v1196 = vld [vmem:[#allocation6 + $0x304] sm:$0xff]
        %v1197 = vld [vmem:[#allocation6 + $0x344] sm:$0xff]
        %v1198 = vld [vmem:[#allocation6 + $0x384] sm:$0xff]
        %v1199 = vld [vmem:[#allocation6 + $0x3c4] sm:$0xff]
        %v1200 = vunpack.c.l.b16 %v813
        %v1201 = vunpack.c.l.b16 %v823
        %v1202 = vunpack.c.l.b16 %v837
        %v1203 = vunpack.c.l.b16 %v847
        %v1204 = vunpack.c.l.b16 %v861
        %v1205 = vunpack.c.l.b16 %v871
        %v1206 = vunpack.c.l.b16 %v885
        %v1207 = vunpack.c.l.b16 %v895
        %v1208 = vunpack.c.l.b16 %v909
        %v1209 = vunpack.c.l.b16 %v919
        %v1210 = vunpack.c.l.b16 %v933
        %v1211 = vunpack.c.l.b16 %v943
        %v1212 = vunpack.c.l.b16 %v957
        %v1213 = vunpack.c.l.b16 %v967
        %v1214 = vunpack.c.l.b16 %v981
        %v1215 = vunpack.c.l.b16 %v991
        %v1216 = vunpack.c.l.b16 %v1005
        %v1217 = vunpack.c.l.b16 %v1015
        %v1218 = vunpack.c.l.b16 %v1029
        %v1219 = vunpack.c.l.b16 %v1039
        %v1220 = vunpack.c.l.b16 %v1053
        %v1221 = vunpack.c.l.b16 %v1063
        %v1222 = vunpack.c.l.b16 %v1077
        %v1223 = vunpack.c.l.b16 %v1087
        %v1224 = vunpack.c.l.b16 %v1101
        %v1225 = vunpack.c.l.b16 %v1111
        %v1226 = vunpack.c.l.b16 %v1125
        %v1227 = vunpack.c.l.b16 %v1135
        %v1228 = vunpack.c.l.b16 %v1149
        %v1229 = vunpack.c.l.b16 %v1159
        %v1230 = vunpack.c.l.b16 %v1173
        %v1231 = vunpack.c.l.b16 %v1183
        %v1232 = vpack.c.b16 %v1201, %v1200
        %v1233 = vpack.c.b16 %v1203, %v1202
        %v1234 = vpack.c.b16 %v1205, %v1204
        %v1235 = vpack.c.b16 %v1207, %v1206
        %v1236 = vpack.c.b16 %v1209, %v1208
        %v1237 = vpack.c.b16 %v1211, %v1210
        %v1238 = vpack.c.b16 %v1213, %v1212
        %v1239 = vpack.c.b16 %v1215, %v1214
        %v1240 = vpack.c.b16 %v1217, %v1216
        %v1241 = vpack.c.b16 %v1219, %v1218
        %v1242 = vpack.c.b16 %v1221, %v1220
        %v1243 = vpack.c.b16 %v1223, %v1222
        %v1244 = vpack.c.b16 %v1225, %v1224
        %v1245 = vpack.c.b16 %v1227, %v1226
        %v1246 = vpack.c.b16 %v1229, %v1228
        %v1247 = vpack.c.b16 %v1231, %v1230
        %v1280 = vunpack.c.l.b16 %v1184
        %v1281 = vunpack.c.h.b16 %v1184
        %v1282 = vunpack.c.l.b16 %v1185
        %v1283 = vunpack.c.h.b16 %v1185
        %v1284 = vunpack.c.l.b16 %v1186
        %v1285 = vunpack.c.h.b16 %v1186
        %v1286 = vunpack.c.l.b16 %v1187
        %v1287 = vunpack.c.h.b16 %v1187
        %v1288 = vunpack.c.l.b16 %v1188
        %v1289 = vunpack.c.h.b16 %v1188
        %v1290 = vunpack.c.l.b16 %v1189
        %v1291 = vunpack.c.h.b16 %v1189
        %v1292 = vunpack.c.l.b16 %v1190
        %v1293 = vunpack.c.h.b16 %v1190
        %v1294 = vunpack.c.l.b16 %v1191
        %v1295 = vunpack.c.h.b16 %v1191
        %v1296 = vunpack.c.l.b16 %v1192
        %v1297 = vunpack.c.h.b16 %v1192
        %v1298 = vunpack.c.l.b16 %v1193
        %v1299 = vunpack.c.h.b16 %v1193
        %v1300 = vunpack.c.l.b16 %v1194
        %v1301 = vunpack.c.h.b16 %v1194
        %v1302 = vunpack.c.l.b16 %v1195
        %v1303 = vunpack.c.h.b16 %v1195
        %v1304 = vunpack.c.l.b16 %v1196
        %v1305 = vunpack.c.h.b16 %v1196
        %v1306 = vunpack.c.l.b16 %v1197
        %v1307 = vunpack.c.h.b16 %v1197
        %v1308 = vunpack.c.l.b16 %v1198
        %v1309 = vunpack.c.h.b16 %v1198
        %v1310 = vunpack.c.l.b16 %v1199
        %v1311 = vunpack.c.h.b16 %v1199
        %v1312 = vpack.c.b16 %v1282, %v1280
        %v1313 = vpack.c.b16 %v1283, %v1281
        %v1314 = vpack.c.b16 %v1286, %v1284
        %v1315 = vpack.c.b16 %v1287, %v1285
        %v1316 = vpack.c.b16 %v1290, %v1288
        %v1317 = vpack.c.b16 %v1291, %v1289
        %v1318 = vpack.c.b16 %v1294, %v1292
        %v1319 = vpack.c.b16 %v1295, %v1293
        %v1320 = vpack.c.b16 %v1298, %v1296
        %v1321 = vpack.c.b16 %v1299, %v1297
        %v1322 = vpack.c.b16 %v1302, %v1300
        %v1323 = vpack.c.b16 %v1303, %v1301
        %v1324 = vpack.c.b16 %v1306, %v1304
        %v1325 = vpack.c.b16 %v1307, %v1305
        %v1326 = vpack.c.b16 %v1310, %v1308
        %v1327 = vpack.c.b16 %v1311, %v1309
        %1344 = vmatprep.subr.bf16.mxu0 %v1313
        %1345 = vmatpush1.bf16.msra.mxu0 %v1312
        %1346 = vmatprep.subr.bf16.mxu0 %v1315
        %1347 = vmatpush1.bf16.msra.mxu0 %v1314
        %1348 = vmatprep.subr.bf16.mxu0 %v1317
        %1349 = vmatpush1.bf16.msra.mxu0 %v1316
        %1350 = vmatprep.subr.bf16.mxu0 %v1319
        %1351 = vmatpush1.bf16.msra.mxu0 %v1318
        %1352 = vmatprep.subr.bf16.mxu0 %v1321
        %1353 = vmatpush1.bf16.msra.mxu0 %v1320
        %1354 = vmatprep.subr.bf16.mxu0 %v1323
        %1355 = vmatpush1.bf16.msra.mxu0 %v1322
        %1356 = vmatprep.subr.bf16.mxu0 %v1325
        %1357 = vmatpush1.bf16.msra.mxu0 %v1324
        %1358 = vmatprep.subr.bf16.mxu0 %v1327
        %1359 = vmatpush1.bf16.msra.mxu0 %v1326
        %1360 = vmatprep.subr.bf16.mxu0 0
        %1361 = vmatpush1.bf16.msra.mxu0 0
        %1362 = vmatprep.subr.bf16.mxu0 0
        %1363 = vmatpush1.bf16.msra.mxu0 0
        %1364 = vmatprep.subr.bf16.mxu0 0
        %1365 = vmatpush1.bf16.msra.mxu0 0
        %1366 = vmatprep.subr.bf16.mxu0 0
        %1367 = vmatpush1.bf16.msra.mxu0 0
        %1368 = vmatprep.subr.bf16.mxu0 0
        %1369 = vmatpush1.bf16.msra.mxu0 0
        %1370 = vmatprep.subr.bf16.mxu0 0
        %1371 = vmatpush1.bf16.msra.mxu0 0
        %1372 = vmatprep.subr.bf16.mxu0 0
        %1373 = vmatpush1.bf16.msra.mxu0 0
        %1374 = vmatprep.subr.bf16.mxu0 0
        %1375 = vmatpush1.bf16.msra.mxu0 0
        %1376 = vmatprep.mubr.bf16.mxu0 0
        %1377 = vmatmul.mubr.bf16.gmra.mrb[0].mxu0 %v1232
        %v1378 = vpop.f32.mrb[0].mxu0
        %v1379 = vadd.f32 0.0, %v1378
        %v1380 = vpop.f32.mrb[0].mxu0
        %v1381 = vadd.f32 0.0, %v1380
        %v1382 = vpop.f32.mrb[0].mxu0
        %v1383 = vadd.f32 0.0, %v1382
        %v1384 = vpop.f32.mrb[0].mxu0
        %v1385 = vadd.f32 0.0, %v1384
        %1386 = vmatprep.mubr.bf16.mxu0 0
        %1387 = vmatmul.mubr.bf16.gmra.mrb[0].mxu0 %v1233
        %v1388 = vpop.f32.mrb[0].mxu0
        %v1389 = vadd.f32 0.0, %v1388
        %v1390 = vpop.f32.mrb[0].mxu0
        %v1391 = vadd.f32 0.0, %v1390
        %v1392 = vpop.f32.mrb[0].mxu0
        %v1393 = vadd.f32 0.0, %v1392
        %v1394 = vpop.f32.mrb[0].mxu0
        %v1395 = vadd.f32 0.0, %v1394
        %1396 = vmatprep.mubr.bf16.mxu0 0
        %1397 = vmatmul.mubr.bf16.gmra.mrb[0].mxu0 %v1234
        %v1398 = vpop.f32.mrb[0].mxu0
        %v1399 = vadd.f32 0.0, %v1398
        %v1400 = vpop.f32.mrb[0].mxu0
        %v1401 = vadd.f32 0.0, %v1400
        %v1402 = vpop.f32.mrb[0].mxu0
        %v1403 = vadd.f32 0.0, %v1402
        %v1404 = vpop.f32.mrb[0].mxu0
        %v1405 = vadd.f32 0.0, %v1404
        %1406 = vmatprep.mubr.bf16.mxu0 0
        %1407 = vmatmul.mubr.bf16.gmra.mrb[0].mxu0 %v1235
        %v1408 = vpop.f32.mrb[0].mxu0
        %v1409 = vadd.f32 0.0, %v1408
        %v1410 = vpop.f32.mrb[0].mxu0
        %v1411 = vadd.f32 0.0, %v1410
        %v1412 = vpop.f32.mrb[0].mxu0
        %v1413 = vadd.f32 0.0, %v1412
        %v1414 = vpop.f32.mrb[0].mxu0
        %v1415 = vadd.f32 0.0, %v1414
        %1416 = vmatprep.mubr.bf16.mxu0 0
        %1417 = vmatmul.mubr.bf16.gmra.mrb[0].mxu0 %v1236
        %v1418 = vpop.f32.mrb[0].mxu0
        %v1419 = vadd.f32 0.0, %v1418
        %v1420 = vpop.f32.mrb[0].mxu0
        %v1421 = vadd.f32 0.0, %v1420
        %v1422 = vpop.f32.mrb[0].mxu0
        %v1423 = vadd.f32 0.0, %v1422
        %v1424 = vpop.f32.mrb[0].mxu0
        %v1425 = vadd.f32 0.0, %v1424
        %1426 = vmatprep.mubr.bf16.mxu0 0
        %1427 = vmatmul.mubr.bf16.gmra.mrb[0].mxu0 %v1237
        %v1428 = vpop.f32.mrb[0].mxu0
        %v1429 = vadd.f32 0.0, %v1428
        %v1430 = vpop.f32.mrb[0].mxu0
        %v1431 = vadd.f32 0.0, %v1430
        %v1432 = vpop.f32.mrb[0].mxu0
        %v1433 = vadd.f32 0.0, %v1432
        %v1434 = vpop.f32.mrb[0].mxu0
        %v1435 = vadd.f32 0.0, %v1434
        %1436 = vmatprep.mubr.bf16.mxu0 0
        %1437 = vmatmul.mubr.bf16.gmra.mrb[0].mxu0 %v1238
        %v1438 = vpop.f32.mrb[0].mxu0
        %v1439 = vadd.f32 0.0, %v1438
        %v1440 = vpop.f32.mrb[0].mxu0
        %v1441 = vadd.f32 0.0, %v1440
        %v1442 = vpop.f32.mrb[0].mxu0
        %v1443 = vadd.f32 0.0, %v1442
        %v1444 = vpop.f32.mrb[0].mxu0
        %v1445 = vadd.f32 0.0, %v1444
        %1446 = vmatprep.mubr.bf16.mxu0 0
        %1447 = vmatmul.mubr.bf16.gmra.mrb[0].mxu0 %v1239
        %v1448 = vpop.f32.mrb[0].mxu0
        %v1449 = vadd.f32 0.0, %v1448
        %v1450 = vpop.f32.mrb[0].mxu0
        %v1451 = vadd.f32 0.0, %v1450
        %v1452 = vpop.f32.mrb[0].mxu0
        %v1453 = vadd.f32 0.0, %v1452
        %v1454 = vpop.f32.mrb[0].mxu0
        %v1455 = vadd.f32 0.0, %v1454
        %1456 = vmatprep.mubr.bf16.mxu0 0
        %1457 = vmatmul.mubr.bf16.gmra.mrb[0].mxu0 %v1240
        %v1458 = vpop.f32.mrb[0].mxu0
        %v1459 = vadd.f32 0.0, %v1458
        %v1460 = vpop.f32.mrb[0].mxu0
        %v1461 = vadd.f32 0.0, %v1460
        %v1462 = vpop.f32.mrb[0].mxu0
        %v1463 = vadd.f32 0.0, %v1462
        %v1464 = vpop.f32.mrb[0].mxu0
        %v1465 = vadd.f32 0.0, %v1464
        %1466 = vmatprep.mubr.bf16.mxu0 0
        %1467 = vmatmul.mubr.bf16.gmra.mrb[0].mxu0 %v1241
        %v1468 = vpop.f32.mrb[0].mxu0
        %v1469 = vadd.f32 0.0, %v1468
        %v1470 = vpop.f32.mrb[0].mxu0
        %v1471 = vadd.f32 0.0, %v1470
        %v1472 = vpop.f32.mrb[0].mxu0
        %v1473 = vadd.f32 0.0, %v1472
        %v1474 = vpop.f32.mrb[0].mxu0
        %v1475 = vadd.f32 0.0, %v1474
        %1476 = vmatprep.mubr.bf16.mxu0 0
        %1477 = vmatmul.mubr.bf16.gmra.mrb[0].mxu0 %v1242
        %v1478 = vpop.f32.mrb[0].mxu0
        %v1479 = vadd.f32 0.0, %v1478
        %v1480 = vpop.f32.mrb[0].mxu0
        %v1481 = vadd.f32 0.0, %v1480
        %v1482 = vpop.f32.mrb[0].mxu0
        %v1483 = vadd.f32 0.0, %v1482
        %v1484 = vpop.f32.mrb[0].mxu0
        %v1485 = vadd.f32 0.0, %v1484
        %1486 = vmatprep.mubr.bf16.mxu0 0
        %1487 = vmatmul.mubr.bf16.gmra.mrb[0].mxu0 %v1243
        %v1488 = vpop.f32.mrb[0].mxu0
        %v1489 = vadd.f32 0.0, %v1488
        %v1490 = vpop.f32.mrb[0].mxu0
        %v1491 = vadd.f32 0.0, %v1490
        %v1492 = vpop.f32.mrb[0].mxu0
        %v1493 = vadd.f32 0.0, %v1492
        %v1494 = vpop.f32.mrb[0].mxu0
        %v1495 = vadd.f32 0.0, %v1494
        %1496 = vmatprep.mubr.bf16.mxu0 0
        %1497 = vmatmul.mubr.bf16.gmra.mrb[0].mxu0 %v1244
        %v1498 = vpop.f32.mrb[0].mxu0
        %v1499 = vadd.f32 0.0, %v1498
        %v1500 = vpop.f32.mrb[0].mxu0
        %v1501 = vadd.f32 0.0, %v1500
        %v1502 = vpop.f32.mrb[0].mxu0
        %v1503 = vadd.f32 0.0, %v1502
        %v1504 = vpop.f32.mrb[0].mxu0
        %v1505 = vadd.f32 0.0, %v1504
        %1506 = vmatprep.mubr.bf16.mxu0 0
        %1507 = vmatmul.mubr.bf16.gmra.mrb[0].mxu0 %v1245
        %v1508 = vpop.f32.mrb[0].mxu0
        %v1509 = vadd.f32 0.0, %v1508
        %v1510 = vpop.f32.mrb[0].mxu0
        %v1511 = vadd.f32 0.0, %v1510
        %v1512 = vpop.f32.mrb[0].mxu0
        %v1513 = vadd.f32 0.0, %v1512
        %v1514 = vpop.f32.mrb[0].mxu0
        %v1515 = vadd.f32 0.0, %v1514
        %1516 = vmatprep.mubr.bf16.mxu0 0
        %1517 = vmatmul.mubr.bf16.gmra.mrb[0].mxu0 %v1246
        %v1518 = vpop.f32.mrb[0].mxu0
        %v1519 = vadd.f32 0.0, %v1518
        %v1520 = vpop.f32.mrb[0].mxu0
        %v1521 = vadd.f32 0.0, %v1520
        %v1522 = vpop.f32.mrb[0].mxu0
        %v1523 = vadd.f32 0.0, %v1522
        %v1524 = vpop.f32.mrb[0].mxu0
        %v1525 = vadd.f32 0.0, %v1524
        %1526 = vmatprep.mubr.bf16.mxu0 0
        %1527 = vmatmul.mubr.bf16.gmra.mrb[0].mxu0 %v1247
        %v1528 = vpop.f32.mrb[0].mxu0
        %v1529 = vadd.f32 0.0, %v1528
        %v1530 = vpop.f32.mrb[0].mxu0
        %v1531 = vadd.f32 0.0, %v1530
        %v1532 = vpop.f32.mrb[0].mxu0
        %v1533 = vadd.f32 0.0, %v1532
        %v1534 = vpop.f32.mrb[0].mxu0
        %v1535 = vadd.f32 0.0, %v1534
        %1536 = vdwg.mxu0
        %v1569 = vunpack.c.l.b16 %v733
        %v1570 = vunpack.c.l.b16 %v734
        %v1571 = vunpack.c.l.b16 %v735
        %v1572 = vunpack.c.l.b16 %v736
        %v1573 = vunpack.c.l.b16 %v737
        %v1574 = vunpack.c.l.b16 %v738
        %v1575 = vunpack.c.l.b16 %v739
        %v1576 = vunpack.c.l.b16 %v740
        %v1577 = vunpack.c.l.b16 %v741
        %v1578 = vunpack.c.l.b16 %v742
        %v1579 = vunpack.c.l.b16 %v743
        %v1580 = vunpack.c.l.b16 %v744
        %v1581 = vunpack.c.l.b16 %v745
        %v1582 = vunpack.c.l.b16 %v746
        %v1583 = vunpack.c.l.b16 %v747
        %v1584 = vunpack.c.l.b16 %v748
        %v1585 = vunpack.c.l.b16 %v749
        %v1586 = vunpack.c.l.b16 %v750
        %v1587 = vunpack.c.l.b16 %v751
        %v1588 = vunpack.c.l.b16 %v752
        %v1589 = vunpack.c.l.b16 %v753
        %v1590 = vunpack.c.l.b16 %v754
        %v1591 = vunpack.c.l.b16 %v755
        %v1592 = vunpack.c.l.b16 %v756
        %v1593 = vunpack.c.l.b16 %v757
        %v1594 = vunpack.c.l.b16 %v758
        %v1595 = vunpack.c.l.b16 %v759
        %v1596 = vunpack.c.l.b16 %v760
        %v1597 = vunpack.c.l.b16 %v761
        %v1598 = vunpack.c.l.b16 %v762
        %v1599 = vunpack.c.l.b16 %v763
        %v1600 = vunpack.c.l.b16 %v764
        %v1601 = vpack.c.b16 %v1570, %v1569
        %v1602 = vpack.c.b16 %v1572, %v1571
        %v1603 = vpack.c.b16 %v1574, %v1573
        %v1604 = vpack.c.b16 %v1576, %v1575
        %v1605 = vpack.c.b16 %v1578, %v1577
        %v1606 = vpack.c.b16 %v1580, %v1579
        %v1607 = vpack.c.b16 %v1582, %v1581
        %v1608 = vpack.c.b16 %v1584, %v1583
        %v1609 = vpack.c.b16 %v1586, %v1585
        %v1610 = vpack.c.b16 %v1588, %v1587
        %v1611 = vpack.c.b16 %v1590, %v1589
        %v1612 = vpack.c.b16 %v1592, %v1591
        %v1613 = vpack.c.b16 %v1594, %v1593
        %v1614 = vpack.c.b16 %v1596, %v1595
        %v1615 = vpack.c.b16 %v1598, %v1597
        %v1616 = vpack.c.b16 %v1600, %v1599
        %v1649 = vunpack.c.l.b16 %v765
        %v1650 = vunpack.c.l.b16 %v766
        %v1651 = vunpack.c.l.b16 %v767
        %v1652 = vunpack.c.l.b16 %v768
        %v1653 = vunpack.c.l.b16 %v769
        %v1654 = vunpack.c.l.b16 %v770
        %v1655 = vunpack.c.l.b16 %v771
        %v1656 = vunpack.c.l.b16 %v772
        %v1657 = vunpack.c.l.b16 %v773
        %v1658 = vunpack.c.l.b16 %v774
        %v1659 = vunpack.c.l.b16 %v775
        %v1660 = vunpack.c.l.b16 %v776
        %v1661 = vunpack.c.l.b16 %v777
        %v1662 = vunpack.c.l.b16 %v778
        %v1663 = vunpack.c.l.b16 %v779
        %v1664 = vunpack.c.l.b16 %v780
        %v1665 = vpack.c.b16 %v1650, %v1649
        %v1666 = vpack.c.b16 %v1652, %v1651
        %v1667 = vpack.c.b16 %v1654, %v1653
        %v1668 = vpack.c.b16 %v1656, %v1655
        %v1669 = vpack.c.b16 %v1658, %v1657
        %v1670 = vpack.c.b16 %v1660, %v1659
        %v1671 = vpack.c.b16 %v1662, %v1661
        %v1672 = vpack.c.b16 %v1664, %v1663
        %1681 = vmatprep.subr.bf16.mxu0 0
        %1682 = vmatpush1.bf16.msra.mxu0 %v1665
        %1683 = vmatprep.subr.bf16.mxu0 0
        %1684 = vmatpush1.bf16.msra.mxu0 %v1666
        %1685 = vmatprep.subr.bf16.mxu0 0
        %1686 = vmatpush1.bf16.msra.mxu0 %v1667
        %1687 = vmatprep.subr.bf16.mxu0 0
        %1688 = vmatpush1.bf16.msra.mxu0 %v1668
        %1689 = vmatprep.subr.bf16.mxu0 0
        %1690 = vmatpush1.bf16.msra.mxu0 %v1669
        %1691 = vmatprep.subr.bf16.mxu0 0
        %1692 = vmatpush1.bf16.msra.mxu0 %v1670
        %1693 = vmatprep.subr.bf16.mxu0 0
        %1694 = vmatpush1.bf16.msra.mxu0 %v1671
        %1695 = vmatprep.subr.bf16.mxu0 0
        %1696 = vmatpush1.bf16.msra.mxu0 %v1672
        %1697 = vmatprep.subr.bf16.mxu0 0
        %1698 = vmatpush1.bf16.msra.mxu0 0
        %1699 = vmatprep.subr.bf16.mxu0 0
        %1700 = vmatpush1.bf16.msra.mxu0 0
        %1701 = vmatprep.subr.bf16.mxu0 0
        %1702 = vmatpush1.bf16.msra.mxu0 0
        %1703 = vmatprep.subr.bf16.mxu0 0
        %1704 = vmatpush1.bf16.msra.mxu0 0
        %1705 = vmatprep.subr.bf16.mxu0 0
        %1706 = vmatpush1.bf16.msra.mxu0 0
        %1707 = vmatprep.subr.bf16.mxu0 0
        %1708 = vmatpush1.bf16.msra.mxu0 0
        %1709 = vmatprep.subr.bf16.mxu0 0
        %1710 = vmatpush1.bf16.msra.mxu0 0
        %1711 = vmatprep.subr.bf16.mxu0 0
        %1712 = vmatpush1.bf16.msra.mxu0 0
        %1713 = vmatprep.mubr.bf16.mxu0 0
        %1714 = vmatmul.mubr.bf16.gmra.mrb[0].mxu0 %v1601
        %v1715 = vpop.f32.mrb[0].mxu0
        %v1716 = vadd.f32 %v1379, %v1715
        %v1717 = vpop.f32.mrb[0].mxu0
        %v1718 = vpop.f32.mrb[0].mxu0
        %v1719 = vadd.f32 %v1383, %v1718
        %v1720 = vpop.f32.mrb[0].mxu0
        %1721 = vmatprep.mubr.bf16.mxu0 0
        %1722 = vmatmul.mubr.bf16.gmra.mrb[0].mxu0 %v1602
        %v1723 = vpop.f32.mrb[0].mxu0
        %v1724 = vadd.f32 %v1389, %v1723
        %v1725 = vpop.f32.mrb[0].mxu0
        %v1726 = vpop.f32.mrb[0].mxu0
        %v1727 = vadd.f32 %v1393, %v1726
        %v1728 = vpop.f32.mrb[0].mxu0
        %1729 = vmatprep.mubr.bf16.mxu0 0
        %1730 = vmatmul.mubr.bf16.gmra.mrb[0].mxu0 %v1603
        %v1731 = vpop.f32.mrb[0].mxu0
        %v1732 = vadd.f32 %v1399, %v1731
        %v1733 = vpop.f32.mrb[0].mxu0
        %v1734 = vpop.f32.mrb[0].mxu0
        %v1735 = vadd.f32 %v1403, %v1734
        %v1736 = vpop.f32.mrb[0].mxu0
        %1737 = vmatprep.mubr.bf16.mxu0 0
        %1738 = vmatmul.mubr.bf16.gmra.mrb[0].mxu0 %v1604
        %v1739 = vpop.f32.mrb[0].mxu0
        %v1740 = vadd.f32 %v1409, %v1739
        %v1741 = vpop.f32.mrb[0].mxu0
        %v1742 = vpop.f32.mrb[0].mxu0
        %v1743 = vadd.f32 %v1413, %v1742
        %v1744 = vpop.f32.mrb[0].mxu0
        %1745 = vmatprep.mubr.bf16.mxu0 0
        %1746 = vmatmul.mubr.bf16.gmra.mrb[0].mxu0 %v1605
        %v1747 = vpop.f32.mrb[0].mxu0
        %v1748 = vadd.f32 %v1419, %v1747
        %v1749 = vpop.f32.mrb[0].mxu0
        %v1750 = vpop.f32.mrb[0].mxu0
        %v1751 = vadd.f32 %v1423, %v1750
        %v1752 = vpop.f32.mrb[0].mxu0
        %1753 = vmatprep.mubr.bf16.mxu0 0
        %1754 = vmatmul.mubr.bf16.gmra.mrb[0].mxu0 %v1606
        %v1755 = vpop.f32.mrb[0].mxu0
        %v1756 = vadd.f32 %v1429, %v1755
        %v1757 = vpop.f32.mrb[0].mxu0
        %v1758 = vpop.f32.mrb[0].mxu0
        %v1759 = vadd.f32 %v1433, %v1758
        %v1760 = vpop.f32.mrb[0].mxu0
        %1761 = vmatprep.mubr.bf16.mxu0 0
        %1762 = vmatmul.mubr.bf16.gmra.mrb[0].mxu0 %v1607
        %v1763 = vpop.f32.mrb[0].mxu0
        %v1764 = vadd.f32 %v1439, %v1763
        %v1765 = vpop.f32.mrb[0].mxu0
        %v1766 = vpop.f32.mrb[0].mxu0
        %v1767 = vadd.f32 %v1443, %v1766
        %v1768 = vpop.f32.mrb[0].mxu0
        %1769 = vmatprep.mubr.bf16.mxu0 0
        %1770 = vmatmul.mubr.bf16.gmra.mrb[0].mxu0 %v1608
        %v1771 = vpop.f32.mrb[0].mxu0
        %v1772 = vadd.f32 %v1449, %v1771
        %v1773 = vpop.f32.mrb[0].mxu0
        %v1774 = vpop.f32.mrb[0].mxu0
        %v1775 = vadd.f32 %v1453, %v1774
        %v1776 = vpop.f32.mrb[0].mxu0
        %1777 = vmatprep.mubr.bf16.mxu0 0
        %1778 = vmatmul.mubr.bf16.gmra.mrb[0].mxu0 %v1609
        %v1779 = vpop.f32.mrb[0].mxu0
        %v1780 = vadd.f32 %v1459, %v1779
        %v1781 = vpop.f32.mrb[0].mxu0
        %v1782 = vpop.f32.mrb[0].mxu0
        %v1783 = vadd.f32 %v1463, %v1782
        %v1784 = vpop.f32.mrb[0].mxu0
        %1785 = vmatprep.mubr.bf16.mxu0 0
        %1786 = vmatmul.mubr.bf16.gmra.mrb[0].mxu0 %v1610
        %v1787 = vpop.f32.mrb[0].mxu0
        %v1788 = vadd.f32 %v1469, %v1787
        %v1789 = vpop.f32.mrb[0].mxu0
        %v1790 = vpop.f32.mrb[0].mxu0
        %v1791 = vadd.f32 %v1473, %v1790
        %v1792 = vpop.f32.mrb[0].mxu0
        %1793 = vmatprep.mubr.bf16.mxu0 0
        %1794 = vmatmul.mubr.bf16.gmra.mrb[0].mxu0 %v1611
        %v1795 = vpop.f32.mrb[0].mxu0
        %v1796 = vadd.f32 %v1479, %v1795
        %v1797 = vpop.f32.mrb[0].mxu0
        %v1798 = vpop.f32.mrb[0].mxu0
        %v1799 = vadd.f32 %v1483, %v1798
        %v1800 = vpop.f32.mrb[0].mxu0
        %1801 = vmatprep.mubr.bf16.mxu0 0
        %1802 = vmatmul.mubr.bf16.gmra.mrb[0].mxu0 %v1612
        %v1803 = vpop.f32.mrb[0].mxu0
        %v1804 = vadd.f32 %v1489, %v1803
        %v1805 = vpop.f32.mrb[0].mxu0
        %v1806 = vpop.f32.mrb[0].mxu0
        %v1807 = vadd.f32 %v1493, %v1806
        %v1808 = vpop.f32.mrb[0].mxu0
        %1809 = vmatprep.mubr.bf16.mxu0 0
        %1810 = vmatmul.mubr.bf16.gmra.mrb[0].mxu0 %v1613
        %v1811 = vpop.f32.mrb[0].mxu0
        %v1812 = vadd.f32 %v1499, %v1811
        %v1813 = vpop.f32.mrb[0].mxu0
        %v1814 = vpop.f32.mrb[0].mxu0
        %v1815 = vadd.f32 %v1503, %v1814
        %v1816 = vpop.f32.mrb[0].mxu0
        %1817 = vmatprep.mubr.bf16.mxu0 0
        %1818 = vmatmul.mubr.bf16.gmra.mrb[0].mxu0 %v1614
        %v1819 = vpop.f32.mrb[0].mxu0
        %v1820 = vadd.f32 %v1509, %v1819
        %v1821 = vpop.f32.mrb[0].mxu0
        %v1822 = vpop.f32.mrb[0].mxu0
        %v1823 = vadd.f32 %v1513, %v1822
        %v1824 = vpop.f32.mrb[0].mxu0
        %1825 = vmatprep.mubr.bf16.mxu0 0
        %1826 = vmatmul.mubr.bf16.gmra.mrb[0].mxu0 %v1615
        %v1827 = vpop.f32.mrb[0].mxu0
        %v1828 = vadd.f32 %v1519, %v1827
        %v1829 = vpop.f32.mrb[0].mxu0
        %v1830 = vpop.f32.mrb[0].mxu0
        %v1831 = vadd.f32 %v1523, %v1830
        %v1832 = vpop.f32.mrb[0].mxu0
        %1833 = vmatprep.mubr.bf16.mxu0 0
        %1834 = vmatmul.mubr.bf16.gmra.mrb[0].mxu0 %v1616
        %v1835 = vpop.f32.mrb[0].mxu0
        %v1836 = vadd.f32 %v1529, %v1835
        %v1837 = vpop.f32.mrb[0].mxu0
        %v1838 = vpop.f32.mrb[0].mxu0
        %v1839 = vadd.f32 %v1533, %v1838
        %v1840 = vpop.f32.mrb[0].mxu0
        %1841 = vdwg.mxu0
        %v1842 = vld [vmem:[#allocation2] sm:$0xe]
        %v1843 = vld [vmem:[#allocation2 + $0xc] sm:$0xe]
        %v1844 = vld [vmem:[#allocation2 + $0x18] sm:$0xe]
        %v1845 = vld [vmem:[#allocation2 + $0x24] sm:$0xe]
        %v1846 = vld [vmem:[#allocation2 + $0x30] sm:$0xe]
        %v1847 = vld [vmem:[#allocation2 + $0x3c] sm:$0xe]
        %v1848 = vld [vmem:[#allocation2 + $0x48] sm:$0xe]
        %v1849 = vld [vmem:[#allocation2 + $0x54] sm:$0xe]
        %v1850 = vld [vmem:[#allocation2 + $0x60] sm:$0xe]
        %v1851 = vld [vmem:[#allocation2 + $0x6c] sm:$0xe]
        %v1852 = vld [vmem:[#allocation2 + $0x78] sm:$0xe]
        %v1853 = vld [vmem:[#allocation2 + $0x84] sm:$0xe]
        %v1854 = vld [vmem:[#allocation2 + $0x90] sm:$0xe]
        %v1855 = vld [vmem:[#allocation2 + $0x9c] sm:$0xe]
        %v1856 = vld [vmem:[#allocation2 + $0xa8] sm:$0xe]
        %v1857 = vld [vmem:[#allocation2 + $0xb4] sm:$0xe]
        %vm1890 = vcmask 1042432
        %vm1891 = vcmask 1046532
        %vm1892 = vmor %vm1890, %vm1891
        %v1893 = vrot.slane %v1842, 5
        %v1894 = vrot.slane %v1893, 4
        %v1895 = vrot.slane %v734, 5
        %v1896 = vsel %vm1892, %v1894, %v1895
        %v1897 = vrot.slane %v1895, 4
        %v1898 = vrot.slane %v781, 5
        %v1899 = vsel %vm1892, %v1897, %v1898
        %v1900 = vrot.slane %v1843, 5
        %v1901 = vrot.slane %v1900, 4
        %v1902 = vrot.slane %v736, 5
        %v1903 = vsel %vm1892, %v1901, %v1902
        %v1904 = vrot.slane %v1902, 4
        %v1905 = vrot.slane %v782, 5
        %v1906 = vsel %vm1892, %v1904, %v1905
        %v1907 = vrot.slane %v1844, 5
        %v1908 = vrot.slane %v1907, 4
        %v1909 = vrot.slane %v738, 5
        %v1910 = vsel %vm1892, %v1908, %v1909
        %v1911 = vrot.slane %v1909, 4
        %v1912 = vrot.slane %v783, 5
        %v1913 = vsel %vm1892, %v1911, %v1912
        %v1914 = vrot.slane %v1845, 5
        %v1915 = vrot.slane %v1914, 4
        %v1916 = vrot.slane %v740, 5
        %v1917 = vsel %vm1892, %v1915, %v1916
        %v1918 = vrot.slane %v1916, 4
        %v1919 = vrot.slane %v784, 5
        %v1920 = vsel %vm1892, %v1918, %v1919
        %v1921 = vrot.slane %v1846, 5
        %v1922 = vrot.slane %v1921, 4
        %v1923 = vrot.slane %v742, 5
        %v1924 = vsel %vm1892, %v1922, %v1923
        %v1925 = vrot.slane %v1923, 4
        %v1926 = vrot.slane %v785, 5
        %v1927 = vsel %vm1892, %v1925, %v1926
        %v1928 = vrot.slane %v1847, 5
        %v1929 = vrot.slane %v1928, 4
        %v1930 = vrot.slane %v744, 5
        %v1931 = vsel %vm1892, %v1929, %v1930
        %v1932 = vrot.slane %v1930, 4
        %v1933 = vrot.slane %v786, 5
        %v1934 = vsel %vm1892, %v1932, %v1933
        %v1935 = vrot.slane %v1848, 5
        %v1936 = vrot.slane %v1935, 4
        %v1937 = vrot.slane %v746, 5
        %v1938 = vsel %vm1892, %v1936, %v1937
        %v1939 = vrot.slane %v1937, 4
        %v1940 = vrot.slane %v787, 5
        %v1941 = vsel %vm1892, %v1939, %v1940
        %v1942 = vrot.slane %v1849, 5
        %v1943 = vrot.slane %v1942, 4
        %v1944 = vrot.slane %v748, 5
        %v1945 = vsel %vm1892, %v1943, %v1944
        %v1946 = vrot.slane %v1944, 4
        %v1947 = vrot.slane %v788, 5
        %v1948 = vsel %vm1892, %v1946, %v1947
        %v1949 = vrot.slane %v1850, 5
        %v1950 = vrot.slane %v1949, 4
        %v1951 = vrot.slane %v750, 5
        %v1952 = vsel %vm1892, %v1950, %v1951
        %v1953 = vrot.slane %v1951, 4
        %v1954 = vrot.slane %v789, 5
        %v1955 = vsel %vm1892, %v1953, %v1954
        %v1956 = vrot.slane %v1851, 5
        %v1957 = vrot.slane %v1956, 4
        %v1958 = vrot.slane %v752, 5
        %v1959 = vsel %vm1892, %v1957, %v1958
        %v1960 = vrot.slane %v1958, 4
        %v1961 = vrot.slane %v790, 5
        %v1962 = vsel %vm1892, %v1960, %v1961
        %v1963 = vrot.slane %v1852, 5
        %v1964 = vrot.slane %v1963, 4
        %v1965 = vrot.slane %v754, 5
        %v1966 = vsel %vm1892, %v1964, %v1965
        %v1967 = vrot.slane %v1965, 4
        %v1968 = vrot.slane %v791, 5
        %v1969 = vsel %vm1892, %v1967, %v1968
        %v1970 = vrot.slane %v1853, 5
        %v1971 = vrot.slane %v1970, 4
        %v1972 = vrot.slane %v756, 5
        %v1973 = vsel %vm1892, %v1971, %v1972
        %v1974 = vrot.slane %v1972, 4
        %v1975 = vrot.slane %v792, 5
        %v1976 = vsel %vm1892, %v1974, %v1975
        %v1977 = vrot.slane %v1854, 5
        %v1978 = vrot.slane %v1977, 4
        %v1979 = vrot.slane %v758, 5
        %v1980 = vsel %vm1892, %v1978, %v1979
        %v1981 = vrot.slane %v1979, 4
        %v1982 = vrot.slane %v793, 5
        %v1983 = vsel %vm1892, %v1981, %v1982
        %v1984 = vrot.slane %v1855, 5
        %v1985 = vrot.slane %v1984, 4
        %v1986 = vrot.slane %v760, 5
        %v1987 = vsel %vm1892, %v1985, %v1986
        %v1988 = vrot.slane %v1986, 4
        %v1989 = vrot.slane %v794, 5
        %v1990 = vsel %vm1892, %v1988, %v1989
        %v1991 = vrot.slane %v1856, 5
        %v1992 = vrot.slane %v1991, 4
        %v1993 = vrot.slane %v762, 5
        %v1994 = vsel %vm1892, %v1992, %v1993
        %v1995 = vrot.slane %v1993, 4
        %v1996 = vrot.slane %v795, 5
        %v1997 = vsel %vm1892, %v1995, %v1996
        %v1998 = vrot.slane %v1857, 5
        %v1999 = vrot.slane %v1998, 4
        %v2000 = vrot.slane %v764, 5
        %v2001 = vsel %vm1892, %v1999, %v2000
        %v2002 = vrot.slane %v2000, 4
        %v2003 = vrot.slane %v796, 5
        %v2004 = vsel %vm1892, %v2002, %v2003
        %v2005 = vld [vmem:[#allocation6 + $0xc] sm:$0xf]
        %v2006 = vld [vmem:[#allocation6 + $0x4c] sm:$0xf]
        %v2007 = vld [vmem:[#allocation6 + $0x8c] sm:$0xf]
        %v2008 = vld [vmem:[#allocation6 + $0xcc] sm:$0xf]
        %v2009 = vld [vmem:[#allocation6 + $0x10c] sm:$0xf]
        %v2010 = vld [vmem:[#allocation6 + $0x14c] sm:$0xf]
        %v2011 = vld [vmem:[#allocation6 + $0x18c] sm:$0xf]
        %v2012 = vld [vmem:[#allocation6 + $0x1cc] sm:$0xf]
        %v2013 = vld [vmem:[#allocation6 + $0x20c] sm:$0xf]
        %v2014 = vld [vmem:[#allocation6 + $0x24c] sm:$0xf]
        %v2015 = vld [vmem:[#allocation6 + $0x28c] sm:$0xf]
        %v2016 = vld [vmem:[#allocation6 + $0x2cc] sm:$0xf]
        %v2017 = vld [vmem:[#allocation6 + $0x30c] sm:$0xf]
        %v2018 = vld [vmem:[#allocation6 + $0x34c] sm:$0xf]
        %v2019 = vld [vmem:[#allocation6 + $0x38c] sm:$0xf]
        %v2020 = vld [vmem:[#allocation6 + $0x3cc] sm:$0xf]
        %v2021 = vunpack.c.l.b16 %v1896
        %v2022 = vunpack.c.l.b16 %v1899
        %v2023 = vunpack.c.l.b16 %v1903
        %v2024 = vunpack.c.l.b16 %v1906
        %v2025 = vunpack.c.l.b16 %v1910
        %v2026 = vunpack.c.l.b16 %v1913
        %v2027 = vunpack.c.l.b16 %v1917
        %v2028 = vunpack.c.l.b16 %v1920
        %v2029 = vunpack.c.l.b16 %v1924
        %v2030 = vunpack.c.l.b16 %v1927
        %v2031 = vunpack.c.l.b16 %v1931
        %v2032 = vunpack.c.l.b16 %v1934
        %v2033 = vunpack.c.l.b16 %v1938
        %v2034 = vunpack.c.l.b16 %v1941
        %v2035 = vunpack.c.l.b16 %v1945
        %v2036 = vunpack.c.l.b16 %v1948
        %v2037 = vunpack.c.l.b16 %v1952
        %v2038 = vunpack.c.l.b16 %v1955
        %v2039 = vunpack.c.l.b16 %v1959
        %v2040 = vunpack.c.l.b16 %v1962
        %v2041 = vunpack.c.l.b16 %v1966
        %v2042 = vunpack.c.l.b16 %v1969
        %v2043 = vunpack.c.l.b16 %v1973
        %v2044 = vunpack.c.l.b16 %v1976
        %v2045 = vunpack.c.l.b16 %v1980
        %v2046 = vunpack.c.l.b16 %v1983
        %v2047 = vunpack.c.l.b16 %v1987
        %v2048 = vunpack.c.l.b16 %v1990
        %v2049 = vunpack.c.l.b16 %v1994
        %v2050 = vunpack.c.l.b16 %v1997
        %v2051 = vunpack.c.l.b16 %v2001
        %v2052 = vunpack.c.l.b16 %v2004
        %v2053 = vpack.c.b16 %v2022, %v2021
        %v2054 = vpack.c.b16 %v2024, %v2023
        %v2055 = vpack.c.b16 %v2026, %v2025
        %v2056 = vpack.c.b16 %v2028, %v2027
        %v2057 = vpack.c.b16 %v2030, %v2029
        %v2058 = vpack.c.b16 %v2032, %v2031
        %v2059 = vpack.c.b16 %v2034, %v2033
        %v2060 = vpack.c.b16 %v2036, %v2035
        %v2061 = vpack.c.b16 %v2038, %v2037
        %v2062 = vpack.c.b16 %v2040, %v2039
        %v2063 = vpack.c.b16 %v2042, %v2041
        %v2064 = vpack.c.b16 %v2044, %v2043
        %v2065 = vpack.c.b16 %v2046, %v2045
        %v2066 = vpack.c.b16 %v2048, %v2047
        %v2067 = vpack.c.b16 %v2050, %v2049
        %v2068 = vpack.c.b16 %v2052, %v2051
        %v2101 = vunpack.c.l.b16 %v2005
        %v2102 = vunpack.c.l.b16 %v2006
        %v2103 = vunpack.c.l.b16 %v2007
        %v2104 = vunpack.c.l.b16 %v2008
        %v2105 = vunpack.c.l.b16 %v2009
        %v2106 = vunpack.c.l.b16 %v2010
        %v2107 = vunpack.c.l.b16 %v2011
        %v2108 = vunpack.c.l.b16 %v2012
        %v2109 = vunpack.c.l.b16 %v2013
        %v2110 = vunpack.c.l.b16 %v2014
        %v2111 = vunpack.c.l.b16 %v2015
        %v2112 = vunpack.c.l.b16 %v2016
        %v2113 = vunpack.c.l.b16 %v2017
        %v2114 = vunpack.c.l.b16 %v2018
        %v2115 = vunpack.c.l.b16 %v2019
        %v2116 = vunpack.c.l.b16 %v2020
        %v2117 = vpack.c.b16 %v2102, %v2101
        %v2118 = vpack.c.b16 %v2104, %v2103
        %v2119 = vpack.c.b16 %v2106, %v2105
        %v2120 = vpack.c.b16 %v2108, %v2107
        %v2121 = vpack.c.b16 %v2110, %v2109
        %v2122 = vpack.c.b16 %v2112, %v2111
        %v2123 = vpack.c.b16 %v2114, %v2113
        %v2124 = vpack.c.b16 %v2116, %v2115
        %2133 = vmatprep.subr.bf16.mxu0 0
        %2134 = vmatpush1.bf16.msra.mxu0 %v2117
        %2135 = vmatprep.subr.bf16.mxu0 0
        %2136 = vmatpush1.bf16.msra.mxu0 %v2118
        %2137 = vmatprep.subr.bf16.mxu0 0
        %2138 = vmatpush1.bf16.msra.mxu0 %v2119
        %2139 = vmatprep.subr.bf16.mxu0 0
        %2140 = vmatpush1.bf16.msra.mxu0 %v2120
        %2141 = vmatprep.subr.bf16.mxu0 0
        %2142 = vmatpush1.bf16.msra.mxu0 %v2121
        %2143 = vmatprep.subr.bf16.mxu0 0
        %2144 = vmatpush1.bf16.msra.mxu0 %v2122
        %2145 = vmatprep.subr.bf16.mxu0 0
        %2146 = vmatpush1.bf16.msra.mxu0 %v2123
        %2147 = vmatprep.subr.bf16.mxu0 0
        %2148 = vmatpush1.bf16.msra.mxu0 %v2124
        %2149 = vmatprep.subr.bf16.mxu0 0
        %2150 = vmatpush1.bf16.msra.mxu0 0
        %2151 = vmatprep.subr.bf16.mxu0 0
        %2152 = vmatpush1.bf16.msra.mxu0 0
        %2153 = vmatprep.subr.bf16.mxu0 0
        %2154 = vmatpush1.bf16.msra.mxu0 0
        %2155 = vmatprep.subr.bf16.mxu0 0
        %2156 = vmatpush1.bf16.msra.mxu0 0
        %2157 = vmatprep.subr.bf16.mxu0 0
        %2158 = vmatpush1.bf16.msra.mxu0 0
        %2159 = vmatprep.subr.bf16.mxu0 0
        %2160 = vmatpush1.bf16.msra.mxu0 0
        %2161 = vmatprep.subr.bf16.mxu0 0
        %2162 = vmatpush1.bf16.msra.mxu0 0
        %2163 = vmatprep.subr.bf16.mxu0 0
        %2164 = vmatpush1.bf16.msra.mxu0 0
        %2165 = vmatprep.mubr.bf16.mxu0 0
        %2166 = vmatmul.mubr.bf16.gmra.mrb[0].mxu0 %v2053
        %v2167 = vpop.f32.mrb[0].mxu0
        %v2168 = vadd.f32 0.0, %v2167
        %v2169 = vpop.f32.mrb[0].mxu0
        %v2170 = vpop.f32.mrb[0].mxu0
        %v2171 = vadd.f32 0.0, %v2170
        %v2172 = vpop.f32.mrb[0].mxu0
        %2173 = vmatprep.mubr.bf16.mxu0 0
        %2174 = vmatmul.mubr.bf16.gmra.mrb[0].mxu0 %v2054
        %v2175 = vpop.f32.mrb[0].mxu0
        %v2176 = vadd.f32 0.0, %v2175
        %v2177 = vpop.f32.mrb[0].mxu0
        %v2178 = vpop.f32.mrb[0].mxu0
        %v2179 = vadd.f32 0.0, %v2178
        %v2180 = vpop.f32.mrb[0].mxu0
        %2181 = vmatprep.mubr.bf16.mxu0 0
        %2182 = vmatmul.mubr.bf16.gmra.mrb[0].mxu0 %v2055
        %v2183 = vpop.f32.mrb[0].mxu0
        %v2184 = vadd.f32 0.0, %v2183
        %v2185 = vpop.f32.mrb[0].mxu0
        %v2186 = vpop.f32.mrb[0].mxu0
        %v2187 = vadd.f32 0.0, %v2186
        %v2188 = vpop.f32.mrb[0].mxu0
        %2189 = vmatprep.mubr.bf16.mxu0 0
        %2190 = vmatmul.mubr.bf16.gmra.mrb[0].mxu0 %v2056
        %v2191 = vpop.f32.mrb[0].mxu0
        %v2192 = vadd.f32 0.0, %v2191
        %v2193 = vpop.f32.mrb[0].mxu0
        %v2194 = vpop.f32.mrb[0].mxu0
        %v2195 = vadd.f32 0.0, %v2194
        %v2196 = vpop.f32.mrb[0].mxu0
        %2197 = vmatprep.mubr.bf16.mxu0 0
        %2198 = vmatmul.mubr.bf16.gmra.mrb[0].mxu0 %v2057
        %v2199 = vpop.f32.mrb[0].mxu0
        %v2200 = vadd.f32 0.0, %v2199
        %v2201 = vpop.f32.mrb[0].mxu0
        %v2202 = vpop.f32.mrb[0].mxu0
        %v2203 = vadd.f32 0.0, %v2202
        %v2204 = vpop.f32.mrb[0].mxu0
        %2205 = vmatprep.mubr.bf16.mxu0 0
        %2206 = vmatmul.mubr.bf16.gmra.mrb[0].mxu0 %v2058
        %v2207 = vpop.f32.mrb[0].mxu0
        %v2208 = vadd.f32 0.0, %v2207
        %v2209 = vpop.f32.mrb[0].mxu0
        %v2210 = vpop.f32.mrb[0].mxu0
        %v2211 = vadd.f32 0.0, %v2210
        %v2212 = vpop.f32.mrb[0].mxu0
        %2213 = vmatprep.mubr.bf16.mxu0 0
        %2214 = vmatmul.mubr.bf16.gmra.mrb[0].mxu0 %v2059
        %v2215 = vpop.f32.mrb[0].mxu0
        %v2216 = vadd.f32 0.0, %v2215
        %v2217 = vpop.f32.mrb[0].mxu0
        %v2218 = vpop.f32.mrb[0].mxu0
        %v2219 = vadd.f32 0.0, %v2218
        %v2220 = vpop.f32.mrb[0].mxu0
        %2221 = vmatprep.mubr.bf16.mxu0 0
        %2222 = vmatmul.mubr.bf16.gmra.mrb[0].mxu0 %v2060
        %v2223 = vpop.f32.mrb[0].mxu0
        %v2224 = vadd.f32 0.0, %v2223
        %v2225 = vpop.f32.mrb[0].mxu0
        %v2226 = vpop.f32.mrb[0].mxu0
        %v2227 = vadd.f32 0.0, %v2226
        %v2228 = vpop.f32.mrb[0].mxu0
        %2229 = vmatprep.mubr.bf16.mxu0 0
        %2230 = vmatmul.mubr.bf16.gmra.mrb[0].mxu0 %v2061
        %v2231 = vpop.f32.mrb[0].mxu0
        %v2232 = vadd.f32 0.0, %v2231
        %v2233 = vpop.f32.mrb[0].mxu0
        %v2234 = vpop.f32.mrb[0].mxu0
        %v2235 = vadd.f32 0.0, %v2234
        %v2236 = vpop.f32.mrb[0].mxu0
        %2237 = vmatprep.mubr.bf16.mxu0 0
        %2238 = vmatmul.mubr.bf16.gmra.mrb[0].mxu0 %v2062
        %v2239 = vpop.f32.mrb[0].mxu0
        %v2240 = vadd.f32 0.0, %v2239
        %v2241 = vpop.f32.mrb[0].mxu0
        %v2242 = vpop.f32.mrb[0].mxu0
        %v2243 = vadd.f32 0.0, %v2242
        %v2244 = vpop.f32.mrb[0].mxu0
        %2245 = vmatprep.mubr.bf16.mxu0 0
        %2246 = vmatmul.mubr.bf16.gmra.mrb[0].mxu0 %v2063
        %v2247 = vpop.f32.mrb[0].mxu0
        %v2248 = vadd.f32 0.0, %v2247
        %v2249 = vpop.f32.mrb[0].mxu0
        %v2250 = vpop.f32.mrb[0].mxu0
        %v2251 = vadd.f32 0.0, %v2250
        %v2252 = vpop.f32.mrb[0].mxu0
        %2253 = vmatprep.mubr.bf16.mxu0 0
        %2254 = vmatmul.mubr.bf16.gmra.mrb[0].mxu0 %v2064
        %v2255 = vpop.f32.mrb[0].mxu0
        %v2256 = vadd.f32 0.0, %v2255
        %v2257 = vpop.f32.mrb[0].mxu0
        %v2258 = vpop.f32.mrb[0].mxu0
        %v2259 = vadd.f32 0.0, %v2258
        %v2260 = vpop.f32.mrb[0].mxu0
        %2261 = vmatprep.mubr.bf16.mxu0 0
        %2262 = vmatmul.mubr.bf16.gmra.mrb[0].mxu0 %v2065
        %v2263 = vpop.f32.mrb[0].mxu0
        %v2264 = vadd.f32 0.0, %v2263
        %v2265 = vpop.f32.mrb[0].mxu0
        %v2266 = vpop.f32.mrb[0].mxu0
        %v2267 = vadd.f32 0.0, %v2266
        %v2268 = vpop.f32.mrb[0].mxu0
        %2269 = vmatprep.mubr.bf16.mxu0 0
        %2270 = vmatmul.mubr.bf16.gmra.mrb[0].mxu0 %v2066
        %v2271 = vpop.f32.mrb[0].mxu0
        %v2272 = vadd.f32 0.0, %v2271
        %v2273 = vpop.f32.mrb[0].mxu0
        %v2274 = vpop.f32.mrb[0].mxu0
        %v2275 = vadd.f32 0.0, %v2274
        %v2276 = vpop.f32.mrb[0].mxu0
        %2277 = vmatprep.mubr.bf16.mxu0 0
        %2278 = vmatmul.mubr.bf16.gmra.mrb[0].mxu0 %v2067
        %v2279 = vpop.f32.mrb[0].mxu0
        %v2280 = vadd.f32 0.0, %v2279
        %v2281 = vpop.f32.mrb[0].mxu0
        %v2282 = vpop.f32.mrb[0].mxu0
        %v2283 = vadd.f32 0.0, %v2282
        %v2284 = vpop.f32.mrb[0].mxu0
        %2285 = vmatprep.mubr.bf16.mxu0 0
        %2286 = vmatmul.mubr.bf16.gmra.mrb[0].mxu0 %v2068
        %v2287 = vpop.f32.mrb[0].mxu0
        %v2288 = vadd.f32 0.0, %v2287
        %v2289 = vpop.f32.mrb[0].mxu0
        %v2290 = vpop.f32.mrb[0].mxu0
        %v2291 = vadd.f32 0.0, %v2290
        %v2292 = vpop.f32.mrb[0].mxu0
        %2293 = vdwg.mxu0
        %v2294 = vadd.f32 %v1381, %v2168
        %v2295 = vadd.f32 %v1385, %v2171
        %v2296 = vadd.f32 %v1391, %v2176
        %v2297 = vadd.f32 %v1395, %v2179
        %v2298 = vadd.f32 %v1401, %v2184
        %v2299 = vadd.f32 %v1405, %v2187
        %v2300 = vadd.f32 %v1411, %v2192
        %v2301 = vadd.f32 %v1415, %v2195
        %v2302 = vadd.f32 %v1421, %v2200
        %v2303 = vadd.f32 %v1425, %v2203
        %v2304 = vadd.f32 %v1431, %v2208
        %v2305 = vadd.f32 %v1435, %v2211
        %v2306 = vadd.f32 %v1441, %v2216
        %v2307 = vadd.f32 %v1445, %v2219
        %v2308 = vadd.f32 %v1451, %v2224
        %v2309 = vadd.f32 %v1455, %v2227
        %v2310 = vadd.f32 %v1461, %v2232
        %v2311 = vadd.f32 %v1465, %v2235
        %v2312 = vadd.f32 %v1471, %v2240
        %v2313 = vadd.f32 %v1475, %v2243
        %v2314 = vadd.f32 %v1481, %v2248
        %v2315 = vadd.f32 %v1485, %v2251
        %v2316 = vadd.f32 %v1491, %v2256
        %v2317 = vadd.f32 %v1495, %v2259
        %v2318 = vadd.f32 %v1501, %v2264
        %v2319 = vadd.f32 %v1505, %v2267
        %v2320 = vadd.f32 %v1511, %v2272
        %v2321 = vadd.f32 %v1515, %v2275
        %v2322 = vadd.f32 %v1521, %v2280
        %v2323 = vadd.f32 %v1525, %v2283
        %v2324 = vadd.f32 %v1531, %v2288
        %v2325 = vadd.f32 %v1535, %v2291
        %v2326 = vld [vmem:[%s614] sm:$0xf]
        %v2327 = vld [vmem:[%s614 + $0x4] sm:$0xf]
        %v2328 = vld [vmem:[%s614 + $0xc] sm:$0xf]
        %v2329 = vld [vmem:[%s614 + $0x10] sm:$0xf]
        %v2330 = vld [vmem:[%s614 + $0x18] sm:$0xf]
        %v2331 = vld [vmem:[%s614 + $0x1c] sm:$0xf]
        %v2332 = vld [vmem:[%s614 + $0x24] sm:$0xf]
        %v2333 = vld [vmem:[%s614 + $0x28] sm:$0xf]
        %v2334 = vld [vmem:[%s614 + $0x30] sm:$0xf]
        %v2335 = vld [vmem:[%s614 + $0x34] sm:$0xf]
        %v2336 = vld [vmem:[%s614 + $0x3c] sm:$0xf]
        %v2337 = vld [vmem:[%s614 + $0x40] sm:$0xf]
        %v2338 = vld [vmem:[%s614 + $0x48] sm:$0xf]
        %v2339 = vld [vmem:[%s614 + $0x4c] sm:$0xf]
        %v2340 = vld [vmem:[%s614 + $0x54] sm:$0xf]
        %v2341 = vld [vmem:[%s614 + $0x58] sm:$0xf]
        %v2342 = vld [vmem:[%s614 + $0x60] sm:$0xf]
        %v2343 = vld [vmem:[%s614 + $0x64] sm:$0xf]
        %v2344 = vld [vmem:[%s614 + $0x6c] sm:$0xf]
        %v2345 = vld [vmem:[%s614 + $0x70] sm:$0xf]
        %v2346 = vld [vmem:[%s614 + $0x78] sm:$0xf]
        %v2347 = vld [vmem:[%s614 + $0x7c] sm:$0xf]
        %v2348 = vld [vmem:[%s614 + $0x84] sm:$0xf]
        %v2349 = vld [vmem:[%s614 + $0x88] sm:$0xf]
        %v2350 = vld [vmem:[%s614 + $0x90] sm:$0xf]
        %v2351 = vld [vmem:[%s614 + $0x94] sm:$0xf]
        %v2352 = vld [vmem:[%s614 + $0x9c] sm:$0xf]
        %v2353 = vld [vmem:[%s614 + $0xa0] sm:$0xf]
        %v2354 = vld [vmem:[%s614 + $0xa8] sm:$0xf]
        %v2355 = vld [vmem:[%s614 + $0xac] sm:$0xf]
        %v2356 = vld [vmem:[%s614 + $0xb4] sm:$0xf]
        %v2357 = vld [vmem:[%s614 + $0xb8] sm:$0xf]
        %v2358 = vld [vmem:[#allocation6 + $0x10] sm:$0xff]
        %v2359 = vld [vmem:[#allocation6 + $0x50] sm:$0xff]
        %v2360 = vld [vmem:[#allocation6 + $0x90] sm:$0xff]
        %v2361 = vld [vmem:[#allocation6 + $0xd0] sm:$0xff]
        %v2362 = vld [vmem:[#allocation6 + $0x110] sm:$0xff]
        %v2363 = vld [vmem:[#allocation6 + $0x150] sm:$0xff]
        %v2364 = vld [vmem:[#allocation6 + $0x190] sm:$0xff]
        %v2365 = vld [vmem:[#allocation6 + $0x1d0] sm:$0xff]
        %v2366 = vld [vmem:[#allocation6 + $0x210] sm:$0xff]
        %v2367 = vld [vmem:[#allocation6 + $0x250] sm:$0xff]
        %v2368 = vld [vmem:[#allocation6 + $0x290] sm:$0xff]
        %v2369 = vld [vmem:[#allocation6 + $0x2d0] sm:$0xff]
        %v2370 = vld [vmem:[#allocation6 + $0x310] sm:$0xff]
        %v2371 = vld [vmem:[#allocation6 + $0x350] sm:$0xff]
        %v2372 = vld [vmem:[#allocation6 + $0x390] sm:$0xff]
        %v2373 = vld [vmem:[#allocation6 + $0x3d0] sm:$0xff]
        %v2406 = vunpack.c.l.b16 %v2326
        %v2407 = vunpack.c.l.b16 %v2327
        %v2408 = vunpack.c.l.b16 %v2328
        %v2409 = vunpack.c.l.b16 %v2329
        %v2410 = vunpack.c.l.b16 %v2330
        %v2411 = vunpack.c.l.b16 %v2331
        %v2412 = vunpack.c.l.b16 %v2332
        %v2413 = vunpack.c.l.b16 %v2333
        %v2414 = vunpack.c.l.b16 %v2334
        %v2415 = vunpack.c.l.b16 %v2335
        %v2416 = vunpack.c.l.b16 %v2336
        %v2417 = vunpack.c.l.b16 %v2337
        %v2418 = vunpack.c.l.b16 %v2338
        %v2419 = vunpack.c.l.b16 %v2339
        %v2420 = vunpack.c.l.b16 %v2340
        %v2421 = vunpack.c.l.b16 %v2341
        %v2422 = vunpack.c.l.b16 %v2342
        %v2423 = vunpack.c.l.b16 %v2343
        %v2424 = vunpack.c.l.b16 %v2344
        %v2425 = vunpack.c.l.b16 %v2345
        %v2426 = vunpack.c.l.b16 %v2346
        %v2427 = vunpack.c.l.b16 %v2347
        %v2428 = vunpack.c.l.b16 %v2348
        %v2429 = vunpack.c.l.b16 %v2349
        %v2430 = vunpack.c.l.b16 %v2350
        %v2431 = vunpack.c.l.b16 %v2351
        %v2432 = vunpack.c.l.b16 %v2352
        %v2433 = vunpack.c.l.b16 %v2353
        %v2434 = vunpack.c.l.b16 %v2354
        %v2435 = vunpack.c.l.b16 %v2355
        %v2436 = vunpack.c.l.b16 %v2356
        %v2437 = vunpack.c.l.b16 %v2357
        %v2438 = vpack.c.b16 %v2407, %v2406
        %v2439 = vpack.c.b16 %v2409, %v2408
        %v2440 = vpack.c.b16 %v2411, %v2410
        %v2441 = vpack.c.b16 %v2413, %v2412
        %v2442 = vpack.c.b16 %v2415, %v2414
        %v2443 = vpack.c.b16 %v2417, %v2416
        %v2444 = vpack.c.b16 %v2419, %v2418
        %v2445 = vpack.c.b16 %v2421, %v2420
        %v2446 = vpack.c.b16 %v2423, %v2422
        %v2447 = vpack.c.b16 %v2425, %v2424
        %v2448 = vpack.c.b16 %v2427, %v2426
        %v2449 = vpack.c.b16 %v2429, %v2428
        %v2450 = vpack.c.b16 %v2431, %v2430
        %v2451 = vpack.c.b16 %v2433, %v2432
        %v2452 = vpack.c.b16 %v2435, %v2434
        %v2453 = vpack.c.b16 %v2437, %v2436
        %v2486 = vunpack.c.l.b16 %v2358
        %v2487 = vunpack.c.h.b16 %v2358
        %v2488 = vunpack.c.l.b16 %v2359
        %v2489 = vunpack.c.h.b16 %v2359
        %v2490 = vunpack.c.l.b16 %v2360
        %v2491 = vunpack.c.h.b16 %v2360
        %v2492 = vunpack.c.l.b16 %v2361
        %v2493 = vunpack.c.h.b16 %v2361
        %v2494 = vunpack.c.l.b16 %v2362
        %v2495 = vunpack.c.h.b16 %v2362
        %v2496 = vunpack.c.l.b16 %v2363
        %v2497 = vunpack.c.h.b16 %v2363
        %v2498 = vunpack.c.l.b16 %v2364
        %v2499 = vunpack.c.h.b16 %v2364
        %v2500 = vunpack.c.l.b16 %v2365
        %v2501 = vunpack.c.h.b16 %v2365
        %v2502 = vunpack.c.l.b16 %v2366
        %v2503 = vunpack.c.h.b16 %v2366
        %v2504 = vunpack.c.l.b16 %v2367
        %v2505 = vunpack.c.h.b16 %v2367
        %v2506 = vunpack.c.l.b16 %v2368
        %v2507 = vunpack.c.h.b16 %v2368
        %v2508 = vunpack.c.l.b16 %v2369
        %v2509 = vunpack.c.h.b16 %v2369
        %v2510 = vunpack.c.l.b16 %v2370
        %v2511 = vunpack.c.h.b16 %v2370
        %v2512 = vunpack.c.l.b16 %v2371
        %v2513 = vunpack.c.h.b16 %v2371
        %v2514 = vunpack.c.l.b16 %v2372
        %v2515 = vunpack.c.h.b16 %v2372
        %v2516 = vunpack.c.l.b16 %v2373
        %v2517 = vunpack.c.h.b16 %v2373
        %v2518 = vpack.c.b16 %v2488, %v2486
        %v2519 = vpack.c.b16 %v2489, %v2487
        %v2520 = vpack.c.b16 %v2492, %v2490
        %v2521 = vpack.c.b16 %v2493, %v2491
        %v2522 = vpack.c.b16 %v2496, %v2494
        %v2523 = vpack.c.b16 %v2497, %v2495
        %v2524 = vpack.c.b16 %v2500, %v2498
        %v2525 = vpack.c.b16 %v2501, %v2499
        %v2526 = vpack.c.b16 %v2504, %v2502
        %v2527 = vpack.c.b16 %v2505, %v2503
        %v2528 = vpack.c.b16 %v2508, %v2506
        %v2529 = vpack.c.b16 %v2509, %v2507
        %v2530 = vpack.c.b16 %v2512, %v2510
        %v2531 = vpack.c.b16 %v2513, %v2511
        %v2532 = vpack.c.b16 %v2516, %v2514
        %v2533 = vpack.c.b16 %v2517, %v2515
        %2550 = vmatprep.subr.bf16.mxu0 %v2519
        %2551 = vmatpush1.bf16.msra.mxu0 %v2518
        %2552 = vmatprep.subr.bf16.mxu0 %v2521
        %2553 = vmatpush1.bf16.msra.mxu0 %v2520
        %2554 = vmatprep.subr.bf16.mxu0 %v2523
        %2555 = vmatpush1.bf16.msra.mxu0 %v2522
        %2556 = vmatprep.subr.bf16.mxu0 %v2525
        %2557 = vmatpush1.bf16.msra.mxu0 %v2524
        %2558 = vmatprep.subr.bf16.mxu0 %v2527
        %2559 = vmatpush1.bf16.msra.mxu0 %v2526
        %2560 = vmatprep.subr.bf16.mxu0 %v2529
        %2561 = vmatpush1.bf16.msra.mxu0 %v2528
        %2562 = vmatprep.subr.bf16.mxu0 %v2531
        %2563 = vmatpush1.bf16.msra.mxu0 %v2530
        %2564 = vmatprep.subr.bf16.mxu0 %v2533
        %2565 = vmatpush1.bf16.msra.mxu0 %v2532
        %2566 = vmatprep.subr.bf16.mxu0 0
        %2567 = vmatpush1.bf16.msra.mxu0 0
        %2568 = vmatprep.subr.bf16.mxu0 0
        %2569 = vmatpush1.bf16.msra.mxu0 0
        %2570 = vmatprep.subr.bf16.mxu0 0
        %2571 = vmatpush1.bf16.msra.mxu0 0
        %2572 = vmatprep.subr.bf16.mxu0 0
        %2573 = vmatpush1.bf16.msra.mxu0 0
        %2574 = vmatprep.subr.bf16.mxu0 0
        %2575 = vmatpush1.bf16.msra.mxu0 0
        %2576 = vmatprep.subr.bf16.mxu0 0
        %2577 = vmatpush1.bf16.msra.mxu0 0
        %2578 = vmatprep.subr.bf16.mxu0 0
        %2579 = vmatpush1.bf16.msra.mxu0 0
        %2580 = vmatprep.subr.bf16.mxu0 0
        %2581 = vmatpush1.bf16.msra.mxu0 0
        %2582 = vmatprep.mubr.bf16.mxu0 0
        %2583 = vmatmul.mubr.bf16.gmra.mrb[0].mxu0 %v2438
        %v2584 = vpop.f32.mrb[0].mxu0
        %v2585 = vadd.f32 0.0, %v2584
        %v2586 = vpop.f32.mrb[0].mxu0
        %v2587 = vadd.f32 0.0, %v2586
        %v2588 = vpop.f32.mrb[0].mxu0
        %v2589 = vadd.f32 0.0, %v2588
        %v2590 = vpop.f32.mrb[0].mxu0
        %v2591 = vadd.f32 0.0, %v2590
        %2592 = vmatprep.mubr.bf16.mxu0 0
        %2593 = vmatmul.mubr.bf16.gmra.mrb[0].mxu0 %v2439
        %v2594 = vpop.f32.mrb[0].mxu0
        %v2595 = vadd.f32 0.0, %v2594
        %v2596 = vpop.f32.mrb[0].mxu0
        %v2597 = vadd.f32 0.0, %v2596
        %v2598 = vpop.f32.mrb[0].mxu0
        %v2599 = vadd.f32 0.0, %v2598
        %v2600 = vpop.f32.mrb[0].mxu0
        %v2601 = vadd.f32 0.0, %v2600
        %2602 = vmatprep.mubr.bf16.mxu0 0
        %2603 = vmatmul.mubr.bf16.gmra.mrb[0].mxu0 %v2440
        %v2604 = vpop.f32.mrb[0].mxu0
        %v2605 = vadd.f32 0.0, %v2604
        %v2606 = vpop.f32.mrb[0].mxu0
        %v2607 = vadd.f32 0.0, %v2606
        %v2608 = vpop.f32.mrb[0].mxu0
        %v2609 = vadd.f32 0.0, %v2608
        %v2610 = vpop.f32.mrb[0].mxu0
        %v2611 = vadd.f32 0.0, %v2610
        %2612 = vmatprep.mubr.bf16.mxu0 0
        %2613 = vmatmul.mubr.bf16.gmra.mrb[0].mxu0 %v2441
        %v2614 = vpop.f32.mrb[0].mxu0
        %v2615 = vadd.f32 0.0, %v2614
        %v2616 = vpop.f32.mrb[0].mxu0
        %v2617 = vadd.f32 0.0, %v2616
        %v2618 = vpop.f32.mrb[0].mxu0
        %v2619 = vadd.f32 0.0, %v2618
        %v2620 = vpop.f32.mrb[0].mxu0
        %v2621 = vadd.f32 0.0, %v2620
        %2622 = vmatprep.mubr.bf16.mxu0 0
        %2623 = vmatmul.mubr.bf16.gmra.mrb[0].mxu0 %v2442
        %v2624 = vpop.f32.mrb[0].mxu0
        %v2625 = vadd.f32 0.0, %v2624
        %v2626 = vpop.f32.mrb[0].mxu0
        %v2627 = vadd.f32 0.0, %v2626
        %v2628 = vpop.f32.mrb[0].mxu0
        %v2629 = vadd.f32 0.0, %v2628
        %v2630 = vpop.f32.mrb[0].mxu0
        %v2631 = vadd.f32 0.0, %v2630
        %2632 = vmatprep.mubr.bf16.mxu0 0
        %2633 = vmatmul.mubr.bf16.gmra.mrb[0].mxu0 %v2443
        %v2634 = vpop.f32.mrb[0].mxu0
        %v2635 = vadd.f32 0.0, %v2634
        %v2636 = vpop.f32.mrb[0].mxu0
        %v2637 = vadd.f32 0.0, %v2636
        %v2638 = vpop.f32.mrb[0].mxu0
        %v2639 = vadd.f32 0.0, %v2638
        %v2640 = vpop.f32.mrb[0].mxu0
        %v2641 = vadd.f32 0.0, %v2640
        %2642 = vmatprep.mubr.bf16.mxu0 0
        %2643 = vmatmul.mubr.bf16.gmra.mrb[0].mxu0 %v2444
        %v2644 = vpop.f32.mrb[0].mxu0
        %v2645 = vadd.f32 0.0, %v2644
        %v2646 = vpop.f32.mrb[0].mxu0
        %v2647 = vadd.f32 0.0, %v2646
        %v2648 = vpop.f32.mrb[0].mxu0
        %v2649 = vadd.f32 0.0, %v2648
        %v2650 = vpop.f32.mrb[0].mxu0
        %v2651 = vadd.f32 0.0, %v2650
        %2652 = vmatprep.mubr.bf16.mxu0 0
        %2653 = vmatmul.mubr.bf16.gmra.mrb[0].mxu0 %v2445
        %v2654 = vpop.f32.mrb[0].mxu0
        %v2655 = vadd.f32 0.0, %v2654
        %v2656 = vpop.f32.mrb[0].mxu0
        %v2657 = vadd.f32 0.0, %v2656
        %v2658 = vpop.f32.mrb[0].mxu0
        %v2659 = vadd.f32 0.0, %v2658
        %v2660 = vpop.f32.mrb[0].mxu0
        %v2661 = vadd.f32 0.0, %v2660
        %2662 = vmatprep.mubr.bf16.mxu0 0
        %2663 = vmatmul.mubr.bf16.gmra.mrb[0].mxu0 %v2446
        %v2664 = vpop.f32.mrb[0].mxu0
        %v2665 = vadd.f32 0.0, %v2664
        %v2666 = vpop.f32.mrb[0].mxu0
        %v2667 = vadd.f32 0.0, %v2666
        %v2668 = vpop.f32.mrb[0].mxu0
        %v2669 = vadd.f32 0.0, %v2668
        %v2670 = vpop.f32.mrb[0].mxu0
        %v2671 = vadd.f32 0.0, %v2670
        %2672 = vmatprep.mubr.bf16.mxu0 0
        %2673 = vmatmul.mubr.bf16.gmra.mrb[0].mxu0 %v2447
        %v2674 = vpop.f32.mrb[0].mxu0
        %v2675 = vadd.f32 0.0, %v2674
        %v2676 = vpop.f32.mrb[0].mxu0
        %v2677 = vadd.f32 0.0, %v2676
        %v2678 = vpop.f32.mrb[0].mxu0
        %v2679 = vadd.f32 0.0, %v2678
        %v2680 = vpop.f32.mrb[0].mxu0
        %v2681 = vadd.f32 0.0, %v2680
        %2682 = vmatprep.mubr.bf16.mxu0 0
        %2683 = vmatmul.mubr.bf16.gmra.mrb[0].mxu0 %v2448
        %v2684 = vpop.f32.mrb[0].mxu0
        %v2685 = vadd.f32 0.0, %v2684
        %v2686 = vpop.f32.mrb[0].mxu0
        %v2687 = vadd.f32 0.0, %v2686
        %v2688 = vpop.f32.mrb[0].mxu0
        %v2689 = vadd.f32 0.0, %v2688
        %v2690 = vpop.f32.mrb[0].mxu0
        %v2691 = vadd.f32 0.0, %v2690
        %2692 = vmatprep.mubr.bf16.mxu0 0
        %2693 = vmatmul.mubr.bf16.gmra.mrb[0].mxu0 %v2449
        %v2694 = vpop.f32.mrb[0].mxu0
        %v2695 = vadd.f32 0.0, %v2694
        %v2696 = vpop.f32.mrb[0].mxu0
        %v2697 = vadd.f32 0.0, %v2696
        %v2698 = vpop.f32.mrb[0].mxu0
        %v2699 = vadd.f32 0.0, %v2698
        %v2700 = vpop.f32.mrb[0].mxu0
        %v2701 = vadd.f32 0.0, %v2700
        %2702 = vmatprep.mubr.bf16.mxu0 0
        %2703 = vmatmul.mubr.bf16.gmra.mrb[0].mxu0 %v2450
        %v2704 = vpop.f32.mrb[0].mxu0
        %v2705 = vadd.f32 0.0, %v2704
        %v2706 = vpop.f32.mrb[0].mxu0
        %v2707 = vadd.f32 0.0, %v2706
        %v2708 = vpop.f32.mrb[0].mxu0
        %v2709 = vadd.f32 0.0, %v2708
        %v2710 = vpop.f32.mrb[0].mxu0
        %v2711 = vadd.f32 0.0, %v2710
        %2712 = vmatprep.mubr.bf16.mxu0 0
        %2713 = vmatmul.mubr.bf16.gmra.mrb[0].mxu0 %v2451
        %v2714 = vpop.f32.mrb[0].mxu0
        %v2715 = vadd.f32 0.0, %v2714
        %v2716 = vpop.f32.mrb[0].mxu0
        %v2717 = vadd.f32 0.0, %v2716
        %v2718 = vpop.f32.mrb[0].mxu0
        %v2719 = vadd.f32 0.0, %v2718
        %v2720 = vpop.f32.mrb[0].mxu0
        %v2721 = vadd.f32 0.0, %v2720
        %2722 = vmatprep.mubr.bf16.mxu0 0
        %2723 = vmatmul.mubr.bf16.gmra.mrb[0].mxu0 %v2452
        %v2724 = vpop.f32.mrb[0].mxu0
        %v2725 = vadd.f32 0.0, %v2724
        %v2726 = vpop.f32.mrb[0].mxu0
        %v2727 = vadd.f32 0.0, %v2726
        %v2728 = vpop.f32.mrb[0].mxu0
        %v2729 = vadd.f32 0.0, %v2728
        %v2730 = vpop.f32.mrb[0].mxu0
        %v2731 = vadd.f32 0.0, %v2730
        %2732 = vmatprep.mubr.bf16.mxu0 0
        %2733 = vmatmul.mubr.bf16.gmra.mrb[0].mxu0 %v2453
        %v2734 = vpop.f32.mrb[0].mxu0
        %v2735 = vadd.f32 0.0, %v2734
        %v2736 = vpop.f32.mrb[0].mxu0
        %v2737 = vadd.f32 0.0, %v2736
        %v2738 = vpop.f32.mrb[0].mxu0
        %v2739 = vadd.f32 0.0, %v2738
        %v2740 = vpop.f32.mrb[0].mxu0
        %v2741 = vadd.f32 0.0, %v2740
        %2742 = vdwg.mxu0
        %v2743 = vadd.f32 %v1716, %v2585
        %v2744 = vadd.f32 %v1719, %v2589
        %v2745 = vadd.f32 %v1724, %v2595
        %v2746 = vadd.f32 %v1727, %v2599
        %v2747 = vadd.f32 %v1732, %v2605
        %v2748 = vadd.f32 %v1735, %v2609
        %v2749 = vadd.f32 %v1740, %v2615
        %v2750 = vadd.f32 %v1743, %v2619
        %v2751 = vadd.f32 %v1748, %v2625
        %v2752 = vadd.f32 %v1751, %v2629
        %v2753 = vadd.f32 %v1756, %v2635
        %v2754 = vadd.f32 %v1759, %v2639
        %v2755 = vadd.f32 %v1764, %v2645
        %v2756 = vadd.f32 %v1767, %v2649
        %v2757 = vadd.f32 %v1772, %v2655
        %v2758 = vadd.f32 %v1775, %v2659
        %v2759 = vadd.f32 %v1780, %v2665
        %v2760 = vadd.f32 %v1783, %v2669
        %v2761 = vadd.f32 %v1788, %v2675
        %v2762 = vadd.f32 %v1791, %v2679
        %v2763 = vadd.f32 %v1796, %v2685
        %v2764 = vadd.f32 %v1799, %v2689
        %v2765 = vadd.f32 %v1804, %v2695
        %v2766 = vadd.f32 %v1807, %v2699
        %v2767 = vadd.f32 %v1812, %v2705
        %v2768 = vadd.f32 %v1815, %v2709
        %v2769 = vadd.f32 %v1820, %v2715
        %v2770 = vadd.f32 %v1823, %v2719
        %v2771 = vadd.f32 %v1828, %v2725
        %v2772 = vadd.f32 %v1831, %v2729
        %v2773 = vadd.f32 %v1836, %v2735
        %v2774 = vadd.f32 %v1839, %v2739
        %v2775 = vld [vmem:[%s614] sm:$0xf]
        %v2776 = vld [vmem:[%s614 + $0x4] sm:$0xf]
        %v2777 = vld [vmem:[%s614 + $0x8] sm:$0x1]
        %v2778 = vld [vmem:[%s614 + $0xc] sm:$0xf]
        %v2779 = vld [vmem:[%s614 + $0x10] sm:$0xf]
        %v2780 = vld [vmem:[%s614 + $0x14] sm:$0x1]
        %v2781 = vld [vmem:[%s614 + $0x18] sm:$0xf]
        %v2782 = vld [vmem:[%s614 + $0x1c] sm:$0xf]
        %v2783 = vld [vmem:[%s614 + $0x20] sm:$0x1]
        %v2784 = vld [vmem:[%s614 + $0x24] sm:$0xf]
        %v2785 = vld [vmem:[%s614 + $0x28] sm:$0xf]
        %v2786 = vld [vmem:[%s614 + $0x2c] sm:$0x1]
        %v2787 = vld [vmem:[%s614 + $0x30] sm:$0xf]
        %v2788 = vld [vmem:[%s614 + $0x34] sm:$0xf]
        %v2789 = vld [vmem:[%s614 + $0x38] sm:$0x1]
        %v2790 = vld [vmem:[%s614 + $0x3c] sm:$0xf]
        %v2791 = vld [vmem:[%s614 + $0x40] sm:$0xf]
        %v2792 = vld [vmem:[%s614 + $0x44] sm:$0x1]
        %v2793 = vld [vmem:[%s614 + $0x48] sm:$0xf]
        %v2794 = vld [vmem:[%s614 + $0x4c] sm:$0xf]
        %v2795 = vld [vmem:[%s614 + $0x50] sm:$0x1]
        %v2796 = vld [vmem:[%s614 + $0x54] sm:$0xf]
        %v2797 = vld [vmem:[%s614 + $0x58] sm:$0xf]
        %v2798 = vld [vmem:[%s614 + $0x5c] sm:$0x1]
        %v2799 = vld [vmem:[%s614 + $0x60] sm:$0xf]
        %v2800 = vld [vmem:[%s614 + $0x64] sm:$0xf]
        %v2801 = vld [vmem:[%s614 + $0x68] sm:$0x1]
        %v2802 = vld [vmem:[%s614 + $0x6c] sm:$0xf]
        %v2803 = vld [vmem:[%s614 + $0x70] sm:$0xf]
        %v2804 = vld [vmem:[%s614 + $0x74] sm:$0x1]
        %v2805 = vld [vmem:[%s614 + $0x78] sm:$0xf]
        %v2806 = vld [vmem:[%s614 + $0x7c] sm:$0xf]
        %v2807 = vld [vmem:[%s614 + $0x80] sm:$0x1]
        %v2808 = vld [vmem:[%s614 + $0x84] sm:$0xf]
        %v2809 = vld [vmem:[%s614 + $0x88] sm:$0xf]
        %v2810 = vld [vmem:[%s614 + $0x8c] sm:$0x1]
        %v2811 = vld [vmem:[%s614 + $0x90] sm:$0xf]
        %v2812 = vld [vmem:[%s614 + $0x94] sm:$0xf]
        %v2813 = vld [vmem:[%s614 + $0x98] sm:$0x1]
        %v2814 = vld [vmem:[%s614 + $0x9c] sm:$0xf]
        %v2815 = vld [vmem:[%s614 + $0xa0] sm:$0xf]
        %v2816 = vld [vmem:[%s614 + $0xa4] sm:$0x1]
        %v2817 = vld [vmem:[%s614 + $0xa8] sm:$0xf]
        %v2818 = vld [vmem:[%s614 + $0xac] sm:$0xf]
        %v2819 = vld [vmem:[%s614 + $0xb0] sm:$0x1]
        %v2820 = vld [vmem:[%s614 + $0xb4] sm:$0xf]
        %v2821 = vld [vmem:[%s614 + $0xb8] sm:$0xf]
        %v2822 = vld [vmem:[%s614 + $0xbc] sm:$0x1]
        %v2824 = vshrl.u32 %v2775, 16
        %v2826 = vrot.slane %v2824, 4
        %v2827 = vshll.u32 %v2775, 16
        %v2829 = vrot.slane %v2827, 5
        %v2830 = vor.u32 %v2826, %v2829
        %v2831 = vrot.slane %v2830, 4
        %v2833 = vshll.u32 %v2776, 16
        %v2835 = vrot.slane %v2833, 5
        %v2836 = vsel %vm799, %v2831, %v2835
        %v2837 = vshrl.u32 %v2776, 16
        %v2839 = vrot.slane %v2837, 4
        %v2840 = vor.u32 %v2839, %v2835
        %v2841 = vrot.slane %v2840, 4
        %v2843 = vshll.u32 %v2777, 16
        %v2845 = vrot.slane %v2843, 5
        %v2846 = vsel %vm799, %v2841, %v2845
        %v2848 = vshrl.u32 %v2778, 16
        %v2850 = vrot.slane %v2848, 4
        %v2851 = vshll.u32 %v2778, 16
        %v2853 = vrot.slane %v2851, 5
        %v2854 = vor.u32 %v2850, %v2853
        %v2855 = vrot.slane %v2854, 4
        %v2857 = vshll.u32 %v2779, 16
        %v2859 = vrot.slane %v2857, 5
        %v2860 = vsel %vm799, %v2855, %v2859
        %v2861 = vshrl.u32 %v2779, 16
        %v2863 = vrot.slane %v2861, 4
        %v2864 = vor.u32 %v2863, %v2859
        %v2865 = vrot.slane %v2864, 4
        %v2867 = vshll.u32 %v2780, 16
        %v2869 = vrot.slane %v2867, 5
        %v2870 = vsel %vm799, %v2865, %v2869
        %v2872 = vshrl.u32 %v2781, 16
        %v2874 = vrot.slane %v2872, 4
        %v2875 = vshll.u32 %v2781, 16
        %v2877 = vrot.slane %v2875, 5
        %v2878 = vor.u32 %v2874, %v2877
        %v2879 = vrot.slane %v2878, 4
        %v2881 = vshll.u32 %v2782, 16
        %v2883 = vrot.slane %v2881, 5
        %v2884 = vsel %vm799, %v2879, %v2883
        %v2885 = vshrl.u32 %v2782, 16
        %v2887 = vrot.slane %v2885, 4
        %v2888 = vor.u32 %v2887, %v2883
        %v2889 = vrot.slane %v2888, 4
        %v2891 = vshll.u32 %v2783, 16
        %v2893 = vrot.slane %v2891, 5
        %v2894 = vsel %vm799, %v2889, %v2893
        %v2896 = vshrl.u32 %v2784, 16
        %v2898 = vrot.slane %v2896, 4
        %v2899 = vshll.u32 %v2784, 16
        %v2901 = vrot.slane %v2899, 5
        %v2902 = vor.u32 %v2898, %v2901
        %v2903 = vrot.slane %v2902, 4
        %v2905 = vshll.u32 %v2785, 16
        %v2907 = vrot.slane %v2905, 5
        %v2908 = vsel %vm799, %v2903, %v2907
        %v2909 = vshrl.u32 %v2785, 16
        %v2911 = vrot.slane %v2909, 4
        %v2912 = vor.u32 %v2911, %v2907
        %v2913 = vrot.slane %v2912, 4
        %v2915 = vshll.u32 %v2786, 16
        %v2917 = vrot.slane %v2915, 5
        %v2918 = vsel %vm799, %v2913, %v2917
        %v2920 = vshrl.u32 %v2787, 16
        %v2922 = vrot.slane %v2920, 4
        %v2923 = vshll.u32 %v2787, 16
        %v2925 = vrot.slane %v2923, 5
        %v2926 = vor.u32 %v2922, %v2925
        %v2927 = vrot.slane %v2926, 4
        %v2929 = vshll.u32 %v2788, 16
        %v2931 = vrot.slane %v2929, 5
        %v2932 = vsel %vm799, %v2927, %v2931
        %v2933 = vshrl.u32 %v2788, 16
        %v2935 = vrot.slane %v2933, 4
        %v2936 = vor.u32 %v2935, %v2931
        %v2937 = vrot.slane %v2936, 4
        %v2939 = vshll.u32 %v2789, 16
        %v2941 = vrot.slane %v2939, 5
        %v2942 = vsel %vm799, %v2937, %v2941
        %v2944 = vshrl.u32 %v2790, 16
        %v2946 = vrot.slane %v2944, 4
        %v2947 = vshll.u32 %v2790, 16
        %v2949 = vrot.slane %v2947, 5
        %v2950 = vor.u32 %v2946, %v2949
        %v2951 = vrot.slane %v2950, 4
        %v2953 = vshll.u32 %v2791, 16
        %v2955 = vrot.slane %v2953, 5
        %v2956 = vsel %vm799, %v2951, %v2955
        %v2957 = vshrl.u32 %v2791, 16
        %v2959 = vrot.slane %v2957, 4
        %v2960 = vor.u32 %v2959, %v2955
        %v2961 = vrot.slane %v2960, 4
        %v2963 = vshll.u32 %v2792, 16
        %v2965 = vrot.slane %v2963, 5
        %v2966 = vsel %vm799, %v2961, %v2965
        %v2968 = vshrl.u32 %v2793, 16
        %v2970 = vrot.slane %v2968, 4
        %v2971 = vshll.u32 %v2793, 16
        %v2973 = vrot.slane %v2971, 5
        %v2974 = vor.u32 %v2970, %v2973
        %v2975 = vrot.slane %v2974, 4
        %v2977 = vshll.u32 %v2794, 16
        %v2979 = vrot.slane %v2977, 5
        %v2980 = vsel %vm799, %v2975, %v2979
        %v2981 = vshrl.u32 %v2794, 16
        %v2983 = vrot.slane %v2981, 4
        %v2984 = vor.u32 %v2983, %v2979
        %v2985 = vrot.slane %v2984, 4
        %v2987 = vshll.u32 %v2795, 16
        %v2989 = vrot.slane %v2987, 5
        %v2990 = vsel %vm799, %v2985, %v2989
        %v2992 = vshrl.u32 %v2796, 16
        %v2994 = vrot.slane %v2992, 4
        %v2995 = vshll.u32 %v2796, 16
        %v2997 = vrot.slane %v2995, 5
        %v2998 = vor.u32 %v2994, %v2997
        %v2999 = vrot.slane %v2998, 4
        %v3001 = vshll.u32 %v2797, 16
        %v3003 = vrot.slane %v3001, 5
        %v3004 = vsel %vm799, %v2999, %v3003
        %v3005 = vshrl.u32 %v2797, 16
        %v3007 = vrot.slane %v3005, 4
        %v3008 = vor.u32 %v3007, %v3003
        %v3009 = vrot.slane %v3008, 4
        %v3011 = vshll.u32 %v2798, 16
        %v3013 = vrot.slane %v3011, 5
        %v3014 = vsel %vm799, %v3009, %v3013
        %v3016 = vshrl.u32 %v2799, 16
        %v3018 = vrot.slane %v3016, 4
        %v3019 = vshll.u32 %v2799, 16
        %v3021 = vrot.slane %v3019, 5
        %v3022 = vor.u32 %v3018, %v3021
        %v3023 = vrot.slane %v3022, 4
        %v3025 = vshll.u32 %v2800, 16
        %v3027 = vrot.slane %v3025, 5
        %v3028 = vsel %vm799, %v3023, %v3027
        %v3029 = vshrl.u32 %v2800, 16
        %v3031 = vrot.slane %v3029, 4
        %v3032 = vor.u32 %v3031, %v3027
        %v3033 = vrot.slane %v3032, 4
        %v3035 = vshll.u32 %v2801, 16
        %v3037 = vrot.slane %v3035, 5
        %v3038 = vsel %vm799, %v3033, %v3037
        %v3040 = vshrl.u32 %v2802, 16
        %v3042 = vrot.slane %v3040, 4
        %v3043 = vshll.u32 %v2802, 16
        %v3045 = vrot.slane %v3043, 5
        %v3046 = vor.u32 %v3042, %v3045
        %v3047 = vrot.slane %v3046, 4
        %v3049 = vshll.u32 %v2803, 16
        %v3051 = vrot.slane %v3049, 5
        %v3052 = vsel %vm799, %v3047, %v3051
        %v3053 = vshrl.u32 %v2803, 16
        %v3055 = vrot.slane %v3053, 4
        %v3056 = vor.u32 %v3055, %v3051
        %v3057 = vrot.slane %v3056, 4
        %v3059 = vshll.u32 %v2804, 16
        %v3061 = vrot.slane %v3059, 5
        %v3062 = vsel %vm799, %v3057, %v3061
        %v3064 = vshrl.u32 %v2805, 16
        %v3066 = vrot.slane %v3064, 4
        %v3067 = vshll.u32 %v2805, 16
        %v3069 = vrot.slane %v3067, 5
        %v3070 = vor.u32 %v3066, %v3069
        %v3071 = vrot.slane %v3070, 4
        %v3073 = vshll.u32 %v2806, 16
        %v3075 = vrot.slane %v3073, 5
        %v3076 = vsel %vm799, %v3071, %v3075
        %v3077 = vshrl.u32 %v2806, 16
        %v3079 = vrot.slane %v3077, 4
        %v3080 = vor.u32 %v3079, %v3075
        %v3081 = vrot.slane %v3080, 4
        %v3083 = vshll.u32 %v2807, 16
        %v3085 = vrot.slane %v3083, 5
        %v3086 = vsel %vm799, %v3081, %v3085
        %v3088 = vshrl.u32 %v2808, 16
        %v3090 = vrot.slane %v3088, 4
        %v3091 = vshll.u32 %v2808, 16
        %v3093 = vrot.slane %v3091, 5
        %v3094 = vor.u32 %v3090, %v3093
        %v3095 = vrot.slane %v3094, 4
        %v3097 = vshll.u32 %v2809, 16
        %v3099 = vrot.slane %v3097, 5
        %v3100 = vsel %vm799, %v3095, %v3099
        %v3101 = vshrl.u32 %v2809, 16
        %v3103 = vrot.slane %v3101, 4
        %v3104 = vor.u32 %v3103, %v3099
        %v3105 = vrot.slane %v3104, 4
        %v3107 = vshll.u32 %v2810, 16
        %v3109 = vrot.slane %v3107, 5
        %v3110 = vsel %vm799, %v3105, %v3109
        %v3112 = vshrl.u32 %v2811, 16
        %v3114 = vrot.slane %v3112, 4
        %v3115 = vshll.u32 %v2811, 16
        %v3117 = vrot.slane %v3115, 5
        %v3118 = vor.u32 %v3114, %v3117
        %v3119 = vrot.slane %v3118, 4
        %v3121 = vshll.u32 %v2812, 16
        %v3123 = vrot.slane %v3121, 5
        %v3124 = vsel %vm799, %v3119, %v3123
        %v3125 = vshrl.u32 %v2812, 16
        %v3127 = vrot.slane %v3125, 4
        %v3128 = vor.u32 %v3127, %v3123
        %v3129 = vrot.slane %v3128, 4
        %v3131 = vshll.u32 %v2813, 16
        %v3133 = vrot.slane %v3131, 5
        %v3134 = vsel %vm799, %v3129, %v3133
        %v3136 = vshrl.u32 %v2814, 16
        %v3138 = vrot.slane %v3136, 4
        %v3139 = vshll.u32 %v2814, 16
        %v3141 = vrot.slane %v3139, 5
        %v3142 = vor.u32 %v3138, %v3141
        %v3143 = vrot.slane %v3142, 4
        %v3145 = vshll.u32 %v2815, 16
        %v3147 = vrot.slane %v3145, 5
        %v3148 = vsel %vm799, %v3143, %v3147
        %v3149 = vshrl.u32 %v2815, 16
        %v3151 = vrot.slane %v3149, 4
        %v3152 = vor.u32 %v3151, %v3147
        %v3153 = vrot.slane %v3152, 4
        %v3155 = vshll.u32 %v2816, 16
        %v3157 = vrot.slane %v3155, 5
        %v3158 = vsel %vm799, %v3153, %v3157
        %v3160 = vshrl.u32 %v2817, 16
        %v3162 = vrot.slane %v3160, 4
        %v3163 = vshll.u32 %v2817, 16
        %v3165 = vrot.slane %v3163, 5
        %v3166 = vor.u32 %v3162, %v3165
        %v3167 = vrot.slane %v3166, 4
        %v3169 = vshll.u32 %v2818, 16
        %v3171 = vrot.slane %v3169, 5
        %v3172 = vsel %vm799, %v3167, %v3171
        %v3173 = vshrl.u32 %v2818, 16
        %v3175 = vrot.slane %v3173, 4
        %v3176 = vor.u32 %v3175, %v3171
        %v3177 = vrot.slane %v3176, 4
        %v3179 = vshll.u32 %v2819, 16
        %v3181 = vrot.slane %v3179, 5
        %v3182 = vsel %vm799, %v3177, %v3181
        %v3184 = vshrl.u32 %v2820, 16
        %v3186 = vrot.slane %v3184, 4
        %v3187 = vshll.u32 %v2820, 16
        %v3189 = vrot.slane %v3187, 5
        %v3190 = vor.u32 %v3186, %v3189
        %v3191 = vrot.slane %v3190, 4
        %v3193 = vshll.u32 %v2821, 16
        %v3195 = vrot.slane %v3193, 5
        %v3196 = vsel %vm799, %v3191, %v3195
        %v3197 = vshrl.u32 %v2821, 16
        %v3199 = vrot.slane %v3197, 4
        %v3200 = vor.u32 %v3199, %v3195
        %v3201 = vrot.slane %v3200, 4
        %v3203 = vshll.u32 %v2822, 16
        %v3205 = vrot.slane %v3203, 5
        %v3206 = vsel %vm799, %v3201, %v3205
        %v3207 = vld [vmem:[#allocation6 + $0x18] sm:$0xff]
        %v3208 = vld [vmem:[#allocation6 + $0x20] sm:$0xff]
        %v3209 = vld [vmem:[#allocation6 + $0x58] sm:$0xff]
        %v3210 = vld [vmem:[#allocation6 + $0x60] sm:$0xff]
        %v3211 = vld [vmem:[#allocation6 + $0x98] sm:$0xff]
        %v3212 = vld [vmem:[#allocation6 + $0xa0] sm:$0xff]
        %v3213 = vld [vmem:[#allocation6 + $0xd8] sm:$0xff]
        %v3214 = vld [vmem:[#allocation6 + $0xe0] sm:$0xff]
        %v3215 = vld [vmem:[#allocation6 + $0x118] sm:$0xff]
        %v3216 = vld [vmem:[#allocation6 + $0x120] sm:$0xff]
        %v3217 = vld [vmem:[#allocation6 + $0x158] sm:$0xff]
        %v3218 = vld [vmem:[#allocation6 + $0x160] sm:$0xff]
        %v3219 = vld [vmem:[#allocation6 + $0x198] sm:$0xff]
        %v3220 = vld [vmem:[#allocation6 + $0x1a0] sm:$0xff]
        %v3221 = vld [vmem:[#allocation6 + $0x1d8] sm:$0xff]
        %v3222 = vld [vmem:[#allocation6 + $0x1e0] sm:$0xff]
        %v3223 = vld [vmem:[#allocation6 + $0x218] sm:$0xff]
        %v3224 = vld [vmem:[#allocation6 + $0x220] sm:$0xff]
        %v3225 = vld [vmem:[#allocation6 + $0x258] sm:$0xff]
        %v3226 = vld [vmem:[#allocation6 + $0x260] sm:$0xff]
        %v3227 = vld [vmem:[#allocation6 + $0x298] sm:$0xff]
        %v3228 = vld [vmem:[#allocation6 + $0x2a0] sm:$0xff]
        %v3229 = vld [vmem:[#allocation6 + $0x2d8] sm:$0xff]
        %v3230 = vld [vmem:[#allocation6 + $0x2e0] sm:$0xff]
        %v3231 = vld [vmem:[#allocation6 + $0x318] sm:$0xff]
        %v3232 = vld [vmem:[#allocation6 + $0x320] sm:$0xff]
        %v3233 = vld [vmem:[#allocation6 + $0x358] sm:$0xff]
        %v3234 = vld [vmem:[#allocation6 + $0x360] sm:$0xff]
        %v3235 = vld [vmem:[#allocation6 + $0x398] sm:$0xff]
        %v3236 = vld [vmem:[#allocation6 + $0x3a0] sm:$0xff]
        %v3237 = vld [vmem:[#allocation6 + $0x3d8] sm:$0xff]
        %v3238 = vld [vmem:[#allocation6 + $0x3e0] sm:$0xff]
        %v3239 = vunpack.c.l.b16 %v2836
        %v3240 = vunpack.c.l.b16 %v2846
        %v3241 = vunpack.c.l.b16 %v2860
        %v3242 = vunpack.c.l.b16 %v2870
        %v3243 = vunpack.c.l.b16 %v2884
        %v3244 = vunpack.c.l.b16 %v2894
        %v3245 = vunpack.c.l.b16 %v2908
        %v3246 = vunpack.c.l.b16 %v2918
        %v3247 = vunpack.c.l.b16 %v2932
        %v3248 = vunpack.c.l.b16 %v2942
        %v3249 = vunpack.c.l.b16 %v2956
        %v3250 = vunpack.c.l.b16 %v2966
        %v3251 = vunpack.c.l.b16 %v2980
        %v3252 = vunpack.c.l.b16 %v2990
        %v3253 = vunpack.c.l.b16 %v3004
        %v3254 = vunpack.c.l.b16 %v3014
        %v3255 = vunpack.c.l.b16 %v3028
        %v3256 = vunpack.c.l.b16 %v3038
        %v3257 = vunpack.c.l.b16 %v3052
        %v3258 = vunpack.c.l.b16 %v3062
        %v3259 = vunpack.c.l.b16 %v3076
        %v3260 = vunpack.c.l.b16 %v3086
        %v3261 = vunpack.c.l.b16 %v3100
        %v3262 = vunpack.c.l.b16 %v3110
        %v3263 = vunpack.c.l.b16 %v3124
        %v3264 = vunpack.c.l.b16 %v3134
        %v3265 = vunpack.c.l.b16 %v3148
        %v3266 = vunpack.c.l.b16 %v3158
        %v3267 = vunpack.c.l.b16 %v3172
        %v3268 = vunpack.c.l.b16 %v3182
        %v3269 = vunpack.c.l.b16 %v3196
        %v3270 = vunpack.c.l.b16 %v3206
        %v3271 = vpack.c.b16 %v3240, %v3239
        %v3272 = vpack.c.b16 %v3242, %v3241
        %v3273 = vpack.c.b16 %v3244, %v3243
        %v3274 = vpack.c.b16 %v3246, %v3245
        %v3275 = vpack.c.b16 %v3248, %v3247
        %v3276 = vpack.c.b16 %v3250, %v3249
        %v3277 = vpack.c.b16 %v3252, %v3251
        %v3278 = vpack.c.b16 %v3254, %v3253
        %v3279 = vpack.c.b16 %v3256, %v3255
        %v3280 = vpack.c.b16 %v3258, %v3257
        %v3281 = vpack.c.b16 %v3260, %v3259
        %v3282 = vpack.c.b16 %v3262, %v3261
        %v3283 = vpack.c.b16 %v3264, %v3263
        %v3284 = vpack.c.b16 %v3266, %v3265
        %v3285 = vpack.c.b16 %v3268, %v3267
        %v3286 = vpack.c.b16 %v3270, %v3269
        %v3335 = vunpack.c.l.b16 %v3207
        %v3336 = vunpack.c.h.b16 %v3207
        %v3337 = vunpack.c.l.b16 %v3208
        %v3338 = vunpack.c.h.b16 %v3208
        %v3339 = vunpack.c.l.b16 %v3209
        %v3340 = vunpack.c.h.b16 %v3209
        %v3341 = vunpack.c.l.b16 %v3210
        %v3342 = vunpack.c.h.b16 %v3210
        %v3343 = vunpack.c.l.b16 %v3211
        %v3344 = vunpack.c.h.b16 %v3211
        %v3345 = vunpack.c.l.b16 %v3212
        %v3346 = vunpack.c.h.b16 %v3212
        %v3347 = vunpack.c.l.b16 %v3213
        %v3348 = vunpack.c.h.b16 %v3213
        %v3349 = vunpack.c.l.b16 %v3214
        %v3350 = vunpack.c.h.b16 %v3214
        %v3351 = vunpack.c.l.b16 %v3215
        %v3352 = vunpack.c.h.b16 %v3215
        %v3353 = vunpack.c.l.b16 %v3216
        %v3354 = vunpack.c.h.b16 %v3216
        %v3355 = vunpack.c.l.b16 %v3217
        %v3356 = vunpack.c.h.b16 %v3217
        %v3357 = vunpack.c.l.b16 %v3218
        %v3358 = vunpack.c.h.b16 %v3218
        %v3359 = vunpack.c.l.b16 %v3219
        %v3360 = vunpack.c.h.b16 %v3219
        %v3361 = vunpack.c.l.b16 %v3220
        %v3362 = vunpack.c.h.b16 %v3220
        %v3363 = vunpack.c.l.b16 %v3221
        %v3364 = vunpack.c.h.b16 %v3221
        %v3365 = vunpack.c.l.b16 %v3222
        %v3366 = vunpack.c.h.b16 %v3222
        %v3367 = vunpack.c.l.b16 %v3223
        %v3368 = vunpack.c.h.b16 %v3223
        %v3369 = vunpack.c.l.b16 %v3224
        %v3370 = vunpack.c.h.b16 %v3224
        %v3371 = vunpack.c.l.b16 %v3225
        %v3372 = vunpack.c.h.b16 %v3225
        %v3373 = vunpack.c.l.b16 %v3226
        %v3374 = vunpack.c.h.b16 %v3226
        %v3375 = vunpack.c.l.b16 %v3227
        %v3376 = vunpack.c.h.b16 %v3227
        %v3377 = vunpack.c.l.b16 %v3228
        %v3378 = vunpack.c.h.b16 %v3228
        %v3379 = vunpack.c.l.b16 %v3229
        %v3380 = vunpack.c.h.b16 %v3229
        %v3381 = vunpack.c.l.b16 %v3230
        %v3382 = vunpack.c.h.b16 %v3230
        %v3383 = vunpack.c.l.b16 %v3231
        %v3384 = vunpack.c.h.b16 %v3231
        %v3385 = vunpack.c.l.b16 %v3232
        %v3386 = vunpack.c.h.b16 %v3232
        %v3387 = vunpack.c.l.b16 %v3233
        %v3388 = vunpack.c.h.b16 %v3233
        %v3389 = vunpack.c.l.b16 %v3234
        %v3390 = vunpack.c.h.b16 %v3234
        %v3391 = vunpack.c.l.b16 %v3235
        %v3392 = vunpack.c.h.b16 %v3235
        %v3393 = vunpack.c.l.b16 %v3236
        %v3394 = vunpack.c.h.b16 %v3236
        %v3395 = vunpack.c.l.b16 %v3237
        %v3396 = vunpack.c.h.b16 %v3237
        %v3397 = vunpack.c.l.b16 %v3238
        %v3398 = vunpack.c.h.b16 %v3238
        %v3399 = vpack.c.b16 %v3339, %v3335
        %v3400 = vpack.c.b16 %v3340, %v3336
        %v3401 = vpack.c.b16 %v3341, %v3337
        %v3402 = vpack.c.b16 %v3342, %v3338
        %v3403 = vpack.c.b16 %v3347, %v3343
        %v3404 = vpack.c.b16 %v3348, %v3344
        %v3405 = vpack.c.b16 %v3349, %v3345
        %v3406 = vpack.c.b16 %v3350, %v3346
        %v3407 = vpack.c.b16 %v3355, %v3351
        %v3408 = vpack.c.b16 %v3356, %v3352
        %v3409 = vpack.c.b16 %v3357, %v3353
        %v3410 = vpack.c.b16 %v3358, %v3354
        %v3411 = vpack.c.b16 %v3363, %v3359
        %v3412 = vpack.c.b16 %v3364, %v3360
        %v3413 = vpack.c.b16 %v3365, %v3361
        %v3414 = vpack.c.b16 %v3366, %v3362
        %v3415 = vpack.c.b16 %v3371, %v3367
        %v3416 = vpack.c.b16 %v3372, %v3368
        %v3417 = vpack.c.b16 %v3373, %v3369
        %v3418 = vpack.c.b16 %v3374, %v3370
        %v3419 = vpack.c.b16 %v3379, %v3375
        %v3420 = vpack.c.b16 %v3380, %v3376
        %v3421 = vpack.c.b16 %v3381, %v3377
        %v3422 = vpack.c.b16 %v3382, %v3378
        %v3423 = vpack.c.b16 %v3387, %v3383
        %v3424 = vpack.c.b16 %v3388, %v3384
        %v3425 = vpack.c.b16 %v3389, %v3385
        %v3426 = vpack.c.b16 %v3390, %v3386
        %v3427 = vpack.c.b16 %v3395, %v3391
        %v3428 = vpack.c.b16 %v3396, %v3392
        %v3429 = vpack.c.b16 %v3397, %v3393
        %v3430 = vpack.c.b16 %v3398, %v3394
        %3463 = vmatprep.subr.bf16.mxu0 %v3400
        %3464 = vmatpush1.bf16.msra.mxu0 %v3399
        %3465 = vmatprep.subr.bf16.mxu0 %v3404
        %3466 = vmatpush1.bf16.msra.mxu0 %v3403
        %3467 = vmatprep.subr.bf16.mxu0 %v3408
        %3468 = vmatpush1.bf16.msra.mxu0 %v3407
        %3469 = vmatprep.subr.bf16.mxu0 %v3412
        %3470 = vmatpush1.bf16.msra.mxu0 %v3411
        %3471 = vmatprep.subr.bf16.mxu0 %v3416
        %3472 = vmatpush1.bf16.msra.mxu0 %v3415
        %3473 = vmatprep.subr.bf16.mxu0 %v3420
        %3474 = vmatpush1.bf16.msra.mxu0 %v3419
        %3475 = vmatprep.subr.bf16.mxu0 %v3424
        %3476 = vmatpush1.bf16.msra.mxu0 %v3423
        %3477 = vmatprep.subr.bf16.mxu0 %v3428
        %3478 = vmatpush1.bf16.msra.mxu0 %v3427
        %3479 = vmatprep.subr.bf16.mxu0 0
        %3480 = vmatpush1.bf16.msra.mxu0 0
        %3481 = vmatprep.subr.bf16.mxu0 0
        %3482 = vmatpush1.bf16.msra.mxu0 0
        %3483 = vmatprep.subr.bf16.mxu0 0
        %3484 = vmatpush1.bf16.msra.mxu0 0
        %3485 = vmatprep.subr.bf16.mxu0 0
        %3486 = vmatpush1.bf16.msra.mxu0 0
        %3487 = vmatprep.subr.bf16.mxu0 0
        %3488 = vmatpush1.bf16.msra.mxu0 0
        %3489 = vmatprep.subr.bf16.mxu0 0
        %3490 = vmatpush1.bf16.msra.mxu0 0
        %3491 = vmatprep.subr.bf16.mxu0 0
        %3492 = vmatpush1.bf16.msra.mxu0 0
        %3493 = vmatprep.subr.bf16.mxu0 0
        %3494 = vmatpush1.bf16.msra.mxu0 0
        %3495 = vmatprep.mubr.bf16.mxu0 0
        %3496 = vmatmul.mubr.bf16.gmra.mrb[0].mxu0 %v3271
        %v3497 = vpop.f32.mrb[0].mxu0
        %v3498 = vadd.f32 0.0, %v3497
        %v3499 = vpop.f32.mrb[0].mxu0
        %v3500 = vadd.f32 0.0, %v3499
        %v3501 = vpop.f32.mrb[0].mxu0
        %v3502 = vadd.f32 0.0, %v3501
        %v3503 = vpop.f32.mrb[0].mxu0
        %v3504 = vadd.f32 0.0, %v3503
        %3505 = vmatprep.mubr.bf16.mxu0 0
        %3506 = vmatmul.mubr.bf16.gmra.mrb[0].mxu0 %v3272
        %v3507 = vpop.f32.mrb[0].mxu0
        %v3508 = vadd.f32 0.0, %v3507
        %v3509 = vpop.f32.mrb[0].mxu0
        %v3510 = vadd.f32 0.0, %v3509
        %v3511 = vpop.f32.mrb[0].mxu0
        %v3512 = vadd.f32 0.0, %v3511
        %v3513 = vpop.f32.mrb[0].mxu0
        %v3514 = vadd.f32 0.0, %v3513
        %3515 = vmatprep.mubr.bf16.mxu0 0
        %3516 = vmatmul.mubr.bf16.gmra.mrb[0].mxu0 %v3273
        %v3517 = vpop.f32.mrb[0].mxu0
        %v3518 = vadd.f32 0.0, %v3517
        %v3519 = vpop.f32.mrb[0].mxu0
        %v3520 = vadd.f32 0.0, %v3519
        %v3521 = vpop.f32.mrb[0].mxu0
        %v3522 = vadd.f32 0.0, %v3521
        %v3523 = vpop.f32.mrb[0].mxu0
        %v3524 = vadd.f32 0.0, %v3523
        %3525 = vmatprep.mubr.bf16.mxu0 0
        %3526 = vmatmul.mubr.bf16.gmra.mrb[0].mxu0 %v3274
        %v3527 = vpop.f32.mrb[0].mxu0
        %v3528 = vadd.f32 0.0, %v3527
        %v3529 = vpop.f32.mrb[0].mxu0
        %v3530 = vadd.f32 0.0, %v3529
        %v3531 = vpop.f32.mrb[0].mxu0
        %v3532 = vadd.f32 0.0, %v3531
        %v3533 = vpop.f32.mrb[0].mxu0
        %v3534 = vadd.f32 0.0, %v3533
        %3535 = vmatprep.mubr.bf16.mxu0 0
        %3536 = vmatmul.mubr.bf16.gmra.mrb[0].mxu0 %v3275
        %v3537 = vpop.f32.mrb[0].mxu0
        %v3538 = vadd.f32 0.0, %v3537
        %v3539 = vpop.f32.mrb[0].mxu0
        %v3540 = vadd.f32 0.0, %v3539
        %v3541 = vpop.f32.mrb[0].mxu0
        %v3542 = vadd.f32 0.0, %v3541
        %v3543 = vpop.f32.mrb[0].mxu0
        %v3544 = vadd.f32 0.0, %v3543
        %3545 = vmatprep.mubr.bf16.mxu0 0
        %3546 = vmatmul.mubr.bf16.gmra.mrb[0].mxu0 %v3276
        %v3547 = vpop.f32.mrb[0].mxu0
        %v3548 = vadd.f32 0.0, %v3547
        %v3549 = vpop.f32.mrb[0].mxu0
        %v3550 = vadd.f32 0.0, %v3549
        %v3551 = vpop.f32.mrb[0].mxu0
        %v3552 = vadd.f32 0.0, %v3551
        %v3553 = vpop.f32.mrb[0].mxu0
        %v3554 = vadd.f32 0.0, %v3553
        %3555 = vmatprep.mubr.bf16.mxu0 0
        %3556 = vmatmul.mubr.bf16.gmra.mrb[0].mxu0 %v3277
        %v3557 = vpop.f32.mrb[0].mxu0
        %v3558 = vadd.f32 0.0, %v3557
        %v3559 = vpop.f32.mrb[0].mxu0
        %v3560 = vadd.f32 0.0, %v3559
        %v3561 = vpop.f32.mrb[0].mxu0
        %v3562 = vadd.f32 0.0, %v3561
        %v3563 = vpop.f32.mrb[0].mxu0
        %v3564 = vadd.f32 0.0, %v3563
        %3565 = vmatprep.mubr.bf16.mxu0 0
        %3566 = vmatmul.mubr.bf16.gmra.mrb[0].mxu0 %v3278
        %v3567 = vpop.f32.mrb[0].mxu0
        %v3568 = vadd.f32 0.0, %v3567
        %v3569 = vpop.f32.mrb[0].mxu0
        %v3570 = vadd.f32 0.0, %v3569
        %v3571 = vpop.f32.mrb[0].mxu0
        %v3572 = vadd.f32 0.0, %v3571
        %v3573 = vpop.f32.mrb[0].mxu0
        %v3574 = vadd.f32 0.0, %v3573
        %3575 = vmatprep.mubr.bf16.mxu0 0
        %3576 = vmatmul.mubr.bf16.gmra.mrb[0].mxu0 %v3279
        %v3577 = vpop.f32.mrb[0].mxu0
        %v3578 = vadd.f32 0.0, %v3577
        %v3579 = vpop.f32.mrb[0].mxu0
        %v3580 = vadd.f32 0.0, %v3579
        %v3581 = vpop.f32.mrb[0].mxu0
        %v3582 = vadd.f32 0.0, %v3581
        %v3583 = vpop.f32.mrb[0].mxu0
        %v3584 = vadd.f32 0.0, %v3583
        %3585 = vmatprep.mubr.bf16.mxu0 0
        %3586 = vmatmul.mubr.bf16.gmra.mrb[0].mxu0 %v3280
        %v3587 = vpop.f32.mrb[0].mxu0
        %v3588 = vadd.f32 0.0, %v3587
        %v3589 = vpop.f32.mrb[0].mxu0
        %v3590 = vadd.f32 0.0, %v3589
        %v3591 = vpop.f32.mrb[0].mxu0
        %v3592 = vadd.f32 0.0, %v3591
        %v3593 = vpop.f32.mrb[0].mxu0
        %v3594 = vadd.f32 0.0, %v3593
        %3595 = vmatprep.mubr.bf16.mxu0 0
        %3596 = vmatmul.mubr.bf16.gmra.mrb[0].mxu0 %v3281
        %v3597 = vpop.f32.mrb[0].mxu0
        %v3598 = vadd.f32 0.0, %v3597
        %v3599 = vpop.f32.mrb[0].mxu0
        %v3600 = vadd.f32 0.0, %v3599
        %v3601 = vpop.f32.mrb[0].mxu0
        %v3602 = vadd.f32 0.0, %v3601
        %v3603 = vpop.f32.mrb[0].mxu0
        %v3604 = vadd.f32 0.0, %v3603
        %3605 = vmatprep.mubr.bf16.mxu0 0
        %3606 = vmatmul.mubr.bf16.gmra.mrb[0].mxu0 %v3282
        %v3607 = vpop.f32.mrb[0].mxu0
        %v3608 = vadd.f32 0.0, %v3607
        %v3609 = vpop.f32.mrb[0].mxu0
        %v3610 = vadd.f32 0.0, %v3609
        %v3611 = vpop.f32.mrb[0].mxu0
        %v3612 = vadd.f32 0.0, %v3611
        %v3613 = vpop.f32.mrb[0].mxu0
        %v3614 = vadd.f32 0.0, %v3613
        %3615 = vmatprep.mubr.bf16.mxu0 0
        %3616 = vmatmul.mubr.bf16.gmra.mrb[0].mxu0 %v3283
        %v3617 = vpop.f32.mrb[0].mxu0
        %v3618 = vadd.f32 0.0, %v3617
        %v3619 = vpop.f32.mrb[0].mxu0
        %v3620 = vadd.f32 0.0, %v3619
        %v3621 = vpop.f32.mrb[0].mxu0
        %v3622 = vadd.f32 0.0, %v3621
        %v3623 = vpop.f32.mrb[0].mxu0
        %v3624 = vadd.f32 0.0, %v3623
        %3625 = vmatprep.mubr.bf16.mxu0 0
        %3626 = vmatmul.mubr.bf16.gmra.mrb[0].mxu0 %v3284
        %v3627 = vpop.f32.mrb[0].mxu0
        %v3628 = vadd.f32 0.0, %v3627
        %v3629 = vpop.f32.mrb[0].mxu0
        %v3630 = vadd.f32 0.0, %v3629
        %v3631 = vpop.f32.mrb[0].mxu0
        %v3632 = vadd.f32 0.0, %v3631
        %v3633 = vpop.f32.mrb[0].mxu0
        %v3634 = vadd.f32 0.0, %v3633
        %3635 = vmatprep.mubr.bf16.mxu0 0
        %3636 = vmatmul.mubr.bf16.gmra.mrb[0].mxu0 %v3285
        %v3637 = vpop.f32.mrb[0].mxu0
        %v3638 = vadd.f32 0.0, %v3637
        %v3639 = vpop.f32.mrb[0].mxu0
        %v3640 = vadd.f32 0.0, %v3639
        %v3641 = vpop.f32.mrb[0].mxu0
        %v3642 = vadd.f32 0.0, %v3641
        %v3643 = vpop.f32.mrb[0].mxu0
        %v3644 = vadd.f32 0.0, %v3643
        %3645 = vmatprep.mubr.bf16.mxu0 0
        %3646 = vmatmul.mubr.bf16.gmra.mrb[0].mxu0 %v3286
        %v3647 = vpop.f32.mrb[0].mxu0
        %v3648 = vadd.f32 0.0, %v3647
        %v3649 = vpop.f32.mrb[0].mxu0
        %v3650 = vadd.f32 0.0, %v3649
        %v3651 = vpop.f32.mrb[0].mxu0
        %v3652 = vadd.f32 0.0, %v3651
        %v3653 = vpop.f32.mrb[0].mxu0
        %v3654 = vadd.f32 0.0, %v3653
        %3655 = vdwg.mxu0
        %3656 = vmatprep.subr.bf16.mxu0 %v3402
        %3657 = vmatpush1.bf16.msra.mxu0 %v3401
        %3658 = vmatprep.subr.bf16.mxu0 %v3406
        %3659 = vmatpush1.bf16.msra.mxu0 %v3405
        %3660 = vmatprep.subr.bf16.mxu0 %v3410
        %3661 = vmatpush1.bf16.msra.mxu0 %v3409
        %3662 = vmatprep.subr.bf16.mxu0 %v3414
        %3663 = vmatpush1.bf16.msra.mxu0 %v3413
        %3664 = vmatprep.subr.bf16.mxu0 %v3418
        %3665 = vmatpush1.bf16.msra.mxu0 %v3417
        %3666 = vmatprep.subr.bf16.mxu0 %v3422
        %3667 = vmatpush1.bf16.msra.mxu0 %v3421
        %3668 = vmatprep.subr.bf16.mxu0 %v3426
        %3669 = vmatpush1.bf16.msra.mxu0 %v3425
        %3670 = vmatprep.subr.bf16.mxu0 %v3430
        %3671 = vmatpush1.bf16.msra.mxu0 %v3429
        %3672 = vmatprep.subr.bf16.mxu0 0
        %3673 = vmatpush1.bf16.msra.mxu0 0
        %3674 = vmatprep.subr.bf16.mxu0 0
        %3675 = vmatpush1.bf16.msra.mxu0 0
        %3676 = vmatprep.subr.bf16.mxu0 0
        %3677 = vmatpush1.bf16.msra.mxu0 0
        %3678 = vmatprep.subr.bf16.mxu0 0
        %3679 = vmatpush1.bf16.msra.mxu0 0
        %3680 = vmatprep.subr.bf16.mxu0 0
        %3681 = vmatpush1.bf16.msra.mxu0 0
        %3682 = vmatprep.subr.bf16.mxu0 0
        %3683 = vmatpush1.bf16.msra.mxu0 0
        %3684 = vmatprep.subr.bf16.mxu0 0
        %3685 = vmatpush1.bf16.msra.mxu0 0
        %3686 = vmatprep.subr.bf16.mxu0 0
        %3687 = vmatpush1.bf16.msra.mxu0 0
        %3688 = vmatprep.mubr.bf16.mxu0 0
        %3689 = vmatmul.mubr.bf16.gmra.mrb[0].mxu0 %v3271
        %v3690 = vpop.f32.mrb[0].mxu0
        %v3691 = vadd.f32 0.0, %v3690
        %v3692 = vpop.f32.mrb[0].mxu0
        %v3693 = vadd.f32 0.0, %v3692
        %v3694 = vpop.f32.mrb[0].mxu0
        %v3695 = vadd.f32 0.0, %v3694
        %v3696 = vpop.f32.mrb[0].mxu0
        %v3697 = vadd.f32 0.0, %v3696
        %3698 = vmatprep.mubr.bf16.mxu0 0
        %3699 = vmatmul.mubr.bf16.gmra.mrb[0].mxu0 %v3272
        %v3700 = vpop.f32.mrb[0].mxu0
        %v3701 = vadd.f32 0.0, %v3700
        %v3702 = vpop.f32.mrb[0].mxu0
        %v3703 = vadd.f32 0.0, %v3702
        %v3704 = vpop.f32.mrb[0].mxu0
        %v3705 = vadd.f32 0.0, %v3704
        %v3706 = vpop.f32.mrb[0].mxu0
        %v3707 = vadd.f32 0.0, %v3706
        %3708 = vmatprep.mubr.bf16.mxu0 0
        %3709 = vmatmul.mubr.bf16.gmra.mrb[0].mxu0 %v3273
        %v3710 = vpop.f32.mrb[0].mxu0
        %v3711 = vadd.f32 0.0, %v3710
        %v3712 = vpop.f32.mrb[0].mxu0
        %v3713 = vadd.f32 0.0, %v3712
        %v3714 = vpop.f32.mrb[0].mxu0
        %v3715 = vadd.f32 0.0, %v3714
        %v3716 = vpop.f32.mrb[0].mxu0
        %v3717 = vadd.f32 0.0, %v3716
        %3718 = vmatprep.mubr.bf16.mxu0 0
        %3719 = vmatmul.mubr.bf16.gmra.mrb[0].mxu0 %v3274
        %v3720 = vpop.f32.mrb[0].mxu0
        %v3721 = vadd.f32 0.0, %v3720
        %v3722 = vpop.f32.mrb[0].mxu0
        %v3723 = vadd.f32 0.0, %v3722
        %v3724 = vpop.f32.mrb[0].mxu0
        %v3725 = vadd.f32 0.0, %v3724
        %v3726 = vpop.f32.mrb[0].mxu0
        %v3727 = vadd.f32 0.0, %v3726
        %3728 = vmatprep.mubr.bf16.mxu0 0
        %3729 = vmatmul.mubr.bf16.gmra.mrb[0].mxu0 %v3275
        %v3730 = vpop.f32.mrb[0].mxu0
        %v3731 = vadd.f32 0.0, %v3730
        %v3732 = vpop.f32.mrb[0].mxu0
        %v3733 = vadd.f32 0.0, %v3732
        %v3734 = vpop.f32.mrb[0].mxu0
        %v3735 = vadd.f32 0.0, %v3734
        %v3736 = vpop.f32.mrb[0].mxu0
        %v3737 = vadd.f32 0.0, %v3736
        %3738 = vmatprep.mubr.bf16.mxu0 0
        %3739 = vmatmul.mubr.bf16.gmra.mrb[0].mxu0 %v3276
        %v3740 = vpop.f32.mrb[0].mxu0
        %v3741 = vadd.f32 0.0, %v3740
        %v3742 = vpop.f32.mrb[0].mxu0
        %v3743 = vadd.f32 0.0, %v3742
        %v3744 = vpop.f32.mrb[0].mxu0
        %v3745 = vadd.f32 0.0, %v3744
        %v3746 = vpop.f32.mrb[0].mxu0
        %v3747 = vadd.f32 0.0, %v3746
        %3748 = vmatprep.mubr.bf16.mxu0 0
        %3749 = vmatmul.mubr.bf16.gmra.mrb[0].mxu0 %v3277
        %v3750 = vpop.f32.mrb[0].mxu0
        %v3751 = vadd.f32 0.0, %v3750
        %v3752 = vpop.f32.mrb[0].mxu0
        %v3753 = vadd.f32 0.0, %v3752
        %v3754 = vpop.f32.mrb[0].mxu0
        %v3755 = vadd.f32 0.0, %v3754
        %v3756 = vpop.f32.mrb[0].mxu0
        %v3757 = vadd.f32 0.0, %v3756
        %3758 = vmatprep.mubr.bf16.mxu0 0
        %3759 = vmatmul.mubr.bf16.gmra.mrb[0].mxu0 %v3278
        %v3760 = vpop.f32.mrb[0].mxu0
        %v3761 = vadd.f32 0.0, %v3760
        %v3762 = vpop.f32.mrb[0].mxu0
        %v3763 = vadd.f32 0.0, %v3762
        %v3764 = vpop.f32.mrb[0].mxu0
        %v3765 = vadd.f32 0.0, %v3764
        %v3766 = vpop.f32.mrb[0].mxu0
        %v3767 = vadd.f32 0.0, %v3766
        %3768 = vmatprep.mubr.bf16.mxu0 0
        %3769 = vmatmul.mubr.bf16.gmra.mrb[0].mxu0 %v3279
        %v3770 = vpop.f32.mrb[0].mxu0
        %v3771 = vadd.f32 0.0, %v3770
        %v3772 = vpop.f32.mrb[0].mxu0
        %v3773 = vadd.f32 0.0, %v3772
        %v3774 = vpop.f32.mrb[0].mxu0
        %v3775 = vadd.f32 0.0, %v3774
        %v3776 = vpop.f32.mrb[0].mxu0
        %v3777 = vadd.f32 0.0, %v3776
        %3778 = vmatprep.mubr.bf16.mxu0 0
        %3779 = vmatmul.mubr.bf16.gmra.mrb[0].mxu0 %v3280
        %v3780 = vpop.f32.mrb[0].mxu0
        %v3781 = vadd.f32 0.0, %v3780
        %v3782 = vpop.f32.mrb[0].mxu0
        %v3783 = vadd.f32 0.0, %v3782
        %v3784 = vpop.f32.mrb[0].mxu0
        %v3785 = vadd.f32 0.0, %v3784
        %v3786 = vpop.f32.mrb[0].mxu0
        %v3787 = vadd.f32 0.0, %v3786
        %3788 = vmatprep.mubr.bf16.mxu0 0
        %3789 = vmatmul.mubr.bf16.gmra.mrb[0].mxu0 %v3281
        %v3790 = vpop.f32.mrb[0].mxu0
        %v3791 = vadd.f32 0.0, %v3790
        %v3792 = vpop.f32.mrb[0].mxu0
        %v3793 = vadd.f32 0.0, %v3792
        %v3794 = vpop.f32.mrb[0].mxu0
        %v3795 = vadd.f32 0.0, %v3794
        %v3796 = vpop.f32.mrb[0].mxu0
        %v3797 = vadd.f32 0.0, %v3796
        %3798 = vmatprep.mubr.bf16.mxu0 0
        %3799 = vmatmul.mubr.bf16.gmra.mrb[0].mxu0 %v3282
        %v3800 = vpop.f32.mrb[0].mxu0
        %v3801 = vadd.f32 0.0, %v3800
        %v3802 = vpop.f32.mrb[0].mxu0
        %v3803 = vadd.f32 0.0, %v3802
        %v3804 = vpop.f32.mrb[0].mxu0
        %v3805 = vadd.f32 0.0, %v3804
        %v3806 = vpop.f32.mrb[0].mxu0
        %v3807 = vadd.f32 0.0, %v3806
        %3808 = vmatprep.mubr.bf16.mxu0 0
        %3809 = vmatmul.mubr.bf16.gmra.mrb[0].mxu0 %v3283
        %v3810 = vpop.f32.mrb[0].mxu0
        %v3811 = vadd.f32 0.0, %v3810
        %v3812 = vpop.f32.mrb[0].mxu0
        %v3813 = vadd.f32 0.0, %v3812
        %v3814 = vpop.f32.mrb[0].mxu0
        %v3815 = vadd.f32 0.0, %v3814
        %v3816 = vpop.f32.mrb[0].mxu0
        %v3817 = vadd.f32 0.0, %v3816
        %3818 = vmatprep.mubr.bf16.mxu0 0
        %3819 = vmatmul.mubr.bf16.gmra.mrb[0].mxu0 %v3284
        %v3820 = vpop.f32.mrb[0].mxu0
        %v3821 = vadd.f32 0.0, %v3820
        %v3822 = vpop.f32.mrb[0].mxu0
        %v3823 = vadd.f32 0.0, %v3822
        %v3824 = vpop.f32.mrb[0].mxu0
        %v3825 = vadd.f32 0.0, %v3824
        %v3826 = vpop.f32.mrb[0].mxu0
        %v3827 = vadd.f32 0.0, %v3826
        %3828 = vmatprep.mubr.bf16.mxu0 0
        %3829 = vmatmul.mubr.bf16.gmra.mrb[0].mxu0 %v3285
        %v3830 = vpop.f32.mrb[0].mxu0
        %v3831 = vadd.f32 0.0, %v3830
        %v3832 = vpop.f32.mrb[0].mxu0
        %v3833 = vadd.f32 0.0, %v3832
        %v3834 = vpop.f32.mrb[0].mxu0
        %v3835 = vadd.f32 0.0, %v3834
        %v3836 = vpop.f32.mrb[0].mxu0
        %v3837 = vadd.f32 0.0, %v3836
        %3838 = vmatprep.mubr.bf16.mxu0 0
        %3839 = vmatmul.mubr.bf16.gmra.mrb[0].mxu0 %v3286
        %v3840 = vpop.f32.mrb[0].mxu0
        %v3841 = vadd.f32 0.0, %v3840
        %v3842 = vpop.f32.mrb[0].mxu0
        %v3843 = vadd.f32 0.0, %v3842
        %v3844 = vpop.f32.mrb[0].mxu0
        %v3845 = vadd.f32 0.0, %v3844
        %v3846 = vpop.f32.mrb[0].mxu0
        %v3847 = vadd.f32 0.0, %v3846
        %3848 = vdwg.mxu0
        %v3849 = vadd.f32 %v2743, %v3498
        %v3850 = vadd.f32 %v2744, %v3502
        %v3851 = vadd.f32 %v2745, %v3508
        %v3852 = vadd.f32 %v2746, %v3512
        %v3853 = vadd.f32 %v2747, %v3518
        %v3854 = vadd.f32 %v2748, %v3522
        %v3855 = vadd.f32 %v2749, %v3528
        %v3856 = vadd.f32 %v2750, %v3532
        %v3857 = vadd.f32 %v2751, %v3538
        %v3858 = vadd.f32 %v2752, %v3542
        %v3859 = vadd.f32 %v2753, %v3548
        %v3860 = vadd.f32 %v2754, %v3552
        %v3861 = vadd.f32 %v2755, %v3558
        %v3862 = vadd.f32 %v2756, %v3562
        %v3863 = vadd.f32 %v2757, %v3568
        %v3864 = vadd.f32 %v2758, %v3572
        %v3865 = vadd.f32 %v2759, %v3578
        %v3866 = vadd.f32 %v2760, %v3582
        %v3867 = vadd.f32 %v2761, %v3588
        %v3868 = vadd.f32 %v2762, %v3592
        %v3869 = vadd.f32 %v2763, %v3598
        %v3870 = vadd.f32 %v2764, %v3602
        %v3871 = vadd.f32 %v2765, %v3608
        %v3872 = vadd.f32 %v2766, %v3612
        %v3873 = vadd.f32 %v2767, %v3618
        %v3874 = vadd.f32 %v2768, %v3622
        %v3875 = vadd.f32 %v2769, %v3628
        %v3876 = vadd.f32 %v2770, %v3632
        %v3877 = vadd.f32 %v2771, %v3638
        %v3878 = vadd.f32 %v2772, %v3642
        %v3879 = vadd.f32 %v2773, %v3648
        %v3880 = vadd.f32 %v2774, %v3652
        %v3881 = vadd.f32 %v2294, %v3500
        %v3882 = vadd.f32 %v2295, %v3504
        %v3883 = vadd.f32 %v2296, %v3510
        %v3884 = vadd.f32 %v2297, %v3514
        %v3885 = vadd.f32 %v2298, %v3520
        %v3886 = vadd.f32 %v2299, %v3524
        %v3887 = vadd.f32 %v2300, %v3530
        %v3888 = vadd.f32 %v2301, %v3534
        %v3889 = vadd.f32 %v2302, %v3540
        %v3890 = vadd.f32 %v2303, %v3544
        %v3891 = vadd.f32 %v2304, %v3550
        %v3892 = vadd.f32 %v2305, %v3554
        %v3893 = vadd.f32 %v2306, %v3560
        %v3894 = vadd.f32 %v2307, %v3564
        %v3895 = vadd.f32 %v2308, %v3570
        %v3896 = vadd.f32 %v2309, %v3574
        %v3897 = vadd.f32 %v2310, %v3580
        %v3898 = vadd.f32 %v2311, %v3584
        %v3899 = vadd.f32 %v2312, %v3590
        %v3900 = vadd.f32 %v2313, %v3594
        %v3901 = vadd.f32 %v2314, %v3600
        %v3902 = vadd.f32 %v2315, %v3604
        %v3903 = vadd.f32 %v2316, %v3610
        %v3904 = vadd.f32 %v2317, %v3614
        %v3905 = vadd.f32 %v2318, %v3620
        %v3906 = vadd.f32 %v2319, %v3624
        %v3907 = vadd.f32 %v2320, %v3630
        %v3908 = vadd.f32 %v2321, %v3634
        %v3909 = vadd.f32 %v2322, %v3640
        %v3910 = vadd.f32 %v2323, %v3644
        %v3911 = vadd.f32 %v2324, %v3650
        %v3912 = vadd.f32 %v2325, %v3654
        %v3913 = vadd.f32 %v2587, %v3691
        %v3914 = vadd.f32 %v2591, %v3695
        %v3915 = vadd.f32 %v2597, %v3701
        %v3916 = vadd.f32 %v2601, %v3705
        %v3917 = vadd.f32 %v2607, %v3711
        %v3918 = vadd.f32 %v2611, %v3715
        %v3919 = vadd.f32 %v2617, %v3721
        %v3920 = vadd.f32 %v2621, %v3725
        %v3921 = vadd.f32 %v2627, %v3731
        %v3922 = vadd.f32 %v2631, %v3735
        %v3923 = vadd.f32 %v2637, %v3741
        %v3924 = vadd.f32 %v2641, %v3745
        %v3925 = vadd.f32 %v2647, %v3751
        %v3926 = vadd.f32 %v2651, %v3755
        %v3927 = vadd.f32 %v2657, %v3761
        %v3928 = vadd.f32 %v2661, %v3765
        %v3929 = vadd.f32 %v2667, %v3771
        %v3930 = vadd.f32 %v2671, %v3775
        %v3931 = vadd.f32 %v2677, %v3781
        %v3932 = vadd.f32 %v2681, %v3785
        %v3933 = vadd.f32 %v2687, %v3791
        %v3934 = vadd.f32 %v2691, %v3795
        %v3935 = vadd.f32 %v2697, %v3801
        %v3936 = vadd.f32 %v2701, %v3805
        %v3937 = vadd.f32 %v2707, %v3811
        %v3938 = vadd.f32 %v2711, %v3815
        %v3939 = vadd.f32 %v2717, %v3821
        %v3940 = vadd.f32 %v2721, %v3825
        %v3941 = vadd.f32 %v2727, %v3831
        %v3942 = vadd.f32 %v2731, %v3835
        %v3943 = vadd.f32 %v2737, %v3841
        %v3944 = vadd.f32 %v2741, %v3845
        %v3945 = vld [vmem:[%s614] sm:$0xe]
        %v3946 = vld [vmem:[%s614 + $0xc] sm:$0xe]
        %v3947 = vld [vmem:[%s614 + $0x18] sm:$0xe]
        %v3948 = vld [vmem:[%s614 + $0x24] sm:$0xe]
        %v3949 = vld [vmem:[%s614 + $0x30] sm:$0xe]
        %v3950 = vld [vmem:[%s614 + $0x3c] sm:$0xe]
        %v3951 = vld [vmem:[%s614 + $0x48] sm:$0xe]
        %v3952 = vld [vmem:[%s614 + $0x54] sm:$0xe]
        %v3953 = vld [vmem:[%s614 + $0x60] sm:$0xe]
        %v3954 = vld [vmem:[%s614 + $0x6c] sm:$0xe]
        %v3955 = vld [vmem:[%s614 + $0x78] sm:$0xe]
        %v3956 = vld [vmem:[%s614 + $0x84] sm:$0xe]
        %v3957 = vld [vmem:[%s614 + $0x90] sm:$0xe]
        %v3958 = vld [vmem:[%s614 + $0x9c] sm:$0xe]
        %v3959 = vld [vmem:[%s614 + $0xa8] sm:$0xe]
        %v3960 = vld [vmem:[%s614 + $0xb4] sm:$0xe]
        %v4009 = vrot.slane %v3945, 5
        %v4010 = vrot.slane %v4009, 4
        %v4011 = vrot.slane %v2776, 5
        %v4012 = vsel %vm1892, %v4010, %v4011
        %v4013 = vrot.slane %v4011, 4
        %v4014 = vrot.slane %v2777, 5
        %v4015 = vsel %vm1892, %v4013, %v4014
        %v4016 = vrot.slane %v3946, 5
        %v4017 = vrot.slane %v4016, 4
        %v4018 = vrot.slane %v2779, 5
        %v4019 = vsel %vm1892, %v4017, %v4018
        %v4020 = vrot.slane %v4018, 4
        %v4021 = vrot.slane %v2780, 5
        %v4022 = vsel %vm1892, %v4020, %v4021
        %v4023 = vrot.slane %v3947, 5
        %v4024 = vrot.slane %v4023, 4
        %v4025 = vrot.slane %v2782, 5
        %v4026 = vsel %vm1892, %v4024, %v4025
        %v4027 = vrot.slane %v4025, 4
        %v4028 = vrot.slane %v2783, 5
        %v4029 = vsel %vm1892, %v4027, %v4028
        %v4030 = vrot.slane %v3948, 5
        %v4031 = vrot.slane %v4030, 4
        %v4032 = vrot.slane %v2785, 5
        %v4033 = vsel %vm1892, %v4031, %v4032
        %v4034 = vrot.slane %v4032, 4
        %v4035 = vrot.slane %v2786, 5
        %v4036 = vsel %vm1892, %v4034, %v4035
        %v4037 = vrot.slane %v3949, 5
        %v4038 = vrot.slane %v4037, 4
        %v4039 = vrot.slane %v2788, 5
        %v4040 = vsel %vm1892, %v4038, %v4039
        %v4041 = vrot.slane %v4039, 4
        %v4042 = vrot.slane %v2789, 5
        %v4043 = vsel %vm1892, %v4041, %v4042
        %v4044 = vrot.slane %v3950, 5
        %v4045 = vrot.slane %v4044, 4
        %v4046 = vrot.slane %v2791, 5
        %v4047 = vsel %vm1892, %v4045, %v4046
        %v4048 = vrot.slane %v4046, 4
        %v4049 = vrot.slane %v2792, 5
        %v4050 = vsel %vm1892, %v4048, %v4049
        %v4051 = vrot.slane %v3951, 5
        %v4052 = vrot.slane %v4051, 4
        %v4053 = vrot.slane %v2794, 5
        %v4054 = vsel %vm1892, %v4052, %v4053
        %v4055 = vrot.slane %v4053, 4
        %v4056 = vrot.slane %v2795, 5
        %v4057 = vsel %vm1892, %v4055, %v4056
        %v4058 = vrot.slane %v3952, 5
        %v4059 = vrot.slane %v4058, 4
        %v4060 = vrot.slane %v2797, 5
        %v4061 = vsel %vm1892, %v4059, %v4060
        %v4062 = vrot.slane %v4060, 4
        %v4063 = vrot.slane %v2798, 5
        %v4064 = vsel %vm1892, %v4062, %v4063
        %v4065 = vrot.slane %v3953, 5
        %v4066 = vrot.slane %v4065, 4
        %v4067 = vrot.slane %v2800, 5
        %v4068 = vsel %vm1892, %v4066, %v4067
        %v4069 = vrot.slane %v4067, 4
        %v4070 = vrot.slane %v2801, 5
        %v4071 = vsel %vm1892, %v4069, %v4070
        %v4072 = vrot.slane %v3954, 5
        %v4073 = vrot.slane %v4072, 4
        %v4074 = vrot.slane %v2803, 5
        %v4075 = vsel %vm1892, %v4073, %v4074
        %v4076 = vrot.slane %v4074, 4
        %v4077 = vrot.slane %v2804, 5
        %v4078 = vsel %vm1892, %v4076, %v4077
        %v4079 = vrot.slane %v3955, 5
        %v4080 = vrot.slane %v4079, 4
        %v4081 = vrot.slane %v2806, 5
        %v4082 = vsel %vm1892, %v4080, %v4081
        %v4083 = vrot.slane %v4081, 4
        %v4084 = vrot.slane %v2807, 5
        %v4085 = vsel %vm1892, %v4083, %v4084
        %v4086 = vrot.slane %v3956, 5
        %v4087 = vrot.slane %v4086, 4
        %v4088 = vrot.slane %v2809, 5
        %v4089 = vsel %vm1892, %v4087, %v4088
        %v4090 = vrot.slane %v4088, 4
        %v4091 = vrot.slane %v2810, 5
        %v4092 = vsel %vm1892, %v4090, %v4091
        %v4093 = vrot.slane %v3957, 5
        %v4094 = vrot.slane %v4093, 4
        %v4095 = vrot.slane %v2812, 5
        %v4096 = vsel %vm1892, %v4094, %v4095
        %v4097 = vrot.slane %v4095, 4
        %v4098 = vrot.slane %v2813, 5
        %v4099 = vsel %vm1892, %v4097, %v4098
        %v4100 = vrot.slane %v3958, 5
        %v4101 = vrot.slane %v4100, 4
        %v4102 = vrot.slane %v2815, 5
        %v4103 = vsel %vm1892, %v4101, %v4102
        %v4104 = vrot.slane %v4102, 4
        %v4105 = vrot.slane %v2816, 5
        %v4106 = vsel %vm1892, %v4104, %v4105
        %v4107 = vrot.slane %v3959, 5
        %v4108 = vrot.slane %v4107, 4
        %v4109 = vrot.slane %v2818, 5
        %v4110 = vsel %vm1892, %v4108, %v4109
        %v4111 = vrot.slane %v4109, 4
        %v4112 = vrot.slane %v2819, 5
        %v4113 = vsel %vm1892, %v4111, %v4112
        %v4114 = vrot.slane %v3960, 5
        %v4115 = vrot.slane %v4114, 4
        %v4116 = vrot.slane %v2821, 5
        %v4117 = vsel %vm1892, %v4115, %v4116
        %v4118 = vrot.slane %v4116, 4
        %v4119 = vrot.slane %v2822, 5
        %v4120 = vsel %vm1892, %v4118, %v4119
        %v4121 = vld [vmem:[#allocation6 + $0x28] sm:$0xff]
        %v4122 = vld [vmem:[#allocation6 + $0x68] sm:$0xff]
        %v4123 = vld [vmem:[#allocation6 + $0xa8] sm:$0xff]
        %v4124 = vld [vmem:[#allocation6 + $0xe8] sm:$0xff]
        %v4125 = vld [vmem:[#allocation6 + $0x128] sm:$0xff]
        %v4126 = vld [vmem:[#allocation6 + $0x168] sm:$0xff]
        %v4127 = vld [vmem:[#allocation6 + $0x1a8] sm:$0xff]
        %v4128 = vld [vmem:[#allocation6 + $0x1e8] sm:$0xff]
        %v4129 = vld [vmem:[#allocation6 + $0x228] sm:$0xff]
        %v4130 = vld [vmem:[#allocation6 + $0x268] sm:$0xff]
        %v4131 = vld [vmem:[#allocation6 + $0x2a8] sm:$0xff]
        %v4132 = vld [vmem:[#allocation6 + $0x2e8] sm:$0xff]
        %v4133 = vld [vmem:[#allocation6 + $0x328] sm:$0xff]
        %v4134 = vld [vmem:[#allocation6 + $0x368] sm:$0xff]
        %v4135 = vld [vmem:[#allocation6 + $0x3a8] sm:$0xff]
        %v4136 = vld [vmem:[#allocation6 + $0x3e8] sm:$0xff]
        %v4137 = vunpack.c.l.b16 %v4012
        %v4138 = vunpack.c.l.b16 %v4015
        %v4139 = vunpack.c.l.b16 %v4019
        %v4140 = vunpack.c.l.b16 %v4022
        %v4141 = vunpack.c.l.b16 %v4026
        %v4142 = vunpack.c.l.b16 %v4029
        %v4143 = vunpack.c.l.b16 %v4033
        %v4144 = vunpack.c.l.b16 %v4036
        %v4145 = vunpack.c.l.b16 %v4040
        %v4146 = vunpack.c.l.b16 %v4043
        %v4147 = vunpack.c.l.b16 %v4047
        %v4148 = vunpack.c.l.b16 %v4050
        %v4149 = vunpack.c.l.b16 %v4054
        %v4150 = vunpack.c.l.b16 %v4057
        %v4151 = vunpack.c.l.b16 %v4061
        %v4152 = vunpack.c.l.b16 %v4064
        %v4153 = vunpack.c.l.b16 %v4068
        %v4154 = vunpack.c.l.b16 %v4071
        %v4155 = vunpack.c.l.b16 %v4075
        %v4156 = vunpack.c.l.b16 %v4078
        %v4157 = vunpack.c.l.b16 %v4082
        %v4158 = vunpack.c.l.b16 %v4085
        %v4159 = vunpack.c.l.b16 %v4089
        %v4160 = vunpack.c.l.b16 %v4092
        %v4161 = vunpack.c.l.b16 %v4096
        %v4162 = vunpack.c.l.b16 %v4099
        %v4163 = vunpack.c.l.b16 %v4103
        %v4164 = vunpack.c.l.b16 %v4106
        %v4165 = vunpack.c.l.b16 %v4110
        %v4166 = vunpack.c.l.b16 %v4113
        %v4167 = vunpack.c.l.b16 %v4117
        %v4168 = vunpack.c.l.b16 %v4120
        %v4169 = vpack.c.b16 %v4138, %v4137
        %v4170 = vpack.c.b16 %v4140, %v4139
        %v4171 = vpack.c.b16 %v4142, %v4141
        %v4172 = vpack.c.b16 %v4144, %v4143
        %v4173 = vpack.c.b16 %v4146, %v4145
        %v4174 = vpack.c.b16 %v4148, %v4147
        %v4175 = vpack.c.b16 %v4150, %v4149
        %v4176 = vpack.c.b16 %v4152, %v4151
        %v4177 = vpack.c.b16 %v4154, %v4153
        %v4178 = vpack.c.b16 %v4156, %v4155
        %v4179 = vpack.c.b16 %v4158, %v4157
        %v4180 = vpack.c.b16 %v4160, %v4159
        %v4181 = vpack.c.b16 %v4162, %v4161
        %v4182 = vpack.c.b16 %v4164, %v4163
        %v4183 = vpack.c.b16 %v4166, %v4165
        %v4184 = vpack.c.b16 %v4168, %v4167
        %v4217 = vunpack.c.l.b16 %v4121
        %v4218 = vunpack.c.h.b16 %v4121
        %v4219 = vunpack.c.l.b16 %v4122
        %v4220 = vunpack.c.h.b16 %v4122
        %v4221 = vunpack.c.l.b16 %v4123
        %v4222 = vunpack.c.h.b16 %v4123
        %v4223 = vunpack.c.l.b16 %v4124
        %v4224 = vunpack.c.h.b16 %v4124
        %v4225 = vunpack.c.l.b16 %v4125
        %v4226 = vunpack.c.h.b16 %v4125
        %v4227 = vunpack.c.l.b16 %v4126
        %v4228 = vunpack.c.h.b16 %v4126
        %v4229 = vunpack.c.l.b16 %v4127
        %v4230 = vunpack.c.h.b16 %v4127
        %v4231 = vunpack.c.l.b16 %v4128
        %v4232 = vunpack.c.h.b16 %v4128
        %v4233 = vunpack.c.l.b16 %v4129
        %v4234 = vunpack.c.h.b16 %v4129
        %v4235 = vunpack.c.l.b16 %v4130
        %v4236 = vunpack.c.h.b16 %v4130
        %v4237 = vunpack.c.l.b16 %v4131
        %v4238 = vunpack.c.h.b16 %v4131
        %v4239 = vunpack.c.l.b16 %v4132
        %v4240 = vunpack.c.h.b16 %v4132
        %v4241 = vunpack.c.l.b16 %v4133
        %v4242 = vunpack.c.h.b16 %v4133
        %v4243 = vunpack.c.l.b16 %v4134
        %v4244 = vunpack.c.h.b16 %v4134
        %v4245 = vunpack.c.l.b16 %v4135
        %v4246 = vunpack.c.h.b16 %v4135
        %v4247 = vunpack.c.l.b16 %v4136
        %v4248 = vunpack.c.h.b16 %v4136
        %v4249 = vpack.c.b16 %v4219, %v4217
        %v4250 = vpack.c.b16 %v4220, %v4218
        %v4251 = vpack.c.b16 %v4223, %v4221
        %v4252 = vpack.c.b16 %v4224, %v4222
        %v4253 = vpack.c.b16 %v4227, %v4225
        %v4254 = vpack.c.b16 %v4228, %v4226
        %v4255 = vpack.c.b16 %v4231, %v4229
        %v4256 = vpack.c.b16 %v4232, %v4230
        %v4257 = vpack.c.b16 %v4235, %v4233
        %v4258 = vpack.c.b16 %v4236, %v4234
        %v4259 = vpack.c.b16 %v4239, %v4237
        %v4260 = vpack.c.b16 %v4240, %v4238
        %v4261 = vpack.c.b16 %v4243, %v4241
        %v4262 = vpack.c.b16 %v4244, %v4242
        %v4263 = vpack.c.b16 %v4247, %v4245
        %v4264 = vpack.c.b16 %v4248, %v4246
        %4281 = vmatprep.subr.bf16.mxu0 %v4250
        %4282 = vmatpush1.bf16.msra.mxu0 %v4249
        %4283 = vmatprep.subr.bf16.mxu0 %v4252
        %4284 = vmatpush1.bf16.msra.mxu0 %v4251
        %4285 = vmatprep.subr.bf16.mxu0 %v4254
        %4286 = vmatpush1.bf16.msra.mxu0 %v4253
        %4287 = vmatprep.subr.bf16.mxu0 %v4256
        %4288 = vmatpush1.bf16.msra.mxu0 %v4255
        %4289 = vmatprep.subr.bf16.mxu0 %v4258
        %4290 = vmatpush1.bf16.msra.mxu0 %v4257
        %4291 = vmatprep.subr.bf16.mxu0 %v4260
        %4292 = vmatpush1.bf16.msra.mxu0 %v4259
        %4293 = vmatprep.subr.bf16.mxu0 %v4262
        %4294 = vmatpush1.bf16.msra.mxu0 %v4261
        %4295 = vmatprep.subr.bf16.mxu0 %v4264
        %4296 = vmatpush1.bf16.msra.mxu0 %v4263
        %4297 = vmatprep.subr.bf16.mxu0 0
        %4298 = vmatpush1.bf16.msra.mxu0 0
        %4299 = vmatprep.subr.bf16.mxu0 0
        %4300 = vmatpush1.bf16.msra.mxu0 0
        %4301 = vmatprep.subr.bf16.mxu0 0
        %4302 = vmatpush1.bf16.msra.mxu0 0
        %4303 = vmatprep.subr.bf16.mxu0 0
        %4304 = vmatpush1.bf16.msra.mxu0 0
        %4305 = vmatprep.subr.bf16.mxu0 0
        %4306 = vmatpush1.bf16.msra.mxu0 0
        %4307 = vmatprep.subr.bf16.mxu0 0
        %4308 = vmatpush1.bf16.msra.mxu0 0
        %4309 = vmatprep.subr.bf16.mxu0 0
        %4310 = vmatpush1.bf16.msra.mxu0 0
        %4311 = vmatprep.subr.bf16.mxu0 0
        %4312 = vmatpush1.bf16.msra.mxu0 0
        %4313 = vmatprep.mubr.bf16.mxu0 0
        %4314 = vmatmul.mubr.bf16.gmra.mrb[0].mxu0 %v4169
        %v4315 = vpop.f32.mrb[0].mxu0
        %v4316 = vadd.f32 0.0, %v4315
        %v4317 = vpop.f32.mrb[0].mxu0
        %v4318 = vadd.f32 0.0, %v4317
        %v4319 = vpop.f32.mrb[0].mxu0
        %v4320 = vadd.f32 0.0, %v4319
        %v4321 = vpop.f32.mrb[0].mxu0
        %v4322 = vadd.f32 0.0, %v4321
        %4323 = vmatprep.mubr.bf16.mxu0 0
        %4324 = vmatmul.mubr.bf16.gmra.mrb[0].mxu0 %v4170
        %v4325 = vpop.f32.mrb[0].mxu0
        %v4326 = vadd.f32 0.0, %v4325
        %v4327 = vpop.f32.mrb[0].mxu0
        %v4328 = vadd.f32 0.0, %v4327
        %v4329 = vpop.f32.mrb[0].mxu0
        %v4330 = vadd.f32 0.0, %v4329
        %v4331 = vpop.f32.mrb[0].mxu0
        %v4332 = vadd.f32 0.0, %v4331
        %4333 = vmatprep.mubr.bf16.mxu0 0
        %4334 = vmatmul.mubr.bf16.gmra.mrb[0].mxu0 %v4171
        %v4335 = vpop.f32.mrb[0].mxu0
        %v4336 = vadd.f32 0.0, %v4335
        %v4337 = vpop.f32.mrb[0].mxu0
        %v4338 = vadd.f32 0.0, %v4337
        %v4339 = vpop.f32.mrb[0].mxu0
        %v4340 = vadd.f32 0.0, %v4339
        %v4341 = vpop.f32.mrb[0].mxu0
        %v4342 = vadd.f32 0.0, %v4341
        %4343 = vmatprep.mubr.bf16.mxu0 0
        %4344 = vmatmul.mubr.bf16.gmra.mrb[0].mxu0 %v4172
        %v4345 = vpop.f32.mrb[0].mxu0
        %v4346 = vadd.f32 0.0, %v4345
        %v4347 = vpop.f32.mrb[0].mxu0
        %v4348 = vadd.f32 0.0, %v4347
        %v4349 = vpop.f32.mrb[0].mxu0
        %v4350 = vadd.f32 0.0, %v4349
        %v4351 = vpop.f32.mrb[0].mxu0
        %v4352 = vadd.f32 0.0, %v4351
        %4353 = vmatprep.mubr.bf16.mxu0 0
        %4354 = vmatmul.mubr.bf16.gmra.mrb[0].mxu0 %v4173
        %v4355 = vpop.f32.mrb[0].mxu0
        %v4356 = vadd.f32 0.0, %v4355
        %v4357 = vpop.f32.mrb[0].mxu0
        %v4358 = vadd.f32 0.0, %v4357
        %v4359 = vpop.f32.mrb[0].mxu0
        %v4360 = vadd.f32 0.0, %v4359
        %v4361 = vpop.f32.mrb[0].mxu0
        %v4362 = vadd.f32 0.0, %v4361
        %4363 = vmatprep.mubr.bf16.mxu0 0
        %4364 = vmatmul.mubr.bf16.gmra.mrb[0].mxu0 %v4174
        %v4365 = vpop.f32.mrb[0].mxu0
        %v4366 = vadd.f32 0.0, %v4365
        %v4367 = vpop.f32.mrb[0].mxu0
        %v4368 = vadd.f32 0.0, %v4367
        %v4369 = vpop.f32.mrb[0].mxu0
        %v4370 = vadd.f32 0.0, %v4369
        %v4371 = vpop.f32.mrb[0].mxu0
        %v4372 = vadd.f32 0.0, %v4371
        %4373 = vmatprep.mubr.bf16.mxu0 0
        %4374 = vmatmul.mubr.bf16.gmra.mrb[0].mxu0 %v4175
        %v4375 = vpop.f32.mrb[0].mxu0
        %v4376 = vadd.f32 0.0, %v4375
        %v4377 = vpop.f32.mrb[0].mxu0
        %v4378 = vadd.f32 0.0, %v4377
        %v4379 = vpop.f32.mrb[0].mxu0
        %v4380 = vadd.f32 0.0, %v4379
        %v4381 = vpop.f32.mrb[0].mxu0
        %v4382 = vadd.f32 0.0, %v4381
        %4383 = vmatprep.mubr.bf16.mxu0 0
        %4384 = vmatmul.mubr.bf16.gmra.mrb[0].mxu0 %v4176
        %v4385 = vpop.f32.mrb[0].mxu0
        %v4386 = vadd.f32 0.0, %v4385
        %v4387 = vpop.f32.mrb[0].mxu0
        %v4388 = vadd.f32 0.0, %v4387
        %v4389 = vpop.f32.mrb[0].mxu0
        %v4390 = vadd.f32 0.0, %v4389
        %v4391 = vpop.f32.mrb[0].mxu0
        %v4392 = vadd.f32 0.0, %v4391
        %4393 = vmatprep.mubr.bf16.mxu0 0
        %4394 = vmatmul.mubr.bf16.gmra.mrb[0].mxu0 %v4177
        %v4395 = vpop.f32.mrb[0].mxu0
        %v4396 = vadd.f32 0.0, %v4395
        %v4397 = vpop.f32.mrb[0].mxu0
        %v4398 = vadd.f32 0.0, %v4397
        %v4399 = vpop.f32.mrb[0].mxu0
        %v4400 = vadd.f32 0.0, %v4399
        %v4401 = vpop.f32.mrb[0].mxu0
        %v4402 = vadd.f32 0.0, %v4401
        %4403 = vmatprep.mubr.bf16.mxu0 0
        %4404 = vmatmul.mubr.bf16.gmra.mrb[0].mxu0 %v4178
        %v4405 = vpop.f32.mrb[0].mxu0
        %v4406 = vadd.f32 0.0, %v4405
        %v4407 = vpop.f32.mrb[0].mxu0
        %v4408 = vadd.f32 0.0, %v4407
        %v4409 = vpop.f32.mrb[0].mxu0
        %v4410 = vadd.f32 0.0, %v4409
        %v4411 = vpop.f32.mrb[0].mxu0
        %v4412 = vadd.f32 0.0, %v4411
        %4413 = vmatprep.mubr.bf16.mxu0 0
        %4414 = vmatmul.mubr.bf16.gmra.mrb[0].mxu0 %v4179
        %v4415 = vpop.f32.mrb[0].mxu0
        %v4416 = vadd.f32 0.0, %v4415
        %v4417 = vpop.f32.mrb[0].mxu0
        %v4418 = vadd.f32 0.0, %v4417
        %v4419 = vpop.f32.mrb[0].mxu0
        %v4420 = vadd.f32 0.0, %v4419
        %v4421 = vpop.f32.mrb[0].mxu0
        %v4422 = vadd.f32 0.0, %v4421
        %4423 = vmatprep.mubr.bf16.mxu0 0
        %4424 = vmatmul.mubr.bf16.gmra.mrb[0].mxu0 %v4180
        %v4425 = vpop.f32.mrb[0].mxu0
        %v4426 = vadd.f32 0.0, %v4425
        %v4427 = vpop.f32.mrb[0].mxu0
        %v4428 = vadd.f32 0.0, %v4427
        %v4429 = vpop.f32.mrb[0].mxu0
        %v4430 = vadd.f32 0.0, %v4429
        %v4431 = vpop.f32.mrb[0].mxu0
        %v4432 = vadd.f32 0.0, %v4431
        %4433 = vmatprep.mubr.bf16.mxu0 0
        %4434 = vmatmul.mubr.bf16.gmra.mrb[0].mxu0 %v4181
        %v4435 = vpop.f32.mrb[0].mxu0
        %v4436 = vadd.f32 0.0, %v4435
        %v4437 = vpop.f32.mrb[0].mxu0
        %v4438 = vadd.f32 0.0, %v4437
        %v4439 = vpop.f32.mrb[0].mxu0
        %v4440 = vadd.f32 0.0, %v4439
        %v4441 = vpop.f32.mrb[0].mxu0
        %v4442 = vadd.f32 0.0, %v4441
        %4443 = vmatprep.mubr.bf16.mxu0 0
        %4444 = vmatmul.mubr.bf16.gmra.mrb[0].mxu0 %v4182
        %v4445 = vpop.f32.mrb[0].mxu0
        %v4446 = vadd.f32 0.0, %v4445
        %v4447 = vpop.f32.mrb[0].mxu0
        %v4448 = vadd.f32 0.0, %v4447
        %v4449 = vpop.f32.mrb[0].mxu0
        %v4450 = vadd.f32 0.0, %v4449
        %v4451 = vpop.f32.mrb[0].mxu0
        %v4452 = vadd.f32 0.0, %v4451
        %4453 = vmatprep.mubr.bf16.mxu0 0
        %4454 = vmatmul.mubr.bf16.gmra.mrb[0].mxu0 %v4183
        %v4455 = vpop.f32.mrb[0].mxu0
        %v4456 = vadd.f32 0.0, %v4455
        %v4457 = vpop.f32.mrb[0].mxu0
        %v4458 = vadd.f32 0.0, %v4457
        %v4459 = vpop.f32.mrb[0].mxu0
        %v4460 = vadd.f32 0.0, %v4459
        %v4461 = vpop.f32.mrb[0].mxu0
        %v4462 = vadd.f32 0.0, %v4461
        %4463 = vmatprep.mubr.bf16.mxu0 0
        %4464 = vmatmul.mubr.bf16.gmra.mrb[0].mxu0 %v4184
        %v4465 = vpop.f32.mrb[0].mxu0
        %v4466 = vadd.f32 0.0, %v4465
        %v4467 = vpop.f32.mrb[0].mxu0
        %v4468 = vadd.f32 0.0, %v4467
        %v4469 = vpop.f32.mrb[0].mxu0
        %v4470 = vadd.f32 0.0, %v4469
        %v4471 = vpop.f32.mrb[0].mxu0
        %v4472 = vadd.f32 0.0, %v4471
        %4473 = vdwg.mxu0
        %v4474 = vadd.f32 %v3881, %v4316
        %v4475 = vadd.f32 %v3882, %v4320
        %v4476 = vadd.f32 %v3883, %v4326
        %v4477 = vadd.f32 %v3884, %v4330
        %v4478 = vadd.f32 %v3885, %v4336
        %v4479 = vadd.f32 %v3886, %v4340
        %v4480 = vadd.f32 %v3887, %v4346
        %v4481 = vadd.f32 %v3888, %v4350
        %v4482 = vadd.f32 %v3889, %v4356
        %v4483 = vadd.f32 %v3890, %v4360
        %v4484 = vadd.f32 %v3891, %v4366
        %v4485 = vadd.f32 %v3892, %v4370
        %v4486 = vadd.f32 %v3893, %v4376
        %v4487 = vadd.f32 %v3894, %v4380
        %v4488 = vadd.f32 %v3895, %v4386
        %v4489 = vadd.f32 %v3896, %v4390
        %v4490 = vadd.f32 %v3897, %v4396
        %v4491 = vadd.f32 %v3898, %v4400
        %v4492 = vadd.f32 %v3899, %v4406
        %v4493 = vadd.f32 %v3900, %v4410
        %v4494 = vadd.f32 %v3901, %v4416
        %v4495 = vadd.f32 %v3902, %v4420
        %v4496 = vadd.f32 %v3903, %v4426
        %v4497 = vadd.f32 %v3904, %v4430
        %v4498 = vadd.f32 %v3905, %v4436
        %v4499 = vadd.f32 %v3906, %v4440
        %v4500 = vadd.f32 %v3907, %v4446
        %v4501 = vadd.f32 %v3908, %v4450
        %v4502 = vadd.f32 %v3909, %v4456
        %v4503 = vadd.f32 %v3910, %v4460
        %v4504 = vadd.f32 %v3911, %v4466
        %v4505 = vadd.f32 %v3912, %v4470
        %v4506 = vadd.f32 %v3693, %v4318
        %v4507 = vadd.f32 %v3697, %v4322
        %v4508 = vadd.f32 %v3703, %v4328
        %v4509 = vadd.f32 %v3707, %v4332
        %v4510 = vadd.f32 %v3713, %v4338
        %v4511 = vadd.f32 %v3717, %v4342
        %v4512 = vadd.f32 %v3723, %v4348
        %v4513 = vadd.f32 %v3727, %v4352
        %v4514 = vadd.f32 %v3733, %v4358
        %v4515 = vadd.f32 %v3737, %v4362
        %v4516 = vadd.f32 %v3743, %v4368
        %v4517 = vadd.f32 %v3747, %v4372
        %v4518 = vadd.f32 %v3753, %v4378
        %v4519 = vadd.f32 %v3757, %v4382
        %v4520 = vadd.f32 %v3763, %v4388
        %v4521 = vadd.f32 %v3767, %v4392
        %v4522 = vadd.f32 %v3773, %v4398
        %v4523 = vadd.f32 %v3777, %v4402
        %v4524 = vadd.f32 %v3783, %v4408
        %v4525 = vadd.f32 %v3787, %v4412
        %v4526 = vadd.f32 %v3793, %v4418
        %v4527 = vadd.f32 %v3797, %v4422
        %v4528 = vadd.f32 %v3803, %v4428
        %v4529 = vadd.f32 %v3807, %v4432
        %v4530 = vadd.f32 %v3813, %v4438
        %v4531 = vadd.f32 %v3817, %v4442
        %v4532 = vadd.f32 %v3823, %v4448
        %v4533 = vadd.f32 %v3827, %v4452
        %v4534 = vadd.f32 %v3833, %v4458
        %v4535 = vadd.f32 %v3837, %v4462
        %v4536 = vadd.f32 %v3843, %v4468
        %v4537 = vadd.f32 %v3847, %v4472
        %s4538 = scalar_lea.vmem [#allocation2], 24
        %v4539 = vld [vmem:[%s4538] sm:$0xf]
        %v4540 = vld [vmem:[%s4538 + $0x4] sm:$0xf]
        %v4541 = vld [vmem:[%s4538 + $0xc] sm:$0xf]
        %v4542 = vld [vmem:[%s4538 + $0x10] sm:$0xf]
        %v4543 = vld [vmem:[%s4538 + $0x18] sm:$0xf]
        %v4544 = vld [vmem:[%s4538 + $0x1c] sm:$0xf]
        %v4545 = vld [vmem:[%s4538 + $0x24] sm:$0xf]
        %v4546 = vld [vmem:[%s4538 + $0x28] sm:$0xf]
        %v4547 = vld [vmem:[%s4538 + $0x30] sm:$0xf]
        %v4548 = vld [vmem:[%s4538 + $0x34] sm:$0xf]
        %v4549 = vld [vmem:[%s4538 + $0x3c] sm:$0xf]
        %v4550 = vld [vmem:[%s4538 + $0x40] sm:$0xf]
        %v4551 = vld [vmem:[%s4538 + $0x48] sm:$0xf]
        %v4552 = vld [vmem:[%s4538 + $0x4c] sm:$0xf]
        %v4553 = vld [vmem:[%s4538 + $0x54] sm:$0xf]
        %v4554 = vld [vmem:[%s4538 + $0x58] sm:$0xf]
        %v4555 = vld [vmem:[%s4538 + $0x60] sm:$0xf]
        %v4556 = vld [vmem:[%s4538 + $0x64] sm:$0xf]
        %v4557 = vld [vmem:[%s4538 + $0x6c] sm:$0xf]
        %v4558 = vld [vmem:[%s4538 + $0x70] sm:$0xf]
        %v4559 = vld [vmem:[%s4538 + $0x78] sm:$0xf]
        %v4560 = vld [vmem:[%s4538 + $0x7c] sm:$0xf]
        %v4561 = vld [vmem:[%s4538 + $0x84] sm:$0xf]
        %v4562 = vld [vmem:[%s4538 + $0x88] sm:$0xf]
        %v4563 = vld [vmem:[%s4538 + $0x90] sm:$0xf]
        %v4564 = vld [vmem:[%s4538 + $0x94] sm:$0xf]
        %v4565 = vld [vmem:[%s4538 + $0x9c] sm:$0xf]
        %v4566 = vld [vmem:[%s4538 + $0xa0] sm:$0xf]
        %v4567 = vld [vmem:[%s4538 + $0xa8] sm:$0xf]
        %v4568 = vld [vmem:[%s4538 + $0xac] sm:$0xf]
        %v4569 = vld [vmem:[%s4538 + $0xb4] sm:$0xf]
        %v4570 = vld [vmem:[%s4538 + $0xb8] sm:$0xf]
        %v4571 = vld [vmem:[#allocation6 + $0x30] sm:$0xf]
        %v4572 = vld [vmem:[#allocation6 + $0x70] sm:$0xf]
        %v4573 = vld [vmem:[#allocation6 + $0xb0] sm:$0xf]
        %v4574 = vld [vmem:[#allocation6 + $0xf0] sm:$0xf]
        %v4575 = vld [vmem:[#allocation6 + $0x130] sm:$0xf]
        %v4576 = vld [vmem:[#allocation6 + $0x170] sm:$0xf]
        %v4577 = vld [vmem:[#allocation6 + $0x1b0] sm:$0xf]
        %v4578 = vld [vmem:[#allocation6 + $0x1f0] sm:$0xf]
        %v4579 = vld [vmem:[#allocation6 + $0x230] sm:$0xf]
        %v4580 = vld [vmem:[#allocation6 + $0x270] sm:$0xf]
        %v4581 = vld [vmem:[#allocation6 + $0x2b0] sm:$0xf]
        %v4582 = vld [vmem:[#allocation6 + $0x2f0] sm:$0xf]
        %v4583 = vld [vmem:[#allocation6 + $0x330] sm:$0xf]
        %v4584 = vld [vmem:[#allocation6 + $0x370] sm:$0xf]
        %v4585 = vld [vmem:[#allocation6 + $0x3b0] sm:$0xf]
        %v4586 = vld [vmem:[#allocation6 + $0x3f0] sm:$0xf]
        %v4619 = vunpack.c.l.b16 %v4539
        %v4620 = vunpack.c.l.b16 %v4540
        %v4621 = vunpack.c.l.b16 %v4541
        %v4622 = vunpack.c.l.b16 %v4542
        %v4623 = vunpack.c.l.b16 %v4543
        %v4624 = vunpack.c.l.b16 %v4544
        %v4625 = vunpack.c.l.b16 %v4545
        %v4626 = vunpack.c.l.b16 %v4546
        %v4627 = vunpack.c.l.b16 %v4547
        %v4628 = vunpack.c.l.b16 %v4548
        %v4629 = vunpack.c.l.b16 %v4549
        %v4630 = vunpack.c.l.b16 %v4550
        %v4631 = vunpack.c.l.b16 %v4551
        %v4632 = vunpack.c.l.b16 %v4552
        %v4633 = vunpack.c.l.b16 %v4553
        %v4634 = vunpack.c.l.b16 %v4554
        %v4635 = vunpack.c.l.b16 %v4555
        %v4636 = vunpack.c.l.b16 %v4556
        %v4637 = vunpack.c.l.b16 %v4557
        %v4638 = vunpack.c.l.b16 %v4558
        %v4639 = vunpack.c.l.b16 %v4559
        %v4640 = vunpack.c.l.b16 %v4560
        %v4641 = vunpack.c.l.b16 %v4561
        %v4642 = vunpack.c.l.b16 %v4562
        %v4643 = vunpack.c.l.b16 %v4563
        %v4644 = vunpack.c.l.b16 %v4564
        %v4645 = vunpack.c.l.b16 %v4565
        %v4646 = vunpack.c.l.b16 %v4566
        %v4647 = vunpack.c.l.b16 %v4567
        %v4648 = vunpack.c.l.b16 %v4568
        %v4649 = vunpack.c.l.b16 %v4569
        %v4650 = vunpack.c.l.b16 %v4570
        %v4651 = vpack.c.b16 %v4620, %v4619
        %v4652 = vpack.c.b16 %v4622, %v4621
        %v4653 = vpack.c.b16 %v4624, %v4623
        %v4654 = vpack.c.b16 %v4626, %v4625
        %v4655 = vpack.c.b16 %v4628, %v4627
        %v4656 = vpack.c.b16 %v4630, %v4629
        %v4657 = vpack.c.b16 %v4632, %v4631
        %v4658 = vpack.c.b16 %v4634, %v4633
        %v4659 = vpack.c.b16 %v4636, %v4635
        %v4660 = vpack.c.b16 %v4638, %v4637
        %v4661 = vpack.c.b16 %v4640, %v4639
        %v4662 = vpack.c.b16 %v4642, %v4641
        %v4663 = vpack.c.b16 %v4644, %v4643
        %v4664 = vpack.c.b16 %v4646, %v4645
        %v4665 = vpack.c.b16 %v4648, %v4647
        %v4666 = vpack.c.b16 %v4650, %v4649
        %v4699 = vunpack.c.l.b16 %v4571
        %v4700 = vunpack.c.l.b16 %v4572
        %v4701 = vunpack.c.l.b16 %v4573
        %v4702 = vunpack.c.l.b16 %v4574
        %v4703 = vunpack.c.l.b16 %v4575
        %v4704 = vunpack.c.l.b16 %v4576
        %v4705 = vunpack.c.l.b16 %v4577
        %v4706 = vunpack.c.l.b16 %v4578
        %v4707 = vunpack.c.l.b16 %v4579
        %v4708 = vunpack.c.l.b16 %v4580
        %v4709 = vunpack.c.l.b16 %v4581
        %v4710 = vunpack.c.l.b16 %v4582
        %v4711 = vunpack.c.l.b16 %v4583
        %v4712 = vunpack.c.l.b16 %v4584
        %v4713 = vunpack.c.l.b16 %v4585
        %v4714 = vunpack.c.l.b16 %v4586
        %v4715 = vpack.c.b16 %v4700, %v4699
        %v4716 = vpack.c.b16 %v4702, %v4701
        %v4717 = vpack.c.b16 %v4704, %v4703
        %v4718 = vpack.c.b16 %v4706, %v4705
        %v4719 = vpack.c.b16 %v4708, %v4707
        %v4720 = vpack.c.b16 %v4710, %v4709
        %v4721 = vpack.c.b16 %v4712, %v4711
        %v4722 = vpack.c.b16 %v4714, %v4713
        %4731 = vmatprep.subr.bf16.mxu0 0
        %4732 = vmatpush1.bf16.msra.mxu0 %v4715
        %4733 = vmatprep.subr.bf16.mxu0 0
        %4734 = vmatpush1.bf16.msra.mxu0 %v4716
        %4735 = vmatprep.subr.bf16.mxu0 0
        %4736 = vmatpush1.bf16.msra.mxu0 %v4717
        %4737 = vmatprep.subr.bf16.mxu0 0
        %4738 = vmatpush1.bf16.msra.mxu0 %v4718
        %4739 = vmatprep.subr.bf16.mxu0 0
        %4740 = vmatpush1.bf16.msra.mxu0 %v4719
        %4741 = vmatprep.subr.bf16.mxu0 0
        %4742 = vmatpush1.bf16.msra.mxu0 %v4720
        %4743 = vmatprep.subr.bf16.mxu0 0
        %4744 = vmatpush1.bf16.msra.mxu0 %v4721
        %4745 = vmatprep.subr.bf16.mxu0 0
        %4746 = vmatpush1.bf16.msra.mxu0 %v4722
        %4747 = vmatprep.subr.bf16.mxu0 0
        %4748 = vmatpush1.bf16.msra.mxu0 0
        %4749 = vmatprep.subr.bf16.mxu0 0
        %4750 = vmatpush1.bf16.msra.mxu0 0
        %4751 = vmatprep.subr.bf16.mxu0 0
        %4752 = vmatpush1.bf16.msra.mxu0 0
        %4753 = vmatprep.subr.bf16.mxu0 0
        %4754 = vmatpush1.bf16.msra.mxu0 0
        %4755 = vmatprep.subr.bf16.mxu0 0
        %4756 = vmatpush1.bf16.msra.mxu0 0
        %4757 = vmatprep.subr.bf16.mxu0 0
        %4758 = vmatpush1.bf16.msra.mxu0 0
        %4759 = vmatprep.subr.bf16.mxu0 0
        %4760 = vmatpush1.bf16.msra.mxu0 0
        %4761 = vmatprep.subr.bf16.mxu0 0
        %4762 = vmatpush1.bf16.msra.mxu0 0
        %4763 = vmatprep.mubr.bf16.mxu0 0
        %4764 = vmatmul.mubr.bf16.gmra.mrb[0].mxu0 %v4651
        %v4765 = vpop.f32.mrb[0].mxu0
        %v4766 = vadd.f32 0.0, %v4765
        %v4767 = vpop.f32.mrb[0].mxu0
        %v4768 = vpop.f32.mrb[0].mxu0
        %v4769 = vadd.f32 0.0, %v4768
        %v4770 = vpop.f32.mrb[0].mxu0
        %4771 = vmatprep.mubr.bf16.mxu0 0
        %4772 = vmatmul.mubr.bf16.gmra.mrb[0].mxu0 %v4652
        %v4773 = vpop.f32.mrb[0].mxu0
        %v4774 = vadd.f32 0.0, %v4773
        %v4775 = vpop.f32.mrb[0].mxu0
        %v4776 = vpop.f32.mrb[0].mxu0
        %v4777 = vadd.f32 0.0, %v4776
        %v4778 = vpop.f32.mrb[0].mxu0
        %4779 = vmatprep.mubr.bf16.mxu0 0
        %4780 = vmatmul.mubr.bf16.gmra.mrb[0].mxu0 %v4653
        %v4781 = vpop.f32.mrb[0].mxu0
        %v4782 = vadd.f32 0.0, %v4781
        %v4783 = vpop.f32.mrb[0].mxu0
        %v4784 = vpop.f32.mrb[0].mxu0
        %v4785 = vadd.f32 0.0, %v4784
        %v4786 = vpop.f32.mrb[0].mxu0
        %4787 = vmatprep.mubr.bf16.mxu0 0
        %4788 = vmatmul.mubr.bf16.gmra.mrb[0].mxu0 %v4654
        %v4789 = vpop.f32.mrb[0].mxu0
        %v4790 = vadd.f32 0.0, %v4789
        %v4791 = vpop.f32.mrb[0].mxu0
        %v4792 = vpop.f32.mrb[0].mxu0
        %v4793 = vadd.f32 0.0, %v4792
        %v4794 = vpop.f32.mrb[0].mxu0
        %4795 = vmatprep.mubr.bf16.mxu0 0
        %4796 = vmatmul.mubr.bf16.gmra.mrb[0].mxu0 %v4655
        %v4797 = vpop.f32.mrb[0].mxu0
        %v4798 = vadd.f32 0.0, %v4797
        %v4799 = vpop.f32.mrb[0].mxu0
        %v4800 = vpop.f32.mrb[0].mxu0
        %v4801 = vadd.f32 0.0, %v4800
        %v4802 = vpop.f32.mrb[0].mxu0
        %4803 = vmatprep.mubr.bf16.mxu0 0
        %4804 = vmatmul.mubr.bf16.gmra.mrb[0].mxu0 %v4656
        %v4805 = vpop.f32.mrb[0].mxu0
        %v4806 = vadd.f32 0.0, %v4805
        %v4807 = vpop.f32.mrb[0].mxu0
        %v4808 = vpop.f32.mrb[0].mxu0
        %v4809 = vadd.f32 0.0, %v4808
        %v4810 = vpop.f32.mrb[0].mxu0
        %4811 = vmatprep.mubr.bf16.mxu0 0
        %4812 = vmatmul.mubr.bf16.gmra.mrb[0].mxu0 %v4657
        %v4813 = vpop.f32.mrb[0].mxu0
        %v4814 = vadd.f32 0.0, %v4813
        %v4815 = vpop.f32.mrb[0].mxu0
        %v4816 = vpop.f32.mrb[0].mxu0
        %v4817 = vadd.f32 0.0, %v4816
        %v4818 = vpop.f32.mrb[0].mxu0
        %4819 = vmatprep.mubr.bf16.mxu0 0
        %4820 = vmatmul.mubr.bf16.gmra.mrb[0].mxu0 %v4658
        %v4821 = vpop.f32.mrb[0].mxu0
        %v4822 = vadd.f32 0.0, %v4821
        %v4823 = vpop.f32.mrb[0].mxu0
        %v4824 = vpop.f32.mrb[0].mxu0
        %v4825 = vadd.f32 0.0, %v4824
        %v4826 = vpop.f32.mrb[0].mxu0
        %4827 = vmatprep.mubr.bf16.mxu0 0
        %4828 = vmatmul.mubr.bf16.gmra.mrb[0].mxu0 %v4659
        %v4829 = vpop.f32.mrb[0].mxu0
        %v4830 = vadd.f32 0.0, %v4829
        %v4831 = vpop.f32.mrb[0].mxu0
        %v4832 = vpop.f32.mrb[0].mxu0
        %v4833 = vadd.f32 0.0, %v4832
        %v4834 = vpop.f32.mrb[0].mxu0
        %4835 = vmatprep.mubr.bf16.mxu0 0
        %4836 = vmatmul.mubr.bf16.gmra.mrb[0].mxu0 %v4660
        %v4837 = vpop.f32.mrb[0].mxu0
        %v4838 = vadd.f32 0.0, %v4837
        %v4839 = vpop.f32.mrb[0].mxu0
        %v4840 = vpop.f32.mrb[0].mxu0
        %v4841 = vadd.f32 0.0, %v4840
        %v4842 = vpop.f32.mrb[0].mxu0
        %4843 = vmatprep.mubr.bf16.mxu0 0
        %4844 = vmatmul.mubr.bf16.gmra.mrb[0].mxu0 %v4661
        %v4845 = vpop.f32.mrb[0].mxu0
        %v4846 = vadd.f32 0.0, %v4845
        %v4847 = vpop.f32.mrb[0].mxu0
        %v4848 = vpop.f32.mrb[0].mxu0
        %v4849 = vadd.f32 0.0, %v4848
        %v4850 = vpop.f32.mrb[0].mxu0
        %4851 = vmatprep.mubr.bf16.mxu0 0
        %4852 = vmatmul.mubr.bf16.gmra.mrb[0].mxu0 %v4662
        %v4853 = vpop.f32.mrb[0].mxu0
        %v4854 = vadd.f32 0.0, %v4853
        %v4855 = vpop.f32.mrb[0].mxu0
        %v4856 = vpop.f32.mrb[0].mxu0
        %v4857 = vadd.f32 0.0, %v4856
        %v4858 = vpop.f32.mrb[0].mxu0
        %4859 = vmatprep.mubr.bf16.mxu0 0
        %4860 = vmatmul.mubr.bf16.gmra.mrb[0].mxu0 %v4663
        %v4861 = vpop.f32.mrb[0].mxu0
        %v4862 = vadd.f32 0.0, %v4861
        %v4863 = vpop.f32.mrb[0].mxu0
        %v4864 = vpop.f32.mrb[0].mxu0
        %v4865 = vadd.f32 0.0, %v4864
        %v4866 = vpop.f32.mrb[0].mxu0
        %4867 = vmatprep.mubr.bf16.mxu0 0
        %4868 = vmatmul.mubr.bf16.gmra.mrb[0].mxu0 %v4664
        %v4869 = vpop.f32.mrb[0].mxu0
        %v4870 = vadd.f32 0.0, %v4869
        %v4871 = vpop.f32.mrb[0].mxu0
        %v4872 = vpop.f32.mrb[0].mxu0
        %v4873 = vadd.f32 0.0, %v4872
        %v4874 = vpop.f32.mrb[0].mxu0
        %4875 = vmatprep.mubr.bf16.mxu0 0
        %4876 = vmatmul.mubr.bf16.gmra.mrb[0].mxu0 %v4665
        %v4877 = vpop.f32.mrb[0].mxu0
        %v4878 = vadd.f32 0.0, %v4877
        %v4879 = vpop.f32.mrb[0].mxu0
        %v4880 = vpop.f32.mrb[0].mxu0
        %v4881 = vadd.f32 0.0, %v4880
        %v4882 = vpop.f32.mrb[0].mxu0
        %4883 = vmatprep.mubr.bf16.mxu0 0
        %4884 = vmatmul.mubr.bf16.gmra.mrb[0].mxu0 %v4666
        %v4885 = vpop.f32.mrb[0].mxu0
        %v4886 = vadd.f32 0.0, %v4885
        %v4887 = vpop.f32.mrb[0].mxu0
        %v4888 = vpop.f32.mrb[0].mxu0
        %v4889 = vadd.f32 0.0, %v4888
        %v4890 = vpop.f32.mrb[0].mxu0
        %4891 = vdwg.mxu0
        %v4892 = vadd.f32 %v3913, %v4766
        %v4893 = vadd.f32 %v3914, %v4769
        %v4894 = vadd.f32 %v3915, %v4774
        %v4895 = vadd.f32 %v3916, %v4777
        %v4896 = vadd.f32 %v3917, %v4782
        %v4897 = vadd.f32 %v3918, %v4785
        %v4898 = vadd.f32 %v3919, %v4790
        %v4899 = vadd.f32 %v3920, %v4793
        %v4900 = vadd.f32 %v3921, %v4798
        %v4901 = vadd.f32 %v3922, %v4801
        %v4902 = vadd.f32 %v3923, %v4806
        %v4903 = vadd.f32 %v3924, %v4809
        %v4904 = vadd.f32 %v3925, %v4814
        %v4905 = vadd.f32 %v3926, %v4817
        %v4906 = vadd.f32 %v3927, %v4822
        %v4907 = vadd.f32 %v3928, %v4825
        %v4908 = vadd.f32 %v3929, %v4830
        %v4909 = vadd.f32 %v3930, %v4833
        %v4910 = vadd.f32 %v3931, %v4838
        %v4911 = vadd.f32 %v3932, %v4841
        %v4912 = vadd.f32 %v3933, %v4846
        %v4913 = vadd.f32 %v3934, %v4849
        %v4914 = vadd.f32 %v3935, %v4854
        %v4915 = vadd.f32 %v3936, %v4857
        %v4916 = vadd.f32 %v3937, %v4862
        %v4917 = vadd.f32 %v3938, %v4865
        %v4918 = vadd.f32 %v3939, %v4870
        %v4919 = vadd.f32 %v3940, %v4873
        %v4920 = vadd.f32 %v3941, %v4878
        %v4921 = vadd.f32 %v3942, %v4881
        %v4922 = vadd.f32 %v3943, %v4886
        %v4923 = vadd.f32 %v3944, %v4889
        %v4924 = vld [vmem:[%s4538] sm:$0xf]
        %v4925 = vld [vmem:[%s4538 + $0x4] sm:$0xf]
        %v4926 = vld [vmem:[%s4538 + $0x8] sm:$0x1]
        %v4927 = vld [vmem:[%s4538 + $0xc] sm:$0xf]
        %v4928 = vld [vmem:[%s4538 + $0x10] sm:$0xf]
        %v4929 = vld [vmem:[%s4538 + $0x14] sm:$0x1]
        %v4930 = vld [vmem:[%s4538 + $0x18] sm:$0xf]
        %v4931 = vld [vmem:[%s4538 + $0x1c] sm:$0xf]
        %v4932 = vld [vmem:[%s4538 + $0x20] sm:$0x1]
        %v4933 = vld [vmem:[%s4538 + $0x24] sm:$0xf]
        %v4934 = vld [vmem:[%s4538 + $0x28] sm:$0xf]
        %v4935 = vld [vmem:[%s4538 + $0x2c] sm:$0x1]
        %v4936 = vld [vmem:[%s4538 + $0x30] sm:$0xf]
        %v4937 = vld [vmem:[%s4538 + $0x34] sm:$0xf]
        %v4938 = vld [vmem:[%s4538 + $0x38] sm:$0x1]
        %v4939 = vld [vmem:[%s4538 + $0x3c] sm:$0xf]
        %v4940 = vld [vmem:[%s4538 + $0x40] sm:$0xf]
        %v4941 = vld [vmem:[%s4538 + $0x44] sm:$0x1]
        %v4942 = vld [vmem:[%s4538 + $0x48] sm:$0xf]
        %v4943 = vld [vmem:[%s4538 + $0x4c] sm:$0xf]
        %v4944 = vld [vmem:[%s4538 + $0x50] sm:$0x1]
        %v4945 = vld [vmem:[%s4538 + $0x54] sm:$0xf]
        %v4946 = vld [vmem:[%s4538 + $0x58] sm:$0xf]
        %v4947 = vld [vmem:[%s4538 + $0x5c] sm:$0x1]
        %v4948 = vld [vmem:[%s4538 + $0x60] sm:$0xf]
        %v4949 = vld [vmem:[%s4538 + $0x64] sm:$0xf]
        %v4950 = vld [vmem:[%s4538 + $0x68] sm:$0x1]
        %v4951 = vld [vmem:[%s4538 + $0x6c] sm:$0xf]
        %v4952 = vld [vmem:[%s4538 + $0x70] sm:$0xf]
        %v4953 = vld [vmem:[%s4538 + $0x74] sm:$0x1]
        %v4954 = vld [vmem:[%s4538 + $0x78] sm:$0xf]
        %v4955 = vld [vmem:[%s4538 + $0x7c] sm:$0xf]
        %v4956 = vld [vmem:[%s4538 + $0x80] sm:$0x1]
        %v4957 = vld [vmem:[%s4538 + $0x84] sm:$0xf]
        %v4958 = vld [vmem:[%s4538 + $0x88] sm:$0xf]
        %v4959 = vld [vmem:[%s4538 + $0x8c] sm:$0x1]
        %v4960 = vld [vmem:[%s4538 + $0x90] sm:$0xf]
        %v4961 = vld [vmem:[%s4538 + $0x94] sm:$0xf]
        %v4962 = vld [vmem:[%s4538 + $0x98] sm:$0x1]
        %v4963 = vld [vmem:[%s4538 + $0x9c] sm:$0xf]
        %v4964 = vld [vmem:[%s4538 + $0xa0] sm:$0xf]
        %v4965 = vld [vmem:[%s4538 + $0xa4] sm:$0x1]
        %v4966 = vld [vmem:[%s4538 + $0xa8] sm:$0xf]
        %v4967 = vld [vmem:[%s4538 + $0xac] sm:$0xf]
        %v4968 = vld [vmem:[%s4538 + $0xb0] sm:$0x1]
        %v4969 = vld [vmem:[%s4538 + $0xb4] sm:$0xf]
        %v4970 = vld [vmem:[%s4538 + $0xb8] sm:$0xf]
        %v4971 = vld [vmem:[%s4538 + $0xbc] sm:$0x1]
        %v4973 = vshrl.u32 %v4924, 16
        %v4975 = vrot.slane %v4973, 4
        %v4976 = vshll.u32 %v4924, 16
        %v4978 = vrot.slane %v4976, 5
        %v4979 = vor.u32 %v4975, %v4978
        %v4980 = vrot.slane %v4979, 4
        %v4982 = vshll.u32 %v4925, 16
        %v4984 = vrot.slane %v4982, 5
        %v4985 = vsel %vm799, %v4980, %v4984
        %v4986 = vshrl.u32 %v4925, 16
        %v4988 = vrot.slane %v4986, 4
        %v4989 = vor.u32 %v4988, %v4984
        %v4990 = vrot.slane %v4989, 4
        %v4992 = vshll.u32 %v4926, 16
        %v4994 = vrot.slane %v4992, 5
        %v4995 = vsel %vm799, %v4990, %v4994
        %v4997 = vshrl.u32 %v4927, 16
        %v4999 = vrot.slane %v4997, 4
        %v5000 = vshll.u32 %v4927, 16
        %v5002 = vrot.slane %v5000, 5
        %v5003 = vor.u32 %v4999, %v5002
        %v5004 = vrot.slane %v5003, 4
        %v5006 = vshll.u32 %v4928, 16
        %v5008 = vrot.slane %v5006, 5
        %v5009 = vsel %vm799, %v5004, %v5008
        %v5010 = vshrl.u32 %v4928, 16
        %v5012 = vrot.slane %v5010, 4
        %v5013 = vor.u32 %v5012, %v5008
        %v5014 = vrot.slane %v5013, 4
        %v5016 = vshll.u32 %v4929, 16
        %v5018 = vrot.slane %v5016, 5
        %v5019 = vsel %vm799, %v5014, %v5018
        %v5021 = vshrl.u32 %v4930, 16
        %v5023 = vrot.slane %v5021, 4
        %v5024 = vshll.u32 %v4930, 16
        %v5026 = vrot.slane %v5024, 5
        %v5027 = vor.u32 %v5023, %v5026
        %v5028 = vrot.slane %v5027, 4
        %v5030 = vshll.u32 %v4931, 16
        %v5032 = vrot.slane %v5030, 5
        %v5033 = vsel %vm799, %v5028, %v5032
        %v5034 = vshrl.u32 %v4931, 16
        %v5036 = vrot.slane %v5034, 4
        %v5037 = vor.u32 %v5036, %v5032
        %v5038 = vrot.slane %v5037, 4
        %v5040 = vshll.u32 %v4932, 16
        %v5042 = vrot.slane %v5040, 5
        %v5043 = vsel %vm799, %v5038, %v5042
        %v5045 = vshrl.u32 %v4933, 16
        %v5047 = vrot.slane %v5045, 4
        %v5048 = vshll.u32 %v4933, 16
        %v5050 = vrot.slane %v5048, 5
        %v5051 = vor.u32 %v5047, %v5050
        %v5052 = vrot.slane %v5051, 4
        %v5054 = vshll.u32 %v4934, 16
        %v5056 = vrot.slane %v5054, 5
        %v5057 = vsel %vm799, %v5052, %v5056
        %v5058 = vshrl.u32 %v4934, 16
        %v5060 = vrot.slane %v5058, 4
        %v5061 = vor.u32 %v5060, %v5056
        %v5062 = vrot.slane %v5061, 4
        %v5064 = vshll.u32 %v4935, 16
        %v5066 = vrot.slane %v5064, 5
        %v5067 = vsel %vm799, %v5062, %v5066
        %v5069 = vshrl.u32 %v4936, 16
        %v5071 = vrot.slane %v5069, 4
        %v5072 = vshll.u32 %v4936, 16
        %v5074 = vrot.slane %v5072, 5
        %v5075 = vor.u32 %v5071, %v5074
        %v5076 = vrot.slane %v5075, 4
        %v5078 = vshll.u32 %v4937, 16
        %v5080 = vrot.slane %v5078, 5
        %v5081 = vsel %vm799, %v5076, %v5080
        %v5082 = vshrl.u32 %v4937, 16
        %v5084 = vrot.slane %v5082, 4
        %v5085 = vor.u32 %v5084, %v5080
        %v5086 = vrot.slane %v5085, 4
        %v5088 = vshll.u32 %v4938, 16
        %v5090 = vrot.slane %v5088, 5
        %v5091 = vsel %vm799, %v5086, %v5090
        %v5093 = vshrl.u32 %v4939, 16
        %v5095 = vrot.slane %v5093, 4
        %v5096 = vshll.u32 %v4939, 16
        %v5098 = vrot.slane %v5096, 5
        %v5099 = vor.u32 %v5095, %v5098
        %v5100 = vrot.slane %v5099, 4
        %v5102 = vshll.u32 %v4940, 16
        %v5104 = vrot.slane %v5102, 5
        %v5105 = vsel %vm799, %v5100, %v5104
        %v5106 = vshrl.u32 %v4940, 16
        %v5108 = vrot.slane %v5106, 4
        %v5109 = vor.u32 %v5108, %v5104
        %v5110 = vrot.slane %v5109, 4
        %v5112 = vshll.u32 %v4941, 16
        %v5114 = vrot.slane %v5112, 5
        %v5115 = vsel %vm799, %v5110, %v5114
        %v5117 = vshrl.u32 %v4942, 16
        %v5119 = vrot.slane %v5117, 4
        %v5120 = vshll.u32 %v4942, 16
        %v5122 = vrot.slane %v5120, 5
        %v5123 = vor.u32 %v5119, %v5122
        %v5124 = vrot.slane %v5123, 4
        %v5126 = vshll.u32 %v4943, 16
        %v5128 = vrot.slane %v5126, 5
        %v5129 = vsel %vm799, %v5124, %v5128
        %v5130 = vshrl.u32 %v4943, 16
        %v5132 = vrot.slane %v5130, 4
        %v5133 = vor.u32 %v5132, %v5128
        %v5134 = vrot.slane %v5133, 4
        %v5136 = vshll.u32 %v4944, 16
        %v5138 = vrot.slane %v5136, 5
        %v5139 = vsel %vm799, %v5134, %v5138
        %v5141 = vshrl.u32 %v4945, 16
        %v5143 = vrot.slane %v5141, 4
        %v5144 = vshll.u32 %v4945, 16
        %v5146 = vrot.slane %v5144, 5
        %v5147 = vor.u32 %v5143, %v5146
        %v5148 = vrot.slane %v5147, 4
        %v5150 = vshll.u32 %v4946, 16
        %v5152 = vrot.slane %v5150, 5
        %v5153 = vsel %vm799, %v5148, %v5152
        %v5154 = vshrl.u32 %v4946, 16
        %v5156 = vrot.slane %v5154, 4
        %v5157 = vor.u32 %v5156, %v5152
        %v5158 = vrot.slane %v5157, 4
        %v5160 = vshll.u32 %v4947, 16
        %v5162 = vrot.slane %v5160, 5
        %v5163 = vsel %vm799, %v5158, %v5162
        %v5165 = vshrl.u32 %v4948, 16
        %v5167 = vrot.slane %v5165, 4
        %v5168 = vshll.u32 %v4948, 16
        %v5170 = vrot.slane %v5168, 5
        %v5171 = vor.u32 %v5167, %v5170
        %v5172 = vrot.slane %v5171, 4
        %v5174 = vshll.u32 %v4949, 16
        %v5176 = vrot.slane %v5174, 5
        %v5177 = vsel %vm799, %v5172, %v5176
        %v5178 = vshrl.u32 %v4949, 16
        %v5180 = vrot.slane %v5178, 4
        %v5181 = vor.u32 %v5180, %v5176
        %v5182 = vrot.slane %v5181, 4
        %v5184 = vshll.u32 %v4950, 16
        %v5186 = vrot.slane %v5184, 5
        %v5187 = vsel %vm799, %v5182, %v5186
        %v5189 = vshrl.u32 %v4951, 16
        %v5191 = vrot.slane %v5189, 4
        %v5192 = vshll.u32 %v4951, 16
        %v5194 = vrot.slane %v5192, 5
        %v5195 = vor.u32 %v5191, %v5194
        %v5196 = vrot.slane %v5195, 4
        %v5198 = vshll.u32 %v4952, 16
        %v5200 = vrot.slane %v5198, 5
        %v5201 = vsel %vm799, %v5196, %v5200
        %v5202 = vshrl.u32 %v4952, 16
        %v5204 = vrot.slane %v5202, 4
        %v5205 = vor.u32 %v5204, %v5200
        %v5206 = vrot.slane %v5205, 4
        %v5208 = vshll.u32 %v4953, 16
        %v5210 = vrot.slane %v5208, 5
        %v5211 = vsel %vm799, %v5206, %v5210
        %v5213 = vshrl.u32 %v4954, 16
        %v5215 = vrot.slane %v5213, 4
        %v5216 = vshll.u32 %v4954, 16
        %v5218 = vrot.slane %v5216, 5
        %v5219 = vor.u32 %v5215, %v5218
        %v5220 = vrot.slane %v5219, 4
        %v5222 = vshll.u32 %v4955, 16
        %v5224 = vrot.slane %v5222, 5
        %v5225 = vsel %vm799, %v5220, %v5224
        %v5226 = vshrl.u32 %v4955, 16
        %v5228 = vrot.slane %v5226, 4
        %v5229 = vor.u32 %v5228, %v5224
        %v5230 = vrot.slane %v5229, 4
        %v5232 = vshll.u32 %v4956, 16
        %v5234 = vrot.slane %v5232, 5
        %v5235 = vsel %vm799, %v5230, %v5234
        %v5237 = vshrl.u32 %v4957, 16
        %v5239 = vrot.slane %v5237, 4
        %v5240 = vshll.u32 %v4957, 16
        %v5242 = vrot.slane %v5240, 5
        %v5243 = vor.u32 %v5239, %v5242
        %v5244 = vrot.slane %v5243, 4
        %v5246 = vshll.u32 %v4958, 16
        %v5248 = vrot.slane %v5246, 5
        %v5249 = vsel %vm799, %v5244, %v5248
        %v5250 = vshrl.u32 %v4958, 16
        %v5252 = vrot.slane %v5250, 4
        %v5253 = vor.u32 %v5252, %v5248
        %v5254 = vrot.slane %v5253, 4
        %v5256 = vshll.u32 %v4959, 16
        %v5258 = vrot.slane %v5256, 5
        %v5259 = vsel %vm799, %v5254, %v5258
        %v5261 = vshrl.u32 %v4960, 16
        %v5263 = vrot.slane %v5261, 4
        %v5264 = vshll.u32 %v4960, 16
        %v5266 = vrot.slane %v5264, 5
        %v5267 = vor.u32 %v5263, %v5266
        %v5268 = vrot.slane %v5267, 4
        %v5270 = vshll.u32 %v4961, 16
        %v5272 = vrot.slane %v5270, 5
        %v5273 = vsel %vm799, %v5268, %v5272
        %v5274 = vshrl.u32 %v4961, 16
        %v5276 = vrot.slane %v5274, 4
        %v5277 = vor.u32 %v5276, %v5272
        %v5278 = vrot.slane %v5277, 4
        %v5280 = vshll.u32 %v4962, 16
        %v5282 = vrot.slane %v5280, 5
        %v5283 = vsel %vm799, %v5278, %v5282
        %v5285 = vshrl.u32 %v4963, 16
        %v5287 = vrot.slane %v5285, 4
        %v5288 = vshll.u32 %v4963, 16
        %v5290 = vrot.slane %v5288, 5
        %v5291 = vor.u32 %v5287, %v5290
        %v5292 = vrot.slane %v5291, 4
        %v5294 = vshll.u32 %v4964, 16
        %v5296 = vrot.slane %v5294, 5
        %v5297 = vsel %vm799, %v5292, %v5296
        %v5298 = vshrl.u32 %v4964, 16
        %v5300 = vrot.slane %v5298, 4
        %v5301 = vor.u32 %v5300, %v5296
        %v5302 = vrot.slane %v5301, 4
        %v5304 = vshll.u32 %v4965, 16
        %v5306 = vrot.slane %v5304, 5
        %v5307 = vsel %vm799, %v5302, %v5306
        %v5309 = vshrl.u32 %v4966, 16
        %v5311 = vrot.slane %v5309, 4
        %v5312 = vshll.u32 %v4966, 16
        %v5314 = vrot.slane %v5312, 5
        %v5315 = vor.u32 %v5311, %v5314
        %v5316 = vrot.slane %v5315, 4
        %v5318 = vshll.u32 %v4967, 16
        %v5320 = vrot.slane %v5318, 5
        %v5321 = vsel %vm799, %v5316, %v5320
        %v5322 = vshrl.u32 %v4967, 16
        %v5324 = vrot.slane %v5322, 4
        %v5325 = vor.u32 %v5324, %v5320
        %v5326 = vrot.slane %v5325, 4
        %v5328 = vshll.u32 %v4968, 16
        %v5330 = vrot.slane %v5328, 5
        %v5331 = vsel %vm799, %v5326, %v5330
        %v5333 = vshrl.u32 %v4969, 16
        %v5335 = vrot.slane %v5333, 4
        %v5336 = vshll.u32 %v4969, 16
        %v5338 = vrot.slane %v5336, 5
        %v5339 = vor.u32 %v5335, %v5338
        %v5340 = vrot.slane %v5339, 4
        %v5342 = vshll.u32 %v4970, 16
        %v5344 = vrot.slane %v5342, 5
        %v5345 = vsel %vm799, %v5340, %v5344
        %v5346 = vshrl.u32 %v4970, 16
        %v5348 = vrot.slane %v5346, 4
        %v5349 = vor.u32 %v5348, %v5344
        %v5350 = vrot.slane %v5349, 4
        %v5352 = vshll.u32 %v4971, 16
        %v5354 = vrot.slane %v5352, 5
        %v5355 = vsel %vm799, %v5350, %v5354
        %v5356 = vld [vmem:[#allocation6 + $0x34] sm:$0xff]
        %v5357 = vld [vmem:[#allocation6 + $0x74] sm:$0xff]
        %v5358 = vld [vmem:[#allocation6 + $0xb4] sm:$0xff]
        %v5359 = vld [vmem:[#allocation6 + $0xf4] sm:$0xff]
        %v5360 = vld [vmem:[#allocation6 + $0x134] sm:$0xff]
        %v5361 = vld [vmem:[#allocation6 + $0x174] sm:$0xff]
        %v5362 = vld [vmem:[#allocation6 + $0x1b4] sm:$0xff]
        %v5363 = vld [vmem:[#allocation6 + $0x1f4] sm:$0xff]
        %v5364 = vld [vmem:[#allocation6 + $0x234] sm:$0xff]
        %v5365 = vld [vmem:[#allocation6 + $0x274] sm:$0xff]
        %v5366 = vld [vmem:[#allocation6 + $0x2b4] sm:$0xff]
        %v5367 = vld [vmem:[#allocation6 + $0x2f4] sm:$0xff]
        %v5368 = vld [vmem:[#allocation6 + $0x334] sm:$0xff]
        %v5369 = vld [vmem:[#allocation6 + $0x374] sm:$0xff]
        %v5370 = vld [vmem:[#allocation6 + $0x3b4] sm:$0xff]
        %v5371 = vld [vmem:[#allocation6 + $0x3f4] sm:$0xff]
        %v5372 = vunpack.c.l.b16 %v4985
        %v5373 = vunpack.c.l.b16 %v4995
        %v5374 = vunpack.c.l.b16 %v5009
        %v5375 = vunpack.c.l.b16 %v5019
        %v5376 = vunpack.c.l.b16 %v5033
        %v5377 = vunpack.c.l.b16 %v5043
        %v5378 = vunpack.c.l.b16 %v5057
        %v5379 = vunpack.c.l.b16 %v5067
        %v5380 = vunpack.c.l.b16 %v5081
        %v5381 = vunpack.c.l.b16 %v5091
        %v5382 = vunpack.c.l.b16 %v5105
        %v5383 = vunpack.c.l.b16 %v5115
        %v5384 = vunpack.c.l.b16 %v5129
        %v5385 = vunpack.c.l.b16 %v5139
        %v5386 = vunpack.c.l.b16 %v5153
        %v5387 = vunpack.c.l.b16 %v5163
        %v5388 = vunpack.c.l.b16 %v5177
        %v5389 = vunpack.c.l.b16 %v5187
        %v5390 = vunpack.c.l.b16 %v5201
        %v5391 = vunpack.c.l.b16 %v5211
        %v5392 = vunpack.c.l.b16 %v5225
        %v5393 = vunpack.c.l.b16 %v5235
        %v5394 = vunpack.c.l.b16 %v5249
        %v5395 = vunpack.c.l.b16 %v5259
        %v5396 = vunpack.c.l.b16 %v5273
        %v5397 = vunpack.c.l.b16 %v5283
        %v5398 = vunpack.c.l.b16 %v5297
        %v5399 = vunpack.c.l.b16 %v5307
        %v5400 = vunpack.c.l.b16 %v5321
        %v5401 = vunpack.c.l.b16 %v5331
        %v5402 = vunpack.c.l.b16 %v5345
        %v5403 = vunpack.c.l.b16 %v5355
        %v5404 = vpack.c.b16 %v5373, %v5372
        %v5405 = vpack.c.b16 %v5375, %v5374
        %v5406 = vpack.c.b16 %v5377, %v5376
        %v5407 = vpack.c.b16 %v5379, %v5378
        %v5408 = vpack.c.b16 %v5381, %v5380
        %v5409 = vpack.c.b16 %v5383, %v5382
        %v5410 = vpack.c.b16 %v5385, %v5384
        %v5411 = vpack.c.b16 %v5387, %v5386
        %v5412 = vpack.c.b16 %v5389, %v5388
        %v5413 = vpack.c.b16 %v5391, %v5390
        %v5414 = vpack.c.b16 %v5393, %v5392
        %v5415 = vpack.c.b16 %v5395, %v5394
        %v5416 = vpack.c.b16 %v5397, %v5396
        %v5417 = vpack.c.b16 %v5399, %v5398
        %v5418 = vpack.c.b16 %v5401, %v5400
        %v5419 = vpack.c.b16 %v5403, %v5402
        %v5452 = vunpack.c.l.b16 %v5356
        %v5453 = vunpack.c.h.b16 %v5356
        %v5454 = vunpack.c.l.b16 %v5357
        %v5455 = vunpack.c.h.b16 %v5357
        %v5456 = vunpack.c.l.b16 %v5358
        %v5457 = vunpack.c.h.b16 %v5358
        %v5458 = vunpack.c.l.b16 %v5359
        %v5459 = vunpack.c.h.b16 %v5359
        %v5460 = vunpack.c.l.b16 %v5360
        %v5461 = vunpack.c.h.b16 %v5360
        %v5462 = vunpack.c.l.b16 %v5361
        %v5463 = vunpack.c.h.b16 %v5361
        %v5464 = vunpack.c.l.b16 %v5362
        %v5465 = vunpack.c.h.b16 %v5362
        %v5466 = vunpack.c.l.b16 %v5363
        %v5467 = vunpack.c.h.b16 %v5363
        %v5468 = vunpack.c.l.b16 %v5364
        %v5469 = vunpack.c.h.b16 %v5364
        %v5470 = vunpack.c.l.b16 %v5365
        %v5471 = vunpack.c.h.b16 %v5365
        %v5472 = vunpack.c.l.b16 %v5366
        %v5473 = vunpack.c.h.b16 %v5366
        %v5474 = vunpack.c.l.b16 %v5367
        %v5475 = vunpack.c.h.b16 %v5367
        %v5476 = vunpack.c.l.b16 %v5368
        %v5477 = vunpack.c.h.b16 %v5368
        %v5478 = vunpack.c.l.b16 %v5369
        %v5479 = vunpack.c.h.b16 %v5369
        %v5480 = vunpack.c.l.b16 %v5370
        %v5481 = vunpack.c.h.b16 %v5370
        %v5482 = vunpack.c.l.b16 %v5371
        %v5483 = vunpack.c.h.b16 %v5371
        %v5484 = vpack.c.b16 %v5454, %v5452
        %v5485 = vpack.c.b16 %v5455, %v5453
        %v5486 = vpack.c.b16 %v5458, %v5456
        %v5487 = vpack.c.b16 %v5459, %v5457
        %v5488 = vpack.c.b16 %v5462, %v5460
        %v5489 = vpack.c.b16 %v5463, %v5461
        %v5490 = vpack.c.b16 %v5466, %v5464
        %v5491 = vpack.c.b16 %v5467, %v5465
        %v5492 = vpack.c.b16 %v5470, %v5468
        %v5493 = vpack.c.b16 %v5471, %v5469
        %v5494 = vpack.c.b16 %v5474, %v5472
        %v5495 = vpack.c.b16 %v5475, %v5473
        %v5496 = vpack.c.b16 %v5478, %v5476
        %v5497 = vpack.c.b16 %v5479, %v5477
        %v5498 = vpack.c.b16 %v5482, %v5480
        %v5499 = vpack.c.b16 %v5483, %v5481
        %5516 = vmatprep.subr.bf16.mxu0 %v5485
        %5517 = vmatpush1.bf16.msra.mxu0 %v5484
        %5518 = vmatprep.subr.bf16.mxu0 %v5487
        %5519 = vmatpush1.bf16.msra.mxu0 %v5486
        %5520 = vmatprep.subr.bf16.mxu0 %v5489
        %5521 = vmatpush1.bf16.msra.mxu0 %v5488
        %5522 = vmatprep.subr.bf16.mxu0 %v5491
        %5523 = vmatpush1.bf16.msra.mxu0 %v5490
        %5524 = vmatprep.subr.bf16.mxu0 %v5493
        %5525 = vmatpush1.bf16.msra.mxu0 %v5492
        %5526 = vmatprep.subr.bf16.mxu0 %v5495
        %5527 = vmatpush1.bf16.msra.mxu0 %v5494
        %5528 = vmatprep.subr.bf16.mxu0 %v5497
        %5529 = vmatpush1.bf16.msra.mxu0 %v5496
        %5530 = vmatprep.subr.bf16.mxu0 %v5499
        %5531 = vmatpush1.bf16.msra.mxu0 %v5498
        %5532 = vmatprep.subr.bf16.mxu0 0
        %5533 = vmatpush1.bf16.msra.mxu0 0
        %5534 = vmatprep.subr.bf16.mxu0 0
        %5535 = vmatpush1.bf16.msra.mxu0 0
        %5536 = vmatprep.subr.bf16.mxu0 0
        %5537 = vmatpush1.bf16.msra.mxu0 0
        %5538 = vmatprep.subr.bf16.mxu0 0
        %5539 = vmatpush1.bf16.msra.mxu0 0
        %5540 = vmatprep.subr.bf16.mxu0 0
        %5541 = vmatpush1.bf16.msra.mxu0 0
        %5542 = vmatprep.subr.bf16.mxu0 0
        %5543 = vmatpush1.bf16.msra.mxu0 0
        %5544 = vmatprep.subr.bf16.mxu0 0
        %5545 = vmatpush1.bf16.msra.mxu0 0
        %5546 = vmatprep.subr.bf16.mxu0 0
        %5547 = vmatpush1.bf16.msra.mxu0 0
        %5548 = vmatprep.mubr.bf16.mxu0 0
        %5549 = vmatmul.mubr.bf16.gmra.mrb[0].mxu0 %v5404
        %v5550 = vpop.f32.mrb[0].mxu0
        %v5551 = vadd.f32 0.0, %v5550
        %v5552 = vpop.f32.mrb[0].mxu0
        %v5553 = vadd.f32 0.0, %v5552
        %v5554 = vpop.f32.mrb[0].mxu0
        %v5555 = vadd.f32 0.0, %v5554
        %v5556 = vpop.f32.mrb[0].mxu0
        %v5557 = vadd.f32 0.0, %v5556
        %5558 = vmatprep.mubr.bf16.mxu0 0
        %5559 = vmatmul.mubr.bf16.gmra.mrb[0].mxu0 %v5405
        %v5560 = vpop.f32.mrb[0].mxu0
        %v5561 = vadd.f32 0.0, %v5560
        %v5562 = vpop.f32.mrb[0].mxu0
        %v5563 = vadd.f32 0.0, %v5562
        %v5564 = vpop.f32.mrb[0].mxu0
        %v5565 = vadd.f32 0.0, %v5564
        %v5566 = vpop.f32.mrb[0].mxu0
        %v5567 = vadd.f32 0.0, %v5566
        %5568 = vmatprep.mubr.bf16.mxu0 0
        %5569 = vmatmul.mubr.bf16.gmra.mrb[0].mxu0 %v5406
        %v5570 = vpop.f32.mrb[0].mxu0
        %v5571 = vadd.f32 0.0, %v5570
        %v5572 = vpop.f32.mrb[0].mxu0
        %v5573 = vadd.f32 0.0, %v5572
        %v5574 = vpop.f32.mrb[0].mxu0
        %v5575 = vadd.f32 0.0, %v5574
        %v5576 = vpop.f32.mrb[0].mxu0
        %v5577 = vadd.f32 0.0, %v5576
        %5578 = vmatprep.mubr.bf16.mxu0 0
        %5579 = vmatmul.mubr.bf16.gmra.mrb[0].mxu0 %v5407
        %v5580 = vpop.f32.mrb[0].mxu0
        %v5581 = vadd.f32 0.0, %v5580
        %v5582 = vpop.f32.mrb[0].mxu0
        %v5583 = vadd.f32 0.0, %v5582
        %v5584 = vpop.f32.mrb[0].mxu0
        %v5585 = vadd.f32 0.0, %v5584
        %v5586 = vpop.f32.mrb[0].mxu0
        %v5587 = vadd.f32 0.0, %v5586
        %5588 = vmatprep.mubr.bf16.mxu0 0
        %5589 = vmatmul.mubr.bf16.gmra.mrb[0].mxu0 %v5408
        %v5590 = vpop.f32.mrb[0].mxu0
        %v5591 = vadd.f32 0.0, %v5590
        %v5592 = vpop.f32.mrb[0].mxu0
        %v5593 = vadd.f32 0.0, %v5592
        %v5594 = vpop.f32.mrb[0].mxu0
        %v5595 = vadd.f32 0.0, %v5594
        %v5596 = vpop.f32.mrb[0].mxu0
        %v5597 = vadd.f32 0.0, %v5596
        %5598 = vmatprep.mubr.bf16.mxu0 0
        %5599 = vmatmul.mubr.bf16.gmra.mrb[0].mxu0 %v5409
        %v5600 = vpop.f32.mrb[0].mxu0
        %v5601 = vadd.f32 0.0, %v5600
        %v5602 = vpop.f32.mrb[0].mxu0
        %v5603 = vadd.f32 0.0, %v5602
        %v5604 = vpop.f32.mrb[0].mxu0
        %v5605 = vadd.f32 0.0, %v5604
        %v5606 = vpop.f32.mrb[0].mxu0
        %v5607 = vadd.f32 0.0, %v5606
        %5608 = vmatprep.mubr.bf16.mxu0 0
        %5609 = vmatmul.mubr.bf16.gmra.mrb[0].mxu0 %v5410
        %v5610 = vpop.f32.mrb[0].mxu0
        %v5611 = vadd.f32 0.0, %v5610
        %v5612 = vpop.f32.mrb[0].mxu0
        %v5613 = vadd.f32 0.0, %v5612
        %v5614 = vpop.f32.mrb[0].mxu0
        %v5615 = vadd.f32 0.0, %v5614
        %v5616 = vpop.f32.mrb[0].mxu0
        %v5617 = vadd.f32 0.0, %v5616
        %5618 = vmatprep.mubr.bf16.mxu0 0
        %5619 = vmatmul.mubr.bf16.gmra.mrb[0].mxu0 %v5411
        %v5620 = vpop.f32.mrb[0].mxu0
        %v5621 = vadd.f32 0.0, %v5620
        %v5622 = vpop.f32.mrb[0].mxu0
        %v5623 = vadd.f32 0.0, %v5622
        %v5624 = vpop.f32.mrb[0].mxu0
        %v5625 = vadd.f32 0.0, %v5624
        %v5626 = vpop.f32.mrb[0].mxu0
        %v5627 = vadd.f32 0.0, %v5626
        %5628 = vmatprep.mubr.bf16.mxu0 0
        %5629 = vmatmul.mubr.bf16.gmra.mrb[0].mxu0 %v5412
        %v5630 = vpop.f32.mrb[0].mxu0
        %v5631 = vadd.f32 0.0, %v5630
        %v5632 = vpop.f32.mrb[0].mxu0
        %v5633 = vadd.f32 0.0, %v5632
        %v5634 = vpop.f32.mrb[0].mxu0
        %v5635 = vadd.f32 0.0, %v5634
        %v5636 = vpop.f32.mrb[0].mxu0
        %v5637 = vadd.f32 0.0, %v5636
        %5638 = vmatprep.mubr.bf16.mxu0 0
        %5639 = vmatmul.mubr.bf16.gmra.mrb[0].mxu0 %v5413
        %v5640 = vpop.f32.mrb[0].mxu0
        %v5641 = vadd.f32 0.0, %v5640
        %v5642 = vpop.f32.mrb[0].mxu0
        %v5643 = vadd.f32 0.0, %v5642
        %v5644 = vpop.f32.mrb[0].mxu0
        %v5645 = vadd.f32 0.0, %v5644
        %v5646 = vpop.f32.mrb[0].mxu0
        %v5647 = vadd.f32 0.0, %v5646
        %5648 = vmatprep.mubr.bf16.mxu0 0
        %5649 = vmatmul.mubr.bf16.gmra.mrb[0].mxu0 %v5414
        %v5650 = vpop.f32.mrb[0].mxu0
        %v5651 = vadd.f32 0.0, %v5650
        %v5652 = vpop.f32.mrb[0].mxu0
        %v5653 = vadd.f32 0.0, %v5652
        %v5654 = vpop.f32.mrb[0].mxu0
        %v5655 = vadd.f32 0.0, %v5654
        %v5656 = vpop.f32.mrb[0].mxu0
        %v5657 = vadd.f32 0.0, %v5656
        %5658 = vmatprep.mubr.bf16.mxu0 0
        %5659 = vmatmul.mubr.bf16.gmra.mrb[0].mxu0 %v5415
        %v5660 = vpop.f32.mrb[0].mxu0
        %v5661 = vadd.f32 0.0, %v5660
        %v5662 = vpop.f32.mrb[0].mxu0
        %v5663 = vadd.f32 0.0, %v5662
        %v5664 = vpop.f32.mrb[0].mxu0
        %v5665 = vadd.f32 0.0, %v5664
        %v5666 = vpop.f32.mrb[0].mxu0
        %v5667 = vadd.f32 0.0, %v5666
        %5668 = vmatprep.mubr.bf16.mxu0 0
        %5669 = vmatmul.mubr.bf16.gmra.mrb[0].mxu0 %v5416
        %v5670 = vpop.f32.mrb[0].mxu0
        %v5671 = vadd.f32 0.0, %v5670
        %v5672 = vpop.f32.mrb[0].mxu0
        %v5673 = vadd.f32 0.0, %v5672
        %v5674 = vpop.f32.mrb[0].mxu0
        %v5675 = vadd.f32 0.0, %v5674
        %v5676 = vpop.f32.mrb[0].mxu0
        %v5677 = vadd.f32 0.0, %v5676
        %5678 = vmatprep.mubr.bf16.mxu0 0
        %5679 = vmatmul.mubr.bf16.gmra.mrb[0].mxu0 %v5417
        %v5680 = vpop.f32.mrb[0].mxu0
        %v5681 = vadd.f32 0.0, %v5680
        %v5682 = vpop.f32.mrb[0].mxu0
        %v5683 = vadd.f32 0.0, %v5682
        %v5684 = vpop.f32.mrb[0].mxu0
        %v5685 = vadd.f32 0.0, %v5684
        %v5686 = vpop.f32.mrb[0].mxu0
        %v5687 = vadd.f32 0.0, %v5686
        %5688 = vmatprep.mubr.bf16.mxu0 0
        %5689 = vmatmul.mubr.bf16.gmra.mrb[0].mxu0 %v5418
        %v5690 = vpop.f32.mrb[0].mxu0
        %v5691 = vadd.f32 0.0, %v5690
        %v5692 = vpop.f32.mrb[0].mxu0
        %v5693 = vadd.f32 0.0, %v5692
        %v5694 = vpop.f32.mrb[0].mxu0
        %v5695 = vadd.f32 0.0, %v5694
        %v5696 = vpop.f32.mrb[0].mxu0
        %v5697 = vadd.f32 0.0, %v5696
        %5698 = vmatprep.mubr.bf16.mxu0 0
        %5699 = vmatmul.mubr.bf16.gmra.mrb[0].mxu0 %v5419
        %v5700 = vpop.f32.mrb[0].mxu0
        %v5701 = vadd.f32 0.0, %v5700
        %v5702 = vpop.f32.mrb[0].mxu0
        %v5703 = vadd.f32 0.0, %v5702
        %v5704 = vpop.f32.mrb[0].mxu0
        %v5705 = vadd.f32 0.0, %v5704
        %v5706 = vpop.f32.mrb[0].mxu0
        %v5707 = vadd.f32 0.0, %v5706
        %5708 = vdwg.mxu0
        %v5709 = vadd.f32 %v4892, %v5551
        %v5710 = vadd.f32 %v4893, %v5555
        %v5711 = vadd.f32 %v4894, %v5561
        %v5712 = vadd.f32 %v4895, %v5565
        %v5713 = vadd.f32 %v4896, %v5571
        %v5714 = vadd.f32 %v4897, %v5575
        %v5715 = vadd.f32 %v4898, %v5581
        %v5716 = vadd.f32 %v4899, %v5585
        %v5717 = vadd.f32 %v4900, %v5591
        %v5718 = vadd.f32 %v4901, %v5595
        %v5719 = vadd.f32 %v4902, %v5601
        %v5720 = vadd.f32 %v4903, %v5605
        %v5721 = vadd.f32 %v4904, %v5611
        %v5722 = vadd.f32 %v4905, %v5615
        %v5723 = vadd.f32 %v4906, %v5621
        %v5724 = vadd.f32 %v4907, %v5625
        %v5725 = vadd.f32 %v4908, %v5631
        %v5726 = vadd.f32 %v4909, %v5635
        %v5727 = vadd.f32 %v4910, %v5641
        %v5728 = vadd.f32 %v4911, %v5645
        %v5729 = vadd.f32 %v4912, %v5651
        %v5730 = vadd.f32 %v4913, %v5655
        %v5731 = vadd.f32 %v4914, %v5661
        %v5732 = vadd.f32 %v4915, %v5665
        %v5733 = vadd.f32 %v4916, %v5671
        %v5734 = vadd.f32 %v4917, %v5675
        %v5735 = vadd.f32 %v4918, %v5681
        %v5736 = vadd.f32 %v4919, %v5685
        %v5737 = vadd.f32 %v4920, %v5691
        %v5738 = vadd.f32 %v4921, %v5695
        %v5739 = vadd.f32 %v4922, %v5701
        %v5740 = vadd.f32 %v4923, %v5705
        %v5741 = vadd.f32 %v4506, %v5553
        %v5742 = vadd.f32 %v4507, %v5557
        %v5743 = vadd.f32 %v4508, %v5563
        %v5744 = vadd.f32 %v4509, %v5567
        %v5745 = vadd.f32 %v4510, %v5573
        %v5746 = vadd.f32 %v4511, %v5577
        %v5747 = vadd.f32 %v4512, %v5583
        %v5748 = vadd.f32 %v4513, %v5587
        %v5749 = vadd.f32 %v4514, %v5593
        %v5750 = vadd.f32 %v4515, %v5597
        %v5751 = vadd.f32 %v4516, %v5603
        %v5752 = vadd.f32 %v4517, %v5607
        %v5753 = vadd.f32 %v4518, %v5613
        %v5754 = vadd.f32 %v4519, %v5617
        %v5755 = vadd.f32 %v4520, %v5623
        %v5756 = vadd.f32 %v4521, %v5627
        %v5757 = vadd.f32 %v4522, %v5633
        %v5758 = vadd.f32 %v4523, %v5637
        %v5759 = vadd.f32 %v4524, %v5643
        %v5760 = vadd.f32 %v4525, %v5647
        %v5761 = vadd.f32 %v4526, %v5653
        %v5762 = vadd.f32 %v4527, %v5657
        %v5763 = vadd.f32 %v4528, %v5663
        %v5764 = vadd.f32 %v4529, %v5667
        %v5765 = vadd.f32 %v4530, %v5673
        %v5766 = vadd.f32 %v4531, %v5677
        %v5767 = vadd.f32 %v4532, %v5683
        %v5768 = vadd.f32 %v4533, %v5687
        %v5769 = vadd.f32 %v4534, %v5693
        %v5770 = vadd.f32 %v4535, %v5697
        %v5771 = vadd.f32 %v4536, %v5703
        %v5772 = vadd.f32 %v4537, %v5707
        %v5773 = vld [vmem:[%s4538] sm:$0xe]
        %v5774 = vld [vmem:[%s4538 + $0xc] sm:$0xe]
        %v5775 = vld [vmem:[%s4538 + $0x18] sm:$0xe]
        %v5776 = vld [vmem:[%s4538 + $0x24] sm:$0xe]
        %v5777 = vld [vmem:[%s4538 + $0x30] sm:$0xe]
        %v5778 = vld [vmem:[%s4538 + $0x3c] sm:$0xe]
        %v5779 = vld [vmem:[%s4538 + $0x48] sm:$0xe]
        %v5780 = vld [vmem:[%s4538 + $0x54] sm:$0xe]
        %v5781 = vld [vmem:[%s4538 + $0x60] sm:$0xe]
        %v5782 = vld [vmem:[%s4538 + $0x6c] sm:$0xe]
        %v5783 = vld [vmem:[%s4538 + $0x78] sm:$0xe]
        %v5784 = vld [vmem:[%s4538 + $0x84] sm:$0xe]
        %v5785 = vld [vmem:[%s4538 + $0x90] sm:$0xe]
        %v5786 = vld [vmem:[%s4538 + $0x9c] sm:$0xe]
        %v5787 = vld [vmem:[%s4538 + $0xa8] sm:$0xe]
        %v5788 = vld [vmem:[%s4538 + $0xb4] sm:$0xe]
        %v5837 = vrot.slane %v5773, 5
        %v5838 = vrot.slane %v5837, 4
        %v5839 = vrot.slane %v4925, 5
        %v5840 = vsel %vm1892, %v5838, %v5839
        %v5841 = vrot.slane %v5839, 4
        %v5842 = vrot.slane %v4926, 5
        %v5843 = vsel %vm1892, %v5841, %v5842
        %v5844 = vrot.slane %v5774, 5
        %v5845 = vrot.slane %v5844, 4
        %v5846 = vrot.slane %v4928, 5
        %v5847 = vsel %vm1892, %v5845, %v5846
        %v5848 = vrot.slane %v5846, 4
        %v5849 = vrot.slane %v4929, 5
        %v5850 = vsel %vm1892, %v5848, %v5849
        %v5851 = vrot.slane %v5775, 5
        %v5852 = vrot.slane %v5851, 4
        %v5853 = vrot.slane %v4931, 5
        %v5854 = vsel %vm1892, %v5852, %v5853
        %v5855 = vrot.slane %v5853, 4
        %v5856 = vrot.slane %v4932, 5
        %v5857 = vsel %vm1892, %v5855, %v5856
        %v5858 = vrot.slane %v5776, 5
        %v5859 = vrot.slane %v5858, 4
        %v5860 = vrot.slane %v4934, 5
        %v5861 = vsel %vm1892, %v5859, %v5860
        %v5862 = vrot.slane %v5860, 4
        %v5863 = vrot.slane %v4935, 5
        %v5864 = vsel %vm1892, %v5862, %v5863
        %v5865 = vrot.slane %v5777, 5
        %v5866 = vrot.slane %v5865, 4
        %v5867 = vrot.slane %v4937, 5
        %v5868 = vsel %vm1892, %v5866, %v5867
        %v5869 = vrot.slane %v5867, 4
        %v5870 = vrot.slane %v4938, 5
        %v5871 = vsel %vm1892, %v5869, %v5870
        %v5872 = vrot.slane %v5778, 5
        %v5873 = vrot.slane %v5872, 4
        %v5874 = vrot.slane %v4940, 5
        %v5875 = vsel %vm1892, %v5873, %v5874
        %v5876 = vrot.slane %v5874, 4
        %v5877 = vrot.slane %v4941, 5
        %v5878 = vsel %vm1892, %v5876, %v5877
        %v5879 = vrot.slane %v5779, 5
        %v5880 = vrot.slane %v5879, 4
        %v5881 = vrot.slane %v4943, 5
        %v5882 = vsel %vm1892, %v5880, %v5881
        %v5883 = vrot.slane %v5881, 4
        %v5884 = vrot.slane %v4944, 5
        %v5885 = vsel %vm1892, %v5883, %v5884
        %v5886 = vrot.slane %v5780, 5
        %v5887 = vrot.slane %v5886, 4
        %v5888 = vrot.slane %v4946, 5
        %v5889 = vsel %vm1892, %v5887, %v5888
        %v5890 = vrot.slane %v5888, 4
        %v5891 = vrot.slane %v4947, 5
        %v5892 = vsel %vm1892, %v5890, %v5891
        %v5893 = vrot.slane %v5781, 5
        %v5894 = vrot.slane %v5893, 4
        %v5895 = vrot.slane %v4949, 5
        %v5896 = vsel %vm1892, %v5894, %v5895
        %v5897 = vrot.slane %v5895, 4
        %v5898 = vrot.slane %v4950, 5
        %v5899 = vsel %vm1892, %v5897, %v5898
        %v5900 = vrot.slane %v5782, 5
        %v5901 = vrot.slane %v5900, 4
        %v5902 = vrot.slane %v4952, 5
        %v5903 = vsel %vm1892, %v5901, %v5902
        %v5904 = vrot.slane %v5902, 4
        %v5905 = vrot.slane %v4953, 5
        %v5906 = vsel %vm1892, %v5904, %v5905
        %v5907 = vrot.slane %v5783, 5
        %v5908 = vrot.slane %v5907, 4
        %v5909 = vrot.slane %v4955, 5
        %v5910 = vsel %vm1892, %v5908, %v5909
        %v5911 = vrot.slane %v5909, 4
        %v5912 = vrot.slane %v4956, 5
        %v5913 = vsel %vm1892, %v5911, %v5912
        %v5914 = vrot.slane %v5784, 5
        %v5915 = vrot.slane %v5914, 4
        %v5916 = vrot.slane %v4958, 5
        %v5917 = vsel %vm1892, %v5915, %v5916
        %v5918 = vrot.slane %v5916, 4
        %v5919 = vrot.slane %v4959, 5
        %v5920 = vsel %vm1892, %v5918, %v5919
        %v5921 = vrot.slane %v5785, 5
        %v5922 = vrot.slane %v5921, 4
        %v5923 = vrot.slane %v4961, 5
        %v5924 = vsel %vm1892, %v5922, %v5923
        %v5925 = vrot.slane %v5923, 4
        %v5926 = vrot.slane %v4962, 5
        %v5927 = vsel %vm1892, %v5925, %v5926
        %v5928 = vrot.slane %v5786, 5
        %v5929 = vrot.slane %v5928, 4
        %v5930 = vrot.slane %v4964, 5
        %v5931 = vsel %vm1892, %v5929, %v5930
        %v5932 = vrot.slane %v5930, 4
        %v5933 = vrot.slane %v4965, 5
        %v5934 = vsel %vm1892, %v5932, %v5933
        %v5935 = vrot.slane %v5787, 5
        %v5936 = vrot.slane %v5935, 4
        %v5937 = vrot.slane %v4967, 5
        %v5938 = vsel %vm1892, %v5936, %v5937
        %v5939 = vrot.slane %v5937, 4
        %v5940 = vrot.slane %v4968, 5
        %v5941 = vsel %vm1892, %v5939, %v5940
        %v5942 = vrot.slane %v5788, 5
        %v5943 = vrot.slane %v5942, 4
        %v5944 = vrot.slane %v4970, 5
        %v5945 = vsel %vm1892, %v5943, %v5944
        %v5946 = vrot.slane %v5944, 4
        %v5947 = vrot.slane %v4971, 5
        %v5948 = vsel %vm1892, %v5946, %v5947
        %v5949 = vld [vmem:[#allocation6 + $0x3c] sm:$0xf]
        %v5950 = vld [vmem:[#allocation6 + $0x7c] sm:$0xf]
        %v5951 = vld [vmem:[#allocation6 + $0xbc] sm:$0xf]
        %v5952 = vld [vmem:[#allocation6 + $0xfc] sm:$0xf]
        %v5953 = vld [vmem:[#allocation6 + $0x13c] sm:$0xf]
        %v5954 = vld [vmem:[#allocation6 + $0x17c] sm:$0xf]
        %v5955 = vld [vmem:[#allocation6 + $0x1bc] sm:$0xf]
        %v5956 = vld [vmem:[#allocation6 + $0x1fc] sm:$0xf]
        %v5957 = vld [vmem:[#allocation6 + $0x23c] sm:$0xf]
        %v5958 = vld [vmem:[#allocation6 + $0x27c] sm:$0xf]
        %v5959 = vld [vmem:[#allocation6 + $0x2bc] sm:$0xf]
        %v5960 = vld [vmem:[#allocation6 + $0x2fc] sm:$0xf]
        %v5961 = vld [vmem:[#allocation6 + $0x33c] sm:$0xf]
        %v5962 = vld [vmem:[#allocation6 + $0x37c] sm:$0xf]
        %v5963 = vld [vmem:[#allocation6 + $0x3bc] sm:$0xf]
        %v5964 = vld [vmem:[#allocation6 + $0x3fc] sm:$0xf]
        %v5965 = vunpack.c.l.b16 %v5840
        %v5966 = vunpack.c.l.b16 %v5843
        %v5967 = vunpack.c.l.b16 %v5847
        %v5968 = vunpack.c.l.b16 %v5850
        %v5969 = vunpack.c.l.b16 %v5854
        %v5970 = vunpack.c.l.b16 %v5857
        %v5971 = vunpack.c.l.b16 %v5861
        %v5972 = vunpack.c.l.b16 %v5864
        %v5973 = vunpack.c.l.b16 %v5868
        %v5974 = vunpack.c.l.b16 %v5871
        %v5975 = vunpack.c.l.b16 %v5875
        %v5976 = vunpack.c.l.b16 %v5878
        %v5977 = vunpack.c.l.b16 %v5882
        %v5978 = vunpack.c.l.b16 %v5885
        %v5979 = vunpack.c.l.b16 %v5889
        %v5980 = vunpack.c.l.b16 %v5892
        %v5981 = vunpack.c.l.b16 %v5896
        %v5982 = vunpack.c.l.b16 %v5899
        %v5983 = vunpack.c.l.b16 %v5903
        %v5984 = vunpack.c.l.b16 %v5906
        %v5985 = vunpack.c.l.b16 %v5910
        %v5986 = vunpack.c.l.b16 %v5913
        %v5987 = vunpack.c.l.b16 %v5917
        %v5988 = vunpack.c.l.b16 %v5920
        %v5989 = vunpack.c.l.b16 %v5924
        %v5990 = vunpack.c.l.b16 %v5927
        %v5991 = vunpack.c.l.b16 %v5931
        %v5992 = vunpack.c.l.b16 %v5934
        %v5993 = vunpack.c.l.b16 %v5938
        %v5994 = vunpack.c.l.b16 %v5941
        %v5995 = vunpack.c.l.b16 %v5945
        %v5996 = vunpack.c.l.b16 %v5948
        %v5997 = vpack.c.b16 %v5966, %v5965
        %v5998 = vpack.c.b16 %v5968, %v5967
        %v5999 = vpack.c.b16 %v5970, %v5969
        %v6000 = vpack.c.b16 %v5972, %v5971
        %v6001 = vpack.c.b16 %v5974, %v5973
        %v6002 = vpack.c.b16 %v5976, %v5975
        %v6003 = vpack.c.b16 %v5978, %v5977
        %v6004 = vpack.c.b16 %v5980, %v5979
        %v6005 = vpack.c.b16 %v5982, %v5981
        %v6006 = vpack.c.b16 %v5984, %v5983
        %v6007 = vpack.c.b16 %v5986, %v5985
        %v6008 = vpack.c.b16 %v5988, %v5987
        %v6009 = vpack.c.b16 %v5990, %v5989
        %v6010 = vpack.c.b16 %v5992, %v5991
        %v6011 = vpack.c.b16 %v5994, %v5993
        %v6012 = vpack.c.b16 %v5996, %v5995
        %v6045 = vunpack.c.l.b16 %v5949
        %v6046 = vunpack.c.l.b16 %v5950
        %v6047 = vunpack.c.l.b16 %v5951
        %v6048 = vunpack.c.l.b16 %v5952
        %v6049 = vunpack.c.l.b16 %v5953
        %v6050 = vunpack.c.l.b16 %v5954
        %v6051 = vunpack.c.l.b16 %v5955
        %v6052 = vunpack.c.l.b16 %v5956
        %v6053 = vunpack.c.l.b16 %v5957
        %v6054 = vunpack.c.l.b16 %v5958
        %v6055 = vunpack.c.l.b16 %v5959
        %v6056 = vunpack.c.l.b16 %v5960
        %v6057 = vunpack.c.l.b16 %v5961
        %v6058 = vunpack.c.l.b16 %v5962
        %v6059 = vunpack.c.l.b16 %v5963
        %v6060 = vunpack.c.l.b16 %v5964
        %v6061 = vpack.c.b16 %v6046, %v6045
        %v6062 = vpack.c.b16 %v6048, %v6047
        %v6063 = vpack.c.b16 %v6050, %v6049
        %v6064 = vpack.c.b16 %v6052, %v6051
        %v6065 = vpack.c.b16 %v6054, %v6053
        %v6066 = vpack.c.b16 %v6056, %v6055
        %v6067 = vpack.c.b16 %v6058, %v6057
        %v6068 = vpack.c.b16 %v6060, %v6059
        %6077 = vmatprep.subr.bf16.mxu0 0
        %6078 = vmatpush1.bf16.msra.mxu0 %v6061
        %6079 = vmatprep.subr.bf16.mxu0 0
        %6080 = vmatpush1.bf16.msra.mxu0 %v6062
        %6081 = vmatprep.subr.bf16.mxu0 0
        %6082 = vmatpush1.bf16.msra.mxu0 %v6063
        %6083 = vmatprep.subr.bf16.mxu0 0
        %6084 = vmatpush1.bf16.msra.mxu0 %v6064
        %6085 = vmatprep.subr.bf16.mxu0 0
        %6086 = vmatpush1.bf16.msra.mxu0 %v6065
        %6087 = vmatprep.subr.bf16.mxu0 0
        %6088 = vmatpush1.bf16.msra.mxu0 %v6066
        %6089 = vmatprep.subr.bf16.mxu0 0
        %6090 = vmatpush1.bf16.msra.mxu0 %v6067
        %6091 = vmatprep.subr.bf16.mxu0 0
        %6092 = vmatpush1.bf16.msra.mxu0 %v6068
        %6093 = vmatprep.subr.bf16.mxu0 0
        %6094 = vmatpush1.bf16.msra.mxu0 0
        %6095 = vmatprep.subr.bf16.mxu0 0
        %6096 = vmatpush1.bf16.msra.mxu0 0
        %6097 = vmatprep.subr.bf16.mxu0 0
        %6098 = vmatpush1.bf16.msra.mxu0 0
        %6099 = vmatprep.subr.bf16.mxu0 0
        %6100 = vmatpush1.bf16.msra.mxu0 0
        %6101 = vmatprep.subr.bf16.mxu0 0
        %6102 = vmatpush1.bf16.msra.mxu0 0
        %6103 = vmatprep.subr.bf16.mxu0 0
        %6104 = vmatpush1.bf16.msra.mxu0 0
        %6105 = vmatprep.subr.bf16.mxu0 0
        %6106 = vmatpush1.bf16.msra.mxu0 0
        %6107 = vmatprep.subr.bf16.mxu0 0
        %6108 = vmatpush1.bf16.msra.mxu0 0
        %6109 = vmatprep.mubr.bf16.mxu0 0
        %6110 = vmatmul.mubr.bf16.gmra.mrb[0].mxu0 %v5997
        %v6111 = vpop.f32.mrb[0].mxu0
        %v6112 = vadd.f32 0.0, %v6111
        %v6113 = vpop.f32.mrb[0].mxu0
        %v6114 = vpop.f32.mrb[0].mxu0
        %v6115 = vadd.f32 0.0, %v6114
        %v6116 = vpop.f32.mrb[0].mxu0
        %6117 = vmatprep.mubr.bf16.mxu0 0
        %6118 = vmatmul.mubr.bf16.gmra.mrb[0].mxu0 %v5998
        %v6119 = vpop.f32.mrb[0].mxu0
        %v6120 = vadd.f32 0.0, %v6119
        %v6121 = vpop.f32.mrb[0].mxu0
        %v6122 = vpop.f32.mrb[0].mxu0
        %v6123 = vadd.f32 0.0, %v6122
        %v6124 = vpop.f32.mrb[0].mxu0
        %6125 = vmatprep.mubr.bf16.mxu0 0
        %6126 = vmatmul.mubr.bf16.gmra.mrb[0].mxu0 %v5999
        %v6127 = vpop.f32.mrb[0].mxu0
        %v6128 = vadd.f32 0.0, %v6127
        %v6129 = vpop.f32.mrb[0].mxu0
        %v6130 = vpop.f32.mrb[0].mxu0
        %v6131 = vadd.f32 0.0, %v6130
        %v6132 = vpop.f32.mrb[0].mxu0
        %6133 = vmatprep.mubr.bf16.mxu0 0
        %6134 = vmatmul.mubr.bf16.gmra.mrb[0].mxu0 %v6000
        %v6135 = vpop.f32.mrb[0].mxu0
        %v6136 = vadd.f32 0.0, %v6135
        %v6137 = vpop.f32.mrb[0].mxu0
        %v6138 = vpop.f32.mrb[0].mxu0
        %v6139 = vadd.f32 0.0, %v6138
        %v6140 = vpop.f32.mrb[0].mxu0
        %6141 = vmatprep.mubr.bf16.mxu0 0
        %6142 = vmatmul.mubr.bf16.gmra.mrb[0].mxu0 %v6001
        %v6143 = vpop.f32.mrb[0].mxu0
        %v6144 = vadd.f32 0.0, %v6143
        %v6145 = vpop.f32.mrb[0].mxu0
        %v6146 = vpop.f32.mrb[0].mxu0
        %v6147 = vadd.f32 0.0, %v6146
        %v6148 = vpop.f32.mrb[0].mxu0
        %6149 = vmatprep.mubr.bf16.mxu0 0
        %6150 = vmatmul.mubr.bf16.gmra.mrb[0].mxu0 %v6002
        %v6151 = vpop.f32.mrb[0].mxu0
        %v6152 = vadd.f32 0.0, %v6151
        %v6153 = vpop.f32.mrb[0].mxu0
        %v6154 = vpop.f32.mrb[0].mxu0
        %v6155 = vadd.f32 0.0, %v6154
        %v6156 = vpop.f32.mrb[0].mxu0
        %6157 = vmatprep.mubr.bf16.mxu0 0
        %6158 = vmatmul.mubr.bf16.gmra.mrb[0].mxu0 %v6003
        %v6159 = vpop.f32.mrb[0].mxu0
        %v6160 = vadd.f32 0.0, %v6159
        %v6161 = vpop.f32.mrb[0].mxu0
        %v6162 = vpop.f32.mrb[0].mxu0
        %v6163 = vadd.f32 0.0, %v6162
        %v6164 = vpop.f32.mrb[0].mxu0
        %6165 = vmatprep.mubr.bf16.mxu0 0
        %6166 = vmatmul.mubr.bf16.gmra.mrb[0].mxu0 %v6004
        %v6167 = vpop.f32.mrb[0].mxu0
        %v6168 = vadd.f32 0.0, %v6167
        %v6169 = vpop.f32.mrb[0].mxu0
        %v6170 = vpop.f32.mrb[0].mxu0
        %v6171 = vadd.f32 0.0, %v6170
        %v6172 = vpop.f32.mrb[0].mxu0
        %6173 = vmatprep.mubr.bf16.mxu0 0
        %6174 = vmatmul.mubr.bf16.gmra.mrb[0].mxu0 %v6005
        %v6175 = vpop.f32.mrb[0].mxu0
        %v6176 = vadd.f32 0.0, %v6175
        %v6177 = vpop.f32.mrb[0].mxu0
        %v6178 = vpop.f32.mrb[0].mxu0
        %v6179 = vadd.f32 0.0, %v6178
        %v6180 = vpop.f32.mrb[0].mxu0
        %6181 = vmatprep.mubr.bf16.mxu0 0
        %6182 = vmatmul.mubr.bf16.gmra.mrb[0].mxu0 %v6006
        %v6183 = vpop.f32.mrb[0].mxu0
        %v6184 = vadd.f32 0.0, %v6183
        %v6185 = vpop.f32.mrb[0].mxu0
        %v6186 = vpop.f32.mrb[0].mxu0
        %v6187 = vadd.f32 0.0, %v6186
        %v6188 = vpop.f32.mrb[0].mxu0
        %6189 = vmatprep.mubr.bf16.mxu0 0
        %6190 = vmatmul.mubr.bf16.gmra.mrb[0].mxu0 %v6007
        %v6191 = vpop.f32.mrb[0].mxu0
        %v6192 = vadd.f32 0.0, %v6191
        %v6193 = vpop.f32.mrb[0].mxu0
        %v6194 = vpop.f32.mrb[0].mxu0
        %v6195 = vadd.f32 0.0, %v6194
        %v6196 = vpop.f32.mrb[0].mxu0
        %6197 = vmatprep.mubr.bf16.mxu0 0
        %6198 = vmatmul.mubr.bf16.gmra.mrb[0].mxu0 %v6008
        %v6199 = vpop.f32.mrb[0].mxu0
        %v6200 = vadd.f32 0.0, %v6199
        %v6201 = vpop.f32.mrb[0].mxu0
        %v6202 = vpop.f32.mrb[0].mxu0
        %v6203 = vadd.f32 0.0, %v6202
        %v6204 = vpop.f32.mrb[0].mxu0
        %6205 = vmatprep.mubr.bf16.mxu0 0
        %6206 = vmatmul.mubr.bf16.gmra.mrb[0].mxu0 %v6009
        %v6207 = vpop.f32.mrb[0].mxu0
        %v6208 = vadd.f32 0.0, %v6207
        %v6209 = vpop.f32.mrb[0].mxu0
        %v6210 = vpop.f32.mrb[0].mxu0
        %v6211 = vadd.f32 0.0, %v6210
        %v6212 = vpop.f32.mrb[0].mxu0
        %6213 = vmatprep.mubr.bf16.mxu0 0
        %6214 = vmatmul.mubr.bf16.gmra.mrb[0].mxu0 %v6010
        %v6215 = vpop.f32.mrb[0].mxu0
        %v6216 = vadd.f32 0.0, %v6215
        %v6217 = vpop.f32.mrb[0].mxu0
        %v6218 = vpop.f32.mrb[0].mxu0
        %v6219 = vadd.f32 0.0, %v6218
        %v6220 = vpop.f32.mrb[0].mxu0
        %6221 = vmatprep.mubr.bf16.mxu0 0
        %6222 = vmatmul.mubr.bf16.gmra.mrb[0].mxu0 %v6011
        %v6223 = vpop.f32.mrb[0].mxu0
        %v6224 = vadd.f32 0.0, %v6223
        %v6225 = vpop.f32.mrb[0].mxu0
        %v6226 = vpop.f32.mrb[0].mxu0
        %v6227 = vadd.f32 0.0, %v6226
        %v6228 = vpop.f32.mrb[0].mxu0
        %6229 = vmatprep.mubr.bf16.mxu0 0
        %6230 = vmatmul.mubr.bf16.gmra.mrb[0].mxu0 %v6012
        %v6231 = vpop.f32.mrb[0].mxu0
        %v6232 = vadd.f32 0.0, %v6231
        %v6233 = vpop.f32.mrb[0].mxu0
        %v6234 = vpop.f32.mrb[0].mxu0
        %v6235 = vadd.f32 0.0, %v6234
        %v6236 = vpop.f32.mrb[0].mxu0
        %6237 = vdwg.mxu0
        %v6238 = vadd.f32 %v5741, %v6112
        %v6239 = vadd.f32 %v5742, %v6115
        %v6240 = vadd.f32 %v5743, %v6120
        %v6241 = vadd.f32 %v5744, %v6123
        %v6242 = vadd.f32 %v5745, %v6128
        %v6243 = vadd.f32 %v5746, %v6131
        %v6244 = vadd.f32 %v5747, %v6136
        %v6245 = vadd.f32 %v5748, %v6139
        %v6246 = vadd.f32 %v5749, %v6144
        %v6247 = vadd.f32 %v5750, %v6147
        %v6248 = vadd.f32 %v5751, %v6152
        %v6249 = vadd.f32 %v5752, %v6155
        %v6250 = vadd.f32 %v5753, %v6160
        %v6251 = vadd.f32 %v5754, %v6163
        %v6252 = vadd.f32 %v5755, %v6168
        %v6253 = vadd.f32 %v5756, %v6171
        %v6254 = vadd.f32 %v5757, %v6176
        %v6255 = vadd.f32 %v5758, %v6179
        %v6256 = vadd.f32 %v5759, %v6184
        %v6257 = vadd.f32 %v5760, %v6187
        %v6258 = vadd.f32 %v5761, %v6192
        %v6259 = vadd.f32 %v5762, %v6195
        %v6260 = vadd.f32 %v5763, %v6200
        %v6261 = vadd.f32 %v5764, %v6203
        %v6262 = vadd.f32 %v5765, %v6208
        %v6263 = vadd.f32 %v5766, %v6211
        %v6264 = vadd.f32 %v5767, %v6216
        %v6265 = vadd.f32 %v5768, %v6219
        %v6266 = vadd.f32 %v5769, %v6224
        %v6267 = vadd.f32 %v5770, %v6227
        %v6268 = vadd.f32 %v5771, %v6232
        %v6269 = vadd.f32 %v5772, %v6235
        %v6271 = vlaneseq
        %v6272 = vshrl.u32 %v6271, 7
        %v6273 = vsub.s32 0, %v6272
        %v6274 = vrot.slane %v732, %v6273
        %v6276 = vadd.f32 %v3849, %v6274
        %v6277 = vadd.f32 %v3850, %v6274
        %v6278 = vadd.f32 %v3851, %v6274
        %v6279 = vadd.f32 %v3852, %v6274
        %v6280 = vadd.f32 %v3853, %v6274
        %v6281 = vadd.f32 %v3854, %v6274
        %v6282 = vadd.f32 %v3855, %v6274
        %v6283 = vadd.f32 %v3856, %v6274
        %v6284 = vadd.f32 %v3857, %v6274
        %v6285 = vadd.f32 %v3858, %v6274
        %v6286 = vadd.f32 %v3859, %v6274
        %v6287 = vadd.f32 %v3860, %v6274
        %v6288 = vadd.f32 %v3861, %v6274
        %v6289 = vadd.f32 %v3862, %v6274
        %v6290 = vadd.f32 %v3863, %v6274
        %v6291 = vadd.f32 %v3864, %v6274
        %v6292 = vadd.f32 %v3865, %v6274
        %v6293 = vadd.f32 %v3866, %v6274
        %v6294 = vadd.f32 %v3867, %v6274
        %v6295 = vadd.f32 %v3868, %v6274
        %v6296 = vadd.f32 %v3869, %v6274
        %v6297 = vadd.f32 %v3870, %v6274
        %v6298 = vadd.f32 %v3871, %v6274
        %v6299 = vadd.f32 %v3872, %v6274
        %v6300 = vadd.f32 %v3873, %v6274
        %v6301 = vadd.f32 %v3874, %v6274
        %v6302 = vadd.f32 %v3875, %v6274
        %v6303 = vadd.f32 %v3876, %v6274
        %v6304 = vadd.f32 %v3877, %v6274
        %v6305 = vadd.f32 %v3878, %v6274
        %v6306 = vadd.f32 %v3879, %v6274
        %v6307 = vadd.f32 %v3880, %v6274
        %6308 = vst [vmem:[%s203] sm:$0xff] %v6276
        %6309 = vst [vmem:[%s203 + $0x8] sm:$0xff] %v6277
        %6310 = vst [vmem:[%s203 + $0x10] sm:$0xff] %v6278
        %6311 = vst [vmem:[%s203 + $0x18] sm:$0xff] %v6279
        %6312 = vst [vmem:[%s203 + $0x20] sm:$0xff] %v6280
        %6313 = vst [vmem:[%s203 + $0x28] sm:$0xff] %v6281
        %6314 = vst [vmem:[%s203 + $0x30] sm:$0xff] %v6282
        %6315 = vst [vmem:[%s203 + $0x38] sm:$0xff] %v6283
        %6316 = vst [vmem:[%s203 + $0x40] sm:$0xff] %v6284
        %6317 = vst [vmem:[%s203 + $0x48] sm:$0xff] %v6285
        %6318 = vst [vmem:[%s203 + $0x50] sm:$0xff] %v6286
        %6319 = vst [vmem:[%s203 + $0x58] sm:$0xff] %v6287
        %6320 = vst [vmem:[%s203 + $0x60] sm:$0xff] %v6288
        %6321 = vst [vmem:[%s203 + $0x68] sm:$0xff] %v6289
        %6322 = vst [vmem:[%s203 + $0x70] sm:$0xff] %v6290
        %6323 = vst [vmem:[%s203 + $0x78] sm:$0xff] %v6291
        %6324 = vst [vmem:[%s203 + $0x80] sm:$0xff] %v6292
        %6325 = vst [vmem:[%s203 + $0x88] sm:$0xff] %v6293
        %6326 = vst [vmem:[%s203 + $0x90] sm:$0xff] %v6294
        %6327 = vst [vmem:[%s203 + $0x98] sm:$0xff] %v6295
        %6328 = vst [vmem:[%s203 + $0xa0] sm:$0xff] %v6296
        %6329 = vst [vmem:[%s203 + $0xa8] sm:$0xff] %v6297
        %6330 = vst [vmem:[%s203 + $0xb0] sm:$0xff] %v6298
        %6331 = vst [vmem:[%s203 + $0xb8] sm:$0xff] %v6299
        %6332 = vst [vmem:[%s203 + $0xc0] sm:$0xff] %v6300
        %6333 = vst [vmem:[%s203 + $0xc8] sm:$0xff] %v6301
        %6334 = vst [vmem:[%s203 + $0xd0] sm:$0xff] %v6302
        %6335 = vst [vmem:[%s203 + $0xd8] sm:$0xff] %v6303
        %6336 = vst [vmem:[%s203 + $0xe0] sm:$0xff] %v6304
        %6337 = vst [vmem:[%s203 + $0xe8] sm:$0xff] %v6305
        %6338 = vst [vmem:[%s203 + $0xf0] sm:$0xff] %v6306
        %6339 = vst [vmem:[%s203 + $0xf8] sm:$0xff] %v6307
        %v6340 = vadd.f32 %v4474, %v6274
        %v6341 = vadd.f32 %v4475, %v6274
        %v6342 = vadd.f32 %v4476, %v6274
        %v6343 = vadd.f32 %v4477, %v6274
        %v6344 = vadd.f32 %v4478, %v6274
        %v6345 = vadd.f32 %v4479, %v6274
        %v6346 = vadd.f32 %v4480, %v6274
        %v6347 = vadd.f32 %v4481, %v6274
        %v6348 = vadd.f32 %v4482, %v6274
        %v6349 = vadd.f32 %v4483, %v6274
        %v6350 = vadd.f32 %v4484, %v6274
        %v6351 = vadd.f32 %v4485, %v6274
        %v6352 = vadd.f32 %v4486, %v6274
        %v6353 = vadd.f32 %v4487, %v6274
        %v6354 = vadd.f32 %v4488, %v6274
        %v6355 = vadd.f32 %v4489, %v6274
        %v6356 = vadd.f32 %v4490, %v6274
        %v6357 = vadd.f32 %v4491, %v6274
        %v6358 = vadd.f32 %v4492, %v6274
        %v6359 = vadd.f32 %v4493, %v6274
        %v6360 = vadd.f32 %v4494, %v6274
        %v6361 = vadd.f32 %v4495, %v6274
        %v6362 = vadd.f32 %v4496, %v6274
        %v6363 = vadd.f32 %v4497, %v6274
        %v6364 = vadd.f32 %v4498, %v6274
        %v6365 = vadd.f32 %v4499, %v6274
        %v6366 = vadd.f32 %v4500, %v6274
        %v6367 = vadd.f32 %v4501, %v6274
        %v6368 = vadd.f32 %v4502, %v6274
        %v6369 = vadd.f32 %v4503, %v6274
        %v6370 = vadd.f32 %v4504, %v6274
        %v6371 = vadd.f32 %v4505, %v6274
        %s6372 = scalar_lea.vmem %s203, 256 [#allocation8]
        %6373 = vst [vmem:[%s6372] sm:$0xff] %v6340
        %6374 = vst [vmem:[%s6372 + $0x8] sm:$0xff] %v6341
        %6375 = vst [vmem:[%s6372 + $0x10] sm:$0xff] %v6342
        %6376 = vst [vmem:[%s6372 + $0x18] sm:$0xff] %v6343
        %6377 = vst [vmem:[%s6372 + $0x20] sm:$0xff] %v6344
        %6378 = vst [vmem:[%s6372 + $0x28] sm:$0xff] %v6345
        %6379 = vst [vmem:[%s6372 + $0x30] sm:$0xff] %v6346
        %6380 = vst [vmem:[%s6372 + $0x38] sm:$0xff] %v6347
        %6381 = vst [vmem:[%s6372 + $0x40] sm:$0xff] %v6348
        %6382 = vst [vmem:[%s6372 + $0x48] sm:$0xff] %v6349
        %6383 = vst [vmem:[%s6372 + $0x50] sm:$0xff] %v6350
        %6384 = vst [vmem:[%s6372 + $0x58] sm:$0xff] %v6351
        %6385 = vst [vmem:[%s6372 + $0x60] sm:$0xff] %v6352
        %6386 = vst [vmem:[%s6372 + $0x68] sm:$0xff] %v6353
        %6387 = vst [vmem:[%s6372 + $0x70] sm:$0xff] %v6354
        %6388 = vst [vmem:[%s6372 + $0x78] sm:$0xff] %v6355
        %6389 = vst [vmem:[%s6372 + $0x80] sm:$0xff] %v6356
        %6390 = vst [vmem:[%s6372 + $0x88] sm:$0xff] %v6357
        %6391 = vst [vmem:[%s6372 + $0x90] sm:$0xff] %v6358
        %6392 = vst [vmem:[%s6372 + $0x98] sm:$0xff] %v6359
        %6393 = vst [vmem:[%s6372 + $0xa0] sm:$0xff] %v6360
        %6394 = vst [vmem:[%s6372 + $0xa8] sm:$0xff] %v6361
        %6395 = vst [vmem:[%s6372 + $0xb0] sm:$0xff] %v6362
        %6396 = vst [vmem:[%s6372 + $0xb8] sm:$0xff] %v6363
        %6397 = vst [vmem:[%s6372 + $0xc0] sm:$0xff] %v6364
        %6398 = vst [vmem:[%s6372 + $0xc8] sm:$0xff] %v6365
        %6399 = vst [vmem:[%s6372 + $0xd0] sm:$0xff] %v6366
        %6400 = vst [vmem:[%s6372 + $0xd8] sm:$0xff] %v6367
        %6401 = vst [vmem:[%s6372 + $0xe0] sm:$0xff] %v6368
        %6402 = vst [vmem:[%s6372 + $0xe8] sm:$0xff] %v6369
        %6403 = vst [vmem:[%s6372 + $0xf0] sm:$0xff] %v6370
        %6404 = vst [vmem:[%s6372 + $0xf8] sm:$0xff] %v6371
        %v6405 = vadd.f32 %v5709, %v6274
        %v6406 = vadd.f32 %v5710, %v6274
        %v6407 = vadd.f32 %v5711, %v6274
        %v6408 = vadd.f32 %v5712, %v6274
        %v6409 = vadd.f32 %v5713, %v6274
        %v6410 = vadd.f32 %v5714, %v6274
        %v6411 = vadd.f32 %v5715, %v6274
        %v6412 = vadd.f32 %v5716, %v6274
        %v6413 = vadd.f32 %v5717, %v6274
        %v6414 = vadd.f32 %v5718, %v6274
        %v6415 = vadd.f32 %v5719, %v6274
        %v6416 = vadd.f32 %v5720, %v6274
        %v6417 = vadd.f32 %v5721, %v6274
        %v6418 = vadd.f32 %v5722, %v6274
        %v6419 = vadd.f32 %v5723, %v6274
        %v6420 = vadd.f32 %v5724, %v6274
        %v6421 = vadd.f32 %v5725, %v6274
        %v6422 = vadd.f32 %v5726, %v6274
        %v6423 = vadd.f32 %v5727, %v6274
        %v6424 = vadd.f32 %v5728, %v6274
        %v6425 = vadd.f32 %v5729, %v6274
        %v6426 = vadd.f32 %v5730, %v6274
        %v6427 = vadd.f32 %v5731, %v6274
        %v6428 = vadd.f32 %v5732, %v6274
        %v6429 = vadd.f32 %v5733, %v6274
        %v6430 = vadd.f32 %v5734, %v6274
        %v6431 = vadd.f32 %v5735, %v6274
        %v6432 = vadd.f32 %v5736, %v6274
        %v6433 = vadd.f32 %v5737, %v6274
        %v6434 = vadd.f32 %v5738, %v6274
        %v6435 = vadd.f32 %v5739, %v6274
        %v6436 = vadd.f32 %v5740, %v6274
        %s6437 = scalar_lea.vmem %s203, 512 [#allocation8]
        %6438 = vst [vmem:[%s6437] sm:$0xff] %v6405
        %6439 = vst [vmem:[%s6437 + $0x8] sm:$0xff] %v6406
        %6440 = vst [vmem:[%s6437 + $0x10] sm:$0xff] %v6407
        %6441 = vst [vmem:[%s6437 + $0x18] sm:$0xff] %v6408
        %6442 = vst [vmem:[%s6437 + $0x20] sm:$0xff] %v6409
        %6443 = vst [vmem:[%s6437 + $0x28] sm:$0xff] %v6410
        %6444 = vst [vmem:[%s6437 + $0x30] sm:$0xff] %v6411
        %6445 = vst [vmem:[%s6437 + $0x38] sm:$0xff] %v6412
        %6446 = vst [vmem:[%s6437 + $0x40] sm:$0xff] %v6413
        %6447 = vst [vmem:[%s6437 + $0x48] sm:$0xff] %v6414
        %6448 = vst [vmem:[%s6437 + $0x50] sm:$0xff] %v6415
        %6449 = vst [vmem:[%s6437 + $0x58] sm:$0xff] %v6416
        %6450 = vst [vmem:[%s6437 + $0x60] sm:$0xff] %v6417
        %6451 = vst [vmem:[%s6437 + $0x68] sm:$0xff] %v6418
        %6452 = vst [vmem:[%s6437 + $0x70] sm:$0xff] %v6419
        %6453 = vst [vmem:[%s6437 + $0x78] sm:$0xff] %v6420
        %6454 = vst [vmem:[%s6437 + $0x80] sm:$0xff] %v6421
        %6455 = vst [vmem:[%s6437 + $0x88] sm:$0xff] %v6422
        %6456 = vst [vmem:[%s6437 + $0x90] sm:$0xff] %v6423
        %6457 = vst [vmem:[%s6437 + $0x98] sm:$0xff] %v6424
        %6458 = vst [vmem:[%s6437 + $0xa0] sm:$0xff] %v6425
        %6459 = vst [vmem:[%s6437 + $0xa8] sm:$0xff] %v6426
        %6460 = vst [vmem:[%s6437 + $0xb0] sm:$0xff] %v6427
        %6461 = vst [vmem:[%s6437 + $0xb8] sm:$0xff] %v6428
        %6462 = vst [vmem:[%s6437 + $0xc0] sm:$0xff] %v6429
        %6463 = vst [vmem:[%s6437 + $0xc8] sm:$0xff] %v6430
        %6464 = vst [vmem:[%s6437 + $0xd0] sm:$0xff] %v6431
        %6465 = vst [vmem:[%s6437 + $0xd8] sm:$0xff] %v6432
        %6466 = vst [vmem:[%s6437 + $0xe0] sm:$0xff] %v6433
        %6467 = vst [vmem:[%s6437 + $0xe8] sm:$0xff] %v6434
        %6468 = vst [vmem:[%s6437 + $0xf0] sm:$0xff] %v6435
        %6469 = vst [vmem:[%s6437 + $0xf8] sm:$0xff] %v6436
        %v6470 = vadd.f32 %v6238, %v6274
        %v6471 = vadd.f32 %v6239, %v6274
        %v6472 = vadd.f32 %v6240, %v6274
        %v6473 = vadd.f32 %v6241, %v6274
        %v6474 = vadd.f32 %v6242, %v6274
        %v6475 = vadd.f32 %v6243, %v6274
        %v6476 = vadd.f32 %v6244, %v6274
        %v6477 = vadd.f32 %v6245, %v6274
        %v6478 = vadd.f32 %v6246, %v6274
        %v6479 = vadd.f32 %v6247, %v6274
        %v6480 = vadd.f32 %v6248, %v6274
        %v6481 = vadd.f32 %v6249, %v6274
        %v6482 = vadd.f32 %v6250, %v6274
        %v6483 = vadd.f32 %v6251, %v6274
        %v6484 = vadd.f32 %v6252, %v6274
        %v6485 = vadd.f32 %v6253, %v6274
        %v6486 = vadd.f32 %v6254, %v6274
        %v6487 = vadd.f32 %v6255, %v6274
        %v6488 = vadd.f32 %v6256, %v6274
        %v6489 = vadd.f32 %v6257, %v6274
        %v6490 = vadd.f32 %v6258, %v6274
        %v6491 = vadd.f32 %v6259, %v6274
        %v6492 = vadd.f32 %v6260, %v6274
        %v6493 = vadd.f32 %v6261, %v6274
        %v6494 = vadd.f32 %v6262, %v6274
        %v6495 = vadd.f32 %v6263, %v6274
        %v6496 = vadd.f32 %v6264, %v6274
        %v6497 = vadd.f32 %v6265, %v6274
        %v6498 = vadd.f32 %v6266, %v6274
        %v6499 = vadd.f32 %v6267, %v6274
        %v6500 = vadd.f32 %v6268, %v6274
        %v6501 = vadd.f32 %v6269, %v6274
        %s6502 = scalar_lea.vmem %s203, 768 [#allocation8]
        %6503 = vst [vmem:[%s6502] sm:$0xff] %v6470
        %6504 = vst [vmem:[%s6502 + $0x8] sm:$0xff] %v6471
        %6505 = vst [vmem:[%s6502 + $0x10] sm:$0xff] %v6472
        %6506 = vst [vmem:[%s6502 + $0x18] sm:$0xff] %v6473
        %6507 = vst [vmem:[%s6502 + $0x20] sm:$0xff] %v6474
        %6508 = vst [vmem:[%s6502 + $0x28] sm:$0xff] %v6475
        %6509 = vst [vmem:[%s6502 + $0x30] sm:$0xff] %v6476
        %6510 = vst [vmem:[%s6502 + $0x38] sm:$0xff] %v6477
        %6511 = vst [vmem:[%s6502 + $0x40] sm:$0xff] %v6478
        %6512 = vst [vmem:[%s6502 + $0x48] sm:$0xff] %v6479
        %6513 = vst [vmem:[%s6502 + $0x50] sm:$0xff] %v6480
        %6514 = vst [vmem:[%s6502 + $0x58] sm:$0xff] %v6481
        %6515 = vst [vmem:[%s6502 + $0x60] sm:$0xff] %v6482
        %6516 = vst [vmem:[%s6502 + $0x68] sm:$0xff] %v6483
        %6517 = vst [vmem:[%s6502 + $0x70] sm:$0xff] %v6484
        %6518 = vst [vmem:[%s6502 + $0x78] sm:$0xff] %v6485
        %6519 = vst [vmem:[%s6502 + $0x80] sm:$0xff] %v6486
        %6520 = vst [vmem:[%s6502 + $0x88] sm:$0xff] %v6487
        %6521 = vst [vmem:[%s6502 + $0x90] sm:$0xff] %v6488
        %6522 = vst [vmem:[%s6502 + $0x98] sm:$0xff] %v6489
        %6523 = vst [vmem:[%s6502 + $0xa0] sm:$0xff] %v6490
        %6524 = vst [vmem:[%s6502 + $0xa8] sm:$0xff] %v6491
        %6525 = vst [vmem:[%s6502 + $0xb0] sm:$0xff] %v6492
        %6526 = vst [vmem:[%s6502 + $0xb8] sm:$0xff] %v6493
        %6527 = vst [vmem:[%s6502 + $0xc0] sm:$0xff] %v6494
        %6528 = vst [vmem:[%s6502 + $0xc8] sm:$0xff] %v6495
        %6529 = vst [vmem:[%s6502 + $0xd0] sm:$0xff] %v6496
        %6530 = vst [vmem:[%s6502 + $0xd8] sm:$0xff] %v6497
        %6531 = vst [vmem:[%s6502 + $0xe0] sm:$0xff] %v6498
        %6532 = vst [vmem:[%s6502 + $0xe8] sm:$0xff] %v6499
        %6533 = vst [vmem:[%s6502 + $0xf0] sm:$0xff] %v6500
        %6534 = vst [vmem:[%s6502 + $0xf8] sm:$0xff] %v6501
        %s6535 = sand.u32 %s97, 1
        %s6536 = scalar_lea.sflag [#allocation5], %s6535
        %s6537 = sand.u32 %s97, 1
        %s6538 = smul.addr %s6537, 1024
        %s6539 = scalar_lea.vmem [#allocation8], %s6538
        // Predicated region
        $region41: #{tpu_custom_call.1} parent=31 // pred_check
          %p6540 = pneg %p107
        $region42: #{tpu_custom_call.1} parent=31 // pred_check_branch
          %6542 = sbr.rel (%p6540) target = $region44
        $region43: #{tpu_custom_call.1} parent=31 // pred_region
          %s6544 = ssub.s32 16384, 16384
          %6545 = vsyncadd %s6536, %s6544
          %s6546 = smul.addr %s21, 128
          %s6547 = smul.addr %s6546, 128
          %s6548 = scalar_lea.hbm %s3, %s6547
          %s6549 = sshll.u32 %s6539, 4
          %s6550 = int_to_ptr.vmem [resolvable:$true] %s6549
          %6555 = dma.vmem_to_hbm [thread:$0]  %s6550, 16384, %s6548, %s6536, 128, 128, 8
        $region44: #{tpu_custom_call.1} parent=31 // pred_fallthru
          _
      $region32: #{tpu_custom_call.1} parent=5 // pred_fallthru
        _
      %p6556 = scmp.le.s32.totalorder 2, %s16
      // Predicated region
      $region45: #{tpu_custom_call.1} parent=5 // pred_check
        %p6557 = pneg %p6556
      $region46: #{tpu_custom_call.1} parent=5 // pred_check_branch
        %6559 = sbr.rel (%p6557) target = $region48
      $region47: #{tpu_custom_call.1} parent=5 // pred_region
        %s6560 = ssub.s32 %s16, 2
        // Predicated region
        $region49: #{tpu_custom_call.1} parent=47 // pred_check
          %p6561 = pneg %p113
        $region50: #{tpu_custom_call.1} parent=47 // pred_check_branch
          %6563 = sbr.rel (%p6561) target = $region52
        $region51: #{tpu_custom_call.1} parent=47 // pred_region
          %s6564 = sand.u32 %s98, 1
          %s6565 = scalar_lea.sflag [#allocation5], %s6564
          %s6566 = sand.u32 %s98, 1
          %s6567 = smul.addr %s6566, 1024
          %s6568 = scalar_lea.vmem [#allocation8], %s6567
          %6569 = dma.done %s6565, 16384
        $region52: #{tpu_custom_call.1} parent=47 // pred_fallthru
          _
      $region48: #{tpu_custom_call.1} parent=5 // pred_fallthru
        _
    $region6: #{tpu_custom_call.1} parent=1 // loop_footer
      %s20 = sadd.s32 1, %s16
    $region7: #{tpu_custom_call.1} parent=1 // loop_footer_branch
      %15 = sbr.rel target = $region3
    $region8: #{tpu_custom_call.1} parent=1 // loop_exit
      _
    %6570 = vsyncpa [#allocation4], 1
    %s6571 = scalar_lea.sflag [#allocation4], 1
    %6572 = vsyncpa %s6571, 1
    %6573 = vsyncpa [#allocation7], 1
    %6574 = vsyncpa [#allocation5], 1
    %s6575 = scalar_lea.sflag [#allocation5], 1
    %6576 = vsyncpa %s6575, 1

</llo_original>
